<compile_context>
chip_gen: v7x
topology: tpu7x:2x2x1
jax: 0.10.0
libtpu: 0.0.40
codegen_flags: <defaults>
</compile_context>

<pallas_src>
import numpy as np
import jax
import jax.numpy as jnp
from jax.experimental import pallas as pl
from jax.experimental.pallas import tpu as pltpu


# ----------------------------- fused RNN kernel -----------------------------
def _make_fused_rnn_kernel(T, B, E, H, V, L):
    """Builds the fused (L-layer LSTM over time -> Linear decoder) kernel body."""

    def kernel(*refs):
        # ---- inputs ----
        len_ref = refs[0]                 # (B, 1) int32 sequence lengths
        x_ref = refs[1]                   # (T, B, E) f32 embedded tokens, time-major
        w_refs = refs[2:2 + 2 * L]        # per layer: (Din+H, 4H) fused W, (1, 4H) bias
        wd_ref = refs[2 + 2 * L]          # (H, V) decoder weight (transposed)
        bd_ref = refs[3 + 2 * L]          # (1, V) decoder bias
        # ---- outputs ----
        dec_ref = refs[4 + 2 * L]         # (T, B, V) decoded logits for every (t, b)
        hn_ref = refs[5 + 2 * L]          # (L, B, H) final hidden state
        cn_ref = refs[6 + 2 * L]          # (L, B, H) final cell state

        # Hoisted loads / broadcasts (kept out of the unrolled time loop).
        lens = len_ref[...]                                              # (B, 1) int32
        ws = [w_refs[2 * l][...] for l in range(L)]                      # (Din+H, 4H)
        bs = [jnp.broadcast_to(w_refs[2 * l + 1][...], (B, 4 * H))
              for l in range(L)]                                         # (B, 4H)
        wd = wd_ref[...]                                                 # (H, V)
        bd = jnp.broadcast_to(bd_ref[...], (B, V))                       # (B, V)

        def step(t, carry):
            # carry = (h_0, c_0, h_1, c_1, ...): 2L arrays of shape (B, H)
            x_t = x_ref[t]                                               # (B, E)
            valid = t < lens                                             # (B, 1) bool
            new_carry = []
            layer_in = x_t
            for l in range(L):
                h = carry[2 * l]
                c = carry[2 * l + 1]
                # fused gate matmul: [x | h] @ [W_ih^T ; W_hh^T] + (b_ih + b_hh)
                xh = jnp.concatenate([layer_in, h], axis=-1)             # (B, Din+H)
                gates = (jnp.dot(xh, ws[l],
                                 preferred_element_type=jnp.float32)
                         + bs[l])                                        # (B, 4H) [i|f|o|g]
                sig = jax.nn.sigmoid(gates[:, :3 * H])                   # one wide sigmoid
                i_g = sig[:, 0 * H:1 * H]
                f_g = sig[:, 1 * H:2 * H]
                o_g = sig[:, 2 * H:3 * H]
                g_g = jnp.tanh(gates[:, 3 * H:])
                c_new = f_g * c + i_g * g_g
                h_new = o_g * jnp.tanh(c_new)
                # packed-sequence semantics: freeze the state once t >= length[b]
                h_u = jnp.where(valid, h_new, h)
                c_u = jnp.where(valid, c_new, c)
                new_carry += [h_u, c_u]
                layer_in = h_u
            # fused Linear decoder on the top layer's per-step output
            dec_ref[t] = (jnp.dot(layer_in, wd,
                                  preferred_element_type=jnp.float32) + bd)
            return tuple(new_carry)

        # hid=None path of RNNModel.forward -> init_hidden() zeros
        zeros = jnp.zeros((B, H), jnp.float32)
        final = jax.lax.fori_loop(0, T, step, tuple(zeros for _ in range(2 * L)),
                                  unroll=True)
        for l in range(L):
            hn_ref[l] = final[2 * l]
            cn_ref[l] = final[2 * l + 1]

    return kernel


def fused_rnn_forward(lens_i32, x_tbe, layer_params, dec_w_t, dec_b_row):
    """Single-launch fused forward: (T,B,E) inputs -> decoded (T,B,V), h_n, c_n."""
    T, B, E = x_tbe.shape
    H, V = dec_w_t.shape
    L = len(layer_params) // 2
    kernel = _make_fused_rnn_kernel(T, B, E, H, V, L)
    out_shape = (
        jax.ShapeDtypeStruct((T, B, V), jnp.float32),   # decoded logits, all positions
        jax.ShapeDtypeStruct((L, B, H), jnp.float32),   # h_n
        jax.ShapeDtypeStruct((L, B, H), jnp.float32),   # c_n
    )
    # No grid / no BlockSpecs: every operand is a whole-array VMEM-resident block,
    # so there is exactly one launch and one HBM writeback per output.
    return pl.pallas_call(kernel, out_shape=out_shape)(
        lens_i32, x_tbe, *layer_params, dec_w_t, dec_b_row)


# ----------------------------- host-side weight prep -----------------------------
def _reorder_gates_ifgo_to_ifog(w, H):
    """PyTorch stacks LSTM gates as [i, f, g, o] along the 4H axis (axis 0 here);
    reorder to [i, f, o, g] so the kernel can apply one sigmoid over 3H lanes."""
    i = w[0 * H:1 * H]
    f = w[1 * H:2 * H]
    g = w[2 * H:3 * H]
    o = w[3 * H:4 * H]
    return jnp.concatenate([i, f, o, g], axis=0)


# ----------------------------- model glue -----------------------------
class Options:
    dictionary_crop = 30     # vocab = dictionary_crop + 2 = 32
    embedding_size = 16
    hidden_size = 32
    layer_num = 2
    dropout = 0.0
    batch_size = 2


def init_params(key, opts):
    V = opts.dictionary_crop + 2
    E, H, L = opts.embedding_size, opts.hidden_size, opts.layer_num
    keys = jax.random.split(key, 3 + 4 * L)
    params = {}
    # nn.Embedding default init: N(0, 1)
    params["embedding"] = jax.random.normal(keys[0], (V, E), jnp.float32)
    # nn.LSTM default init: U(-1/sqrt(H), 1/sqrt(H))
    bound = 1.0 / np.sqrt(H)
    lstm = []
    k = 1
    for layer in range(L):
        din = E if layer == 0 else H
        w_ih = jax.random.uniform(keys[k], (4 * H, din), jnp.float32, -bound, bound); k += 1
        w_hh = jax.random.uniform(keys[k], (4 * H, H), jnp.float32, -bound, bound); k += 1
        b_ih = jax.random.uniform(keys[k], (4 * H,), jnp.float32, -bound, bound); k += 1
        b_hh = jax.random.uniform(keys[k], (4 * H,), jnp.float32, -bound, bound); k += 1
        lstm.append((w_ih, w_hh, b_ih, b_hh))
    params["lstm"] = lstm
    # init_weights(): decoder weight/bias ~ U(-0.1, 0.1)
    params["dec_w"] = jax.random.uniform(keys[k], (V, H), jnp.float32, -0.1, 0.1)
    params["dec_b"] = jax.random.uniform(keys[k + 1], (V,), jnp.float32, -0.1, 0.1)
    # TODO(synk): loading pretrained embeddings from options.pretrained_model (file I/O) is not reproduced.
    return params


def rnn_model_forward(params, inp, lengths, opts):
    """inp: (B, T) int32 token ids; lengths: python ints sorted descending."""
    B, T = inp.shape
    L, H = opts.layer_num, opts.hidden_size

    # encoder + dropout (identity in eval mode); embedding gather stays in plain JAX
    emb = params["embedding"][inp]                          # (B, T, E)
    x = jnp.transpose(emb, (1, 0, 2)).astype(jnp.float32)   # (T, B, E) time-major
    lens_i32 = jnp.asarray(np.asarray(lengths, np.int32).reshape(B, 1))

    # Fuse + reorder LSTM weights host-side:
    #   W_l = reorder([W_ih_l | W_hh_l]) transposed -> (Din+H, 4H), gate order [i,f,o,g]
    #   b_l = reorder(b_ih_l + b_hh_l) -> (1, 4H)
    layer_params = []
    for layer in range(L):
        w_ih, w_hh, b_ih, b_hh = params["lstm"][layer]
        w_cat = jnp.concatenate([w_ih, w_hh], axis=1)                 # (4H, Din+H)
        w_fused = _reorder_gates_ifgo_to_ifog(w_cat, H).T             # (Din+H, 4H)
        b_fused = _reorder_gates_ifgo_to_ifog(b_ih + b_hh, H).reshape(1, 4 * H)
        layer_params += [w_fused, b_fused]

    decoded_all, h_n, c_n = fused_rnn_forward(
        lens_i32, x, layer_params,
        params["dec_w"].T, params["dec_b"].reshape(1, -1))

    # pack_padded_sequence(batch_first=True) data ordering: time-major over valid steps.
    # The decoder is linear/row-wise, so decoding everything in-kernel and gathering
    # the valid rows afterwards is exactly equivalent to decoding the packed data.
    idx_t, idx_b = [], []
    for t in range(T):
        for b in range(B):
            if lengths[b] > t:
                idx_t.append(t)
                idx_b.append(b)
    decoded = decoded_all[jnp.asarray(idx_t), jnp.asarray(idx_b)]     # (N_packed, V)

    # TODO(synk): inter-layer LSTM dropout / self.drop apply only in training; eval semantics here.
    return decoded, (h_n, c_n)


if __name__ == "__main__":
    opts = Options()
    key = jax.random.PRNGKey(0)
    pkey, ikey = jax.random.split(key)
    params = init_params(pkey, opts)

    B, T = opts.batch_size, 8
    V = opts.dictionary_crop + 2
    inp = jax.random.randint(ikey, (B, T), 0, V, dtype=jnp.int32)
    lengths = [8, 6]   # sorted descending, as required by pack_padded_sequence

    decoded, (h_n, c_n) = rnn_model_forward(params, inp, lengths, opts)
    jax.block_until_ready((decoded, h_n, c_n))

    assert decoded.shape == (sum(lengths), V)
    assert h_n.shape == (opts.layer_num, B, opts.hidden_size)
    assert c_n.shape == (opts.layer_num, B, opts.hidden_size)
    print("KERNEL_OK")
</pallas_src>

<mosaic_0001>
module attributes {stable_mosaic.version = 11 : i64} {
  func.func @kernel(%arg0: memref<2x1xi32, #tpu.memory_space<vmem>>, %arg1: memref<8x2x16xf32, #tpu.memory_space<vmem>>, %arg2: memref<48x128xf32, #tpu.memory_space<vmem>>, %arg3: memref<1x128xf32, #tpu.memory_space<vmem>>, %arg4: memref<64x128xf32, #tpu.memory_space<vmem>>, %arg5: memref<1x128xf32, #tpu.memory_space<vmem>>, %arg6: memref<32x32xf32, #tpu.memory_space<vmem>>, %arg7: memref<1x32xf32, #tpu.memory_space<vmem>>, %arg8: memref<8x2x32xf32, #tpu.memory_space<vmem>>, %arg9: memref<2x2x32xf32, #tpu.memory_space<vmem>>, %arg10: memref<2x2x32xf32, #tpu.memory_space<vmem>>) attributes {dimension_semantics = [], scalar_prefetch = 0 : i64, scratch_operands = 0 : i64, tpu.core_type = #tpu.core_type<tc>} {
    %c0 = arith.constant 0 : index
    %c0_0 = arith.constant 0 : index
    %0 = vector.load %arg0[%c0, %c0_0] : memref<2x1xi32, #tpu.memory_space<vmem>>, vector<2x1xi32>
    %c0_1 = arith.constant 0 : index
    %c0_2 = arith.constant 0 : index
    %1 = vector.load %arg2[%c0_1, %c0_2] : memref<48x128xf32, #tpu.memory_space<vmem>>, vector<48x128xf32>
    %c0_3 = arith.constant 0 : index
    %c0_4 = arith.constant 0 : index
    %2 = vector.load %arg4[%c0_3, %c0_4] : memref<64x128xf32, #tpu.memory_space<vmem>>, vector<64x128xf32>
    %c0_5 = arith.constant 0 : index
    %c0_6 = arith.constant 0 : index
    %3 = vector.load %arg3[%c0_5, %c0_6] : memref<1x128xf32, #tpu.memory_space<vmem>>, vector<1x128xf32>
    %4 = vector.shape_cast %3 : vector<1x128xf32> to vector<1x128xf32>
    %5 = vector.broadcast %4 : vector<1x128xf32> to vector<2x128xf32>
    %c0_7 = arith.constant 0 : index
    %c0_8 = arith.constant 0 : index
    %6 = vector.load %arg5[%c0_7, %c0_8] : memref<1x128xf32, #tpu.memory_space<vmem>>, vector<1x128xf32>
    %7 = vector.shape_cast %6 : vector<1x128xf32> to vector<1x128xf32>
    %8 = vector.broadcast %7 : vector<1x128xf32> to vector<2x128xf32>
    %c0_9 = arith.constant 0 : index
    %c0_10 = arith.constant 0 : index
    %9 = vector.load %arg6[%c0_9, %c0_10] : memref<32x32xf32, #tpu.memory_space<vmem>>, vector<32x32xf32>
    %c0_11 = arith.constant 0 : index
    %c0_12 = arith.constant 0 : index
    %10 = vector.load %arg7[%c0_11, %c0_12] : memref<1x32xf32, #tpu.memory_space<vmem>>, vector<1x32xf32>
    %11 = vector.shape_cast %10 : vector<1x32xf32> to vector<1x32xf32>
    %12 = vector.broadcast %11 : vector<1x32xf32> to vector<2x32xf32>
    %cst = arith.constant 0.000000e+00 : f32
    %13 = vector.broadcast %cst : f32 to vector<2x32xf32>
    %c0_i32 = arith.constant 0 : i32
    %14 = arith.index_cast %c0_i32 : i32 to index
    %c0_13 = arith.constant 0 : index
    %c0_14 = arith.constant 0 : index
    %15 = vector.load %arg1[%14, %c0_13, %c0_14] : memref<8x2x16xf32, #tpu.memory_space<vmem>>, vector<1x2x16xf32>
    %16 = vector.shape_cast %15 : vector<1x2x16xf32> to vector<2x16xf32>
    %17 = vector.broadcast %c0_i32 : i32 to vector<2x1xi32>
    %18 = arith.cmpi slt, %17, %0 : vector<2x1xi32>
    %19 = tpu.concatenate %16, %13 in 1 : vector<2x16xf32>, vector<2x32xf32> -> vector<2x48xf32>
    %cst_15 = arith.constant dense<0.000000e+00> : vector<2x128xf32>
    %20 = tpu.matmul %19, %1, %cst_15 {dimension_numbers = #tpu.dot_dimension_numbers<[1], [0], [0], [1], [0, 0, 1, 1], [], []>} : vector<2x48xf32>, vector<48x128xf32>, vector<2x128xf32> -> vector<2x128xf32>
    %21 = arith.addf %20, %5 : vector<2x128xf32>
    %22 = vector.extract_strided_slice %21 {offsets = [0, 0], sizes = [2, 96], strides = [1, 1]} : vector<2x128xf32> to vector<2x96xf32>
    %23 = arith.negf %22 : vector<2x96xf32>
    %24 = math.exp %23 : vector<2x96xf32>
    %cst_16 = arith.constant 1.000000e+00 : f32
    %25 = vector.broadcast %cst_16 : f32 to vector<2x96xf32>
    %26 = arith.addf %25, %24 : vector<2x96xf32>
    %27 = arith.divf %25, %26 : vector<2x96xf32>
    %28 = vector.extract_strided_slice %27 {offsets = [0, 0], sizes = [2, 32], strides = [1, 1]} : vector<2x96xf32> to vector<2x32xf32>
    %29 = vector.extract_strided_slice %27 {offsets = [0, 32], sizes = [2, 32], strides = [1, 1]} : vector<2x96xf32> to vector<2x32xf32>
    %30 = vector.extract_strided_slice %27 {offsets = [0, 64], sizes = [2, 32], strides = [1, 1]} : vector<2x96xf32> to vector<2x32xf32>
    %31 = vector.extract_strided_slice %21 {offsets = [0, 96], sizes = [2, 32], strides = [1, 1]} : vector<2x128xf32> to vector<2x32xf32>
    %32 = math.tanh %31 : vector<2x32xf32>
    %33 = arith.mulf %29, %13 : vector<2x32xf32>
    %34 = arith.mulf %28, %32 : vector<2x32xf32>
    %35 = arith.addf %33, %34 : vector<2x32xf32>
    %36 = math.tanh %35 : vector<2x32xf32>
    %37 = arith.mulf %30, %36 : vector<2x32xf32>
    %38 = vector.shape_cast %18 : vector<2x1xi1> to vector<2x1xi1>
    %39 = vector.broadcast %38 : vector<2x1xi1> to vector<2x32xi1>
    %40 = arith.select %39, %37, %13 : vector<2x32xi1>, vector<2x32xf32>
    %41 = vector.shape_cast %18 : vector<2x1xi1> to vector<2x1xi1>
    %42 = vector.broadcast %41 : vector<2x1xi1> to vector<2x32xi1>
    %43 = arith.select %42, %35, %13 : vector<2x32xi1>, vector<2x32xf32>
    %44 = tpu.concatenate %40, %13 in 1 : vector<2x32xf32>, vector<2x32xf32> -> vector<2x64xf32>
    %cst_17 = arith.constant dense<0.000000e+00> : vector<2x128xf32>
    %45 = tpu.matmul %44, %2, %cst_17 {dimension_numbers = #tpu.dot_dimension_numbers<[1], [0], [0], [1], [0, 0, 1, 1], [], []>} : vector<2x64xf32>, vector<64x128xf32>, vector<2x128xf32> -> vector<2x128xf32>
    %46 = arith.addf %45, %8 : vector<2x128xf32>
    %47 = vector.extract_strided_slice %46 {offsets = [0, 0], sizes = [2, 96], strides = [1, 1]} : vector<2x128xf32> to vector<2x96xf32>
    %48 = arith.negf %47 : vector<2x96xf32>
    %49 = math.exp %48 : vector<2x96xf32>
    %cst_18 = arith.constant 1.000000e+00 : f32
    %50 = vector.broadcast %cst_18 : f32 to vector<2x96xf32>
    %51 = arith.addf %50, %49 : vector<2x96xf32>
    %52 = arith.divf %50, %51 : vector<2x96xf32>
    %53 = vector.extract_strided_slice %52 {offsets = [0, 0], sizes = [2, 32], strides = [1, 1]} : vector<2x96xf32> to vector<2x32xf32>
    %54 = vector.extract_strided_slice %52 {offsets = [0, 32], sizes = [2, 32], strides = [1, 1]} : vector<2x96xf32> to vector<2x32xf32>
    %55 = vector.extract_strided_slice %52 {offsets = [0, 64], sizes = [2, 32], strides = [1, 1]} : vector<2x96xf32> to vector<2x32xf32>
    %56 = vector.extract_strided_slice %46 {offsets = [0, 96], sizes = [2, 32], strides = [1, 1]} : vector<2x128xf32> to vector<2x32xf32>
    %57 = math.tanh %56 : vector<2x32xf32>
    %58 = arith.mulf %54, %13 : vector<2x32xf32>
    %59 = arith.mulf %53, %57 : vector<2x32xf32>
    %60 = arith.addf %58, %59 : vector<2x32xf32>
    %61 = math.tanh %60 : vector<2x32xf32>
    %62 = arith.mulf %55, %61 : vector<2x32xf32>
    %63 = vector.shape_cast %18 : vector<2x1xi1> to vector<2x1xi1>
    %64 = vector.broadcast %63 : vector<2x1xi1> to vector<2x32xi1>
    %65 = arith.select %64, %62, %13 : vector<2x32xi1>, vector<2x32xf32>
    %66 = vector.shape_cast %18 : vector<2x1xi1> to vector<2x1xi1>
    %67 = vector.broadcast %66 : vector<2x1xi1> to vector<2x32xi1>
    %68 = arith.select %67, %60, %13 : vector<2x32xi1>, vector<2x32xf32>
    %cst_19 = arith.constant dense<0.000000e+00> : vector<2x32xf32>
    %69 = tpu.matmul %65, %9, %cst_19 {dimension_numbers = #tpu.dot_dimension_numbers<[1], [0], [0], [1], [0, 0, 1, 1], [], []>} : vector<2x32xf32>, vector<32x32xf32>, vector<2x32xf32> -> vector<2x32xf32>
    %70 = arith.addf %69, %12 : vector<2x32xf32>
    %71 = arith.index_cast %c0_i32 : i32 to index
    %c0_20 = arith.constant 0 : index
    %c0_21 = arith.constant 0 : index
    %72 = vector.load %arg8[%71, %c0_20, %c0_21] : memref<8x2x32xf32, #tpu.memory_space<vmem>>, vector<1x2x32xf32>
    %73 = vector.shape_cast %72 : vector<1x2x32xf32> to vector<2x32xf32>
    %74 = vector.shape_cast %70 : vector<2x32xf32> to vector<1x2x32xf32>
    tpu.vector_store %arg8[%71, %c0_20, %c0_21], %74 {strides = array<i32>} : memref<8x2x32xf32, #tpu.memory_space<vmem>>, vector<1x2x32xf32>,
    %c1_i32 = arith.constant 1 : i32
    %75 = arith.index_cast %c1_i32 : i32 to index
    %c0_22 = arith.constant 0 : index
    %c0_23 = arith.constant 0 : index
    %76 = vector.load %arg1[%75, %c0_22, %c0_23] : memref<8x2x16xf32, #tpu.memory_space<vmem>>, vector<1x2x16xf32>
    %77 = vector.shape_cast %76 : vector<1x2x16xf32> to vector<2x16xf32>
    %78 = vector.broadcast %c1_i32 : i32 to vector<2x1xi32>
    %79 = arith.cmpi slt, %78, %0 : vector<2x1xi32>
    %80 = tpu.concatenate %77, %40 in 1 : vector<2x16xf32>, vector<2x32xf32> -> vector<2x48xf32>
    %cst_24 = arith.constant dense<0.000000e+00> : vector<2x128xf32>
    %81 = tpu.matmul %80, %1, %cst_24 {dimension_numbers = #tpu.dot_dimension_numbers<[1], [0], [0], [1], [0, 0, 1, 1], [], []>} : vector<2x48xf32>, vector<48x128xf32>, vector<2x128xf32> -> vector<2x128xf32>
    %82 = arith.addf %81, %5 : vector<2x128xf32>
    %83 = vector.extract_strided_slice %82 {offsets = [0, 0], sizes = [2, 96], strides = [1, 1]} : vector<2x128xf32> to vector<2x96xf32>
    %84 = arith.negf %83 : vector<2x96xf32>
    %85 = math.exp %84 : vector<2x96xf32>
    %cst_25 = arith.constant 1.000000e+00 : f32
    %86 = vector.broadcast %cst_25 : f32 to vector<2x96xf32>
    %87 = arith.addf %86, %85 : vector<2x96xf32>
    %88 = arith.divf %86, %87 : vector<2x96xf32>
    %89 = vector.extract_strided_slice %88 {offsets = [0, 0], sizes = [2, 32], strides = [1, 1]} : vector<2x96xf32> to vector<2x32xf32>
    %90 = vector.extract_strided_slice %88 {offsets = [0, 32], sizes = [2, 32], strides = [1, 1]} : vector<2x96xf32> to vector<2x32xf32>
    %91 = vector.extract_strided_slice %88 {offsets = [0, 64], sizes = [2, 32], strides = [1, 1]} : vector<2x96xf32> to vector<2x32xf32>
    %92 = vector.extract_strided_slice %82 {offsets = [0, 96], sizes = [2, 32], strides = [1, 1]} : vector<2x128xf32> to vector<2x32xf32>
    %93 = math.tanh %92 : vector<2x32xf32>
    %94 = arith.mulf %90, %43 : vector<2x32xf32>
    %95 = arith.mulf %89, %93 : vector<2x32xf32>
    %96 = arith.addf %94, %95 : vector<2x32xf32>
    %97 = math.tanh %96 : vector<2x32xf32>
    %98 = arith.mulf %91, %97 : vector<2x32xf32>
    %99 = vector.shape_cast %79 : vector<2x1xi1> to vector<2x1xi1>
    %100 = vector.broadcast %99 : vector<2x1xi1> to vector<2x32xi1>
    %101 = arith.select %100, %98, %40 : vector<2x32xi1>, vector<2x32xf32>
    %102 = vector.shape_cast %79 : vector<2x1xi1> to vector<2x1xi1>
    %103 = vector.broadcast %102 : vector<2x1xi1> to vector<2x32xi1>
    %104 = arith.select %103, %96, %43 : vector<2x32xi1>, vector<2x32xf32>
    %105 = tpu.concatenate %101, %65 in 1 : vector<2x32xf32>, vector<2x32xf32> -> vector<2x64xf32>
    %cst_26 = arith.constant dense<0.000000e+00> : vector<2x128xf32>
    %106 = tpu.matmul %105, %2, %cst_26 {dimension_numbers = #tpu.dot_dimension_numbers<[1], [0], [0], [1], [0, 0, 1, 1], [], []>} : vector<2x64xf32>, vector<64x128xf32>, vector<2x128xf32> -> vector<2x128xf32>
    %107 = arith.addf %106, %8 : vector<2x128xf32>
    %108 = vector.extract_strided_slice %107 {offsets = [0, 0], sizes = [2, 96], strides = [1, 1]} : vector<2x128xf32> to vector<2x96xf32>
    %109 = arith.negf %108 : vector<2x96xf32>
    %110 = math.exp %109 : vector<2x96xf32>
    %cst_27 = arith.constant 1.000000e+00 : f32
    %111 = vector.broadcast %cst_27 : f32 to vector<2x96xf32>
    %112 = arith.addf %111, %110 : vector<2x96xf32>
    %113 = arith.divf %111, %112 : vector<2x96xf32>
    %114 = vector.extract_strided_slice %113 {offsets = [0, 0], sizes = [2, 32], strides = [1, 1]} : vector<2x96xf32> to vector<2x32xf32>
    %115 = vector.extract_strided_slice %113 {offsets = [0, 32], sizes = [2, 32], strides = [1, 1]} : vector<2x96xf32> to vector<2x32xf32>
    %116 = vector.extract_strided_slice %113 {offsets = [0, 64], sizes = [2, 32], strides = [1, 1]} : vector<2x96xf32> to vector<2x32xf32>
    %117 = vector.extract_strided_slice %107 {offsets = [0, 96], sizes = [2, 32], strides = [1, 1]} : vector<2x128xf32> to vector<2x32xf32>
    %118 = math.tanh %117 : vector<2x32xf32>
    %119 = arith.mulf %115, %68 : vector<2x32xf32>
    %120 = arith.mulf %114, %118 : vector<2x32xf32>
    %121 = arith.addf %119, %120 : vector<2x32xf32>
    %122 = math.tanh %121 : vector<2x32xf32>
    %123 = arith.mulf %116, %122 : vector<2x32xf32>
    %124 = vector.shape_cast %79 : vector<2x1xi1> to vector<2x1xi1>
    %125 = vector.broadcast %124 : vector<2x1xi1> to vector<2x32xi1>
    %126 = arith.select %125, %123, %65 : vector<2x32xi1>, vector<2x32xf32>
    %127 = vector.shape_cast %79 : vector<2x1xi1> to vector<2x1xi1>
    %128 = vector.broadcast %127 : vector<2x1xi1> to vector<2x32xi1>
    %129 = arith.select %128, %121, %68 : vector<2x32xi1>, vector<2x32xf32>
    %cst_28 = arith.constant dense<0.000000e+00> : vector<2x32xf32>
    %130 = tpu.matmul %126, %9, %cst_28 {dimension_numbers = #tpu.dot_dimension_numbers<[1], [0], [0], [1], [0, 0, 1, 1], [], []>} : vector<2x32xf32>, vector<32x32xf32>, vector<2x32xf32> -> vector<2x32xf32>
    %131 = arith.addf %130, %12 : vector<2x32xf32>
    %132 = arith.index_cast %c1_i32 : i32 to index
    %c0_29 = arith.constant 0 : index
    %c0_30 = arith.constant 0 : index
    %133 = vector.load %arg8[%132, %c0_29, %c0_30] : memref<8x2x32xf32, #tpu.memory_space<vmem>>, vector<1x2x32xf32>
    %134 = vector.shape_cast %133 : vector<1x2x32xf32> to vector<2x32xf32>
    %135 = vector.shape_cast %131 : vector<2x32xf32> to vector<1x2x32xf32>
    tpu.vector_store %arg8[%132, %c0_29, %c0_30], %135 {strides = array<i32>} : memref<8x2x32xf32, #tpu.memory_space<vmem>>, vector<1x2x32xf32>,
    %c2_i32 = arith.constant 2 : i32
    %136 = arith.index_cast %c2_i32 : i32 to index
    %c0_31 = arith.constant 0 : index
    %c0_32 = arith.constant 0 : index
    %137 = vector.load %arg1[%136, %c0_31, %c0_32] : memref<8x2x16xf32, #tpu.memory_space<vmem>>, vector<1x2x16xf32>
    %138 = vector.shape_cast %137 : vector<1x2x16xf32> to vector<2x16xf32>
    %139 = vector.broadcast %c2_i32 : i32 to vector<2x1xi32>
    %140 = arith.cmpi slt, %139, %0 : vector<2x1xi32>
    %141 = tpu.concatenate %138, %101 in 1 : vector<2x16xf32>, vector<2x32xf32> -> vector<2x48xf32>
    %cst_33 = arith.constant dense<0.000000e+00> : vector<2x128xf32>
    %142 = tpu.matmul %141, %1, %cst_33 {dimension_numbers = #tpu.dot_dimension_numbers<[1], [0], [0], [1], [0, 0, 1, 1], [], []>} : vector<2x48xf32>, vector<48x128xf32>, vector<2x128xf32> -> vector<2x128xf32>
    %143 = arith.addf %142, %5 : vector<2x128xf32>
    %144 = vector.extract_strided_slice %143 {offsets = [0, 0], sizes = [2, 96], strides = [1, 1]} : vector<2x128xf32> to vector<2x96xf32>
    %145 = arith.negf %144 : vector<2x96xf32>
    %146 = math.exp %145 : vector<2x96xf32>
    %cst_34 = arith.constant 1.000000e+00 : f32
    %147 = vector.broadcast %cst_34 : f32 to vector<2x96xf32>
    %148 = arith.addf %147, %146 : vector<2x96xf32>
    %149 = arith.divf %147, %148 : vector<2x96xf32>
    %150 = vector.extract_strided_slice %149 {offsets = [0, 0], sizes = [2, 32], strides = [1, 1]} : vector<2x96xf32> to vector<2x32xf32>
    %151 = vector.extract_strided_slice %149 {offsets = [0, 32], sizes = [2, 32], strides = [1, 1]} : vector<2x96xf32> to vector<2x32xf32>
    %152 = vector.extract_strided_slice %149 {offsets = [0, 64], sizes = [2, 32], strides = [1, 1]} : vector<2x96xf32> to vector<2x32xf32>
    %153 = vector.extract_strided_slice %143 {offsets = [0, 96], sizes = [2, 32], strides = [1, 1]} : vector<2x128xf32> to vector<2x32xf32>
    %154 = math.tanh %153 : vector<2x32xf32>
    %155 = arith.mulf %151, %104 : vector<2x32xf32>
    %156 = arith.mulf %150, %154 : vector<2x32xf32>
    %157 = arith.addf %155, %156 : vector<2x32xf32>
    %158 = math.tanh %157 : vector<2x32xf32>
    %159 = arith.mulf %152, %158 : vector<2x32xf32>
    %160 = vector.shape_cast %140 : vector<2x1xi1> to vector<2x1xi1>
    %161 = vector.broadcast %160 : vector<2x1xi1> to vector<2x32xi1>
    %162 = arith.select %161, %159, %101 : vector<2x32xi1>, vector<2x32xf32>
    %163 = vector.shape_cast %140 : vector<2x1xi1> to vector<2x1xi1>
    %164 = vector.broadcast %163 : vector<2x1xi1> to vector<2x32xi1>
    %165 = arith.select %164, %157, %104 : vector<2x32xi1>, vector<2x32xf32>
    %166 = tpu.concatenate %162, %126 in 1 : vector<2x32xf32>, vector<2x32xf32> -> vector<2x64xf32>
    %cst_35 = arith.constant dense<0.000000e+00> : vector<2x128xf32>
    %167 = tpu.matmul %166, %2, %cst_35 {dimension_numbers = #tpu.dot_dimension_numbers<[1], [0], [0], [1], [0, 0, 1, 1], [], []>} : vector<2x64xf32>, vector<64x128xf32>, vector<2x128xf32> -> vector<2x128xf32>
    %168 = arith.addf %167, %8 : vector<2x128xf32>
    %169 = vector.extract_strided_slice %168 {offsets = [0, 0], sizes = [2, 96], strides = [1, 1]} : vector<2x128xf32> to vector<2x96xf32>
    %170 = arith.negf %169 : vector<2x96xf32>
    %171 = math.exp %170 : vector<2x96xf32>
    %cst_36 = arith.constant 1.000000e+00 : f32
    %172 = vector.broadcast %cst_36 : f32 to vector<2x96xf32>
    %173 = arith.addf %172, %171 : vector<2x96xf32>
    %174 = arith.divf %172, %173 : vector<2x96xf32>
    %175 = vector.extract_strided_slice %174 {offsets = [0, 0], sizes = [2, 32], strides = [1, 1]} : vector<2x96xf32> to vector<2x32xf32>
    %176 = vector.extract_strided_slice %174 {offsets = [0, 32], sizes = [2, 32], strides = [1, 1]} : vector<2x96xf32> to vector<2x32xf32>
    %177 = vector.extract_strided_slice %174 {offsets = [0, 64], sizes = [2, 32], strides = [1, 1]} : vector<2x96xf32> to vector<2x32xf32>
    %178 = vector.extract_strided_slice %168 {offsets = [0, 96], sizes = [2, 32], strides = [1, 1]} : vector<2x128xf32> to vector<2x32xf32>
    %179 = math.tanh %178 : vector<2x32xf32>
    %180 = arith.mulf %176, %129 : vector<2x32xf32>
    %181 = arith.mulf %175, %179 : vector<2x32xf32>
    %182 = arith.addf %180, %181 : vector<2x32xf32>
    %183 = math.tanh %182 : vector<2x32xf32>
    %184 = arith.mulf %177, %183 : vector<2x32xf32>
    %185 = vector.shape_cast %140 : vector<2x1xi1> to vector<2x1xi1>
    %186 = vector.broadcast %185 : vector<2x1xi1> to vector<2x32xi1>
    %187 = arith.select %186, %184, %126 : vector<2x32xi1>, vector<2x32xf32>
    %188 = vector.shape_cast %140 : vector<2x1xi1> to vector<2x1xi1>
    %189 = vector.broadcast %188 : vector<2x1xi1> to vector<2x32xi1>
    %190 = arith.select %189, %182, %129 : vector<2x32xi1>, vector<2x32xf32>
    %cst_37 = arith.constant dense<0.000000e+00> : vector<2x32xf32>
    %191 = tpu.matmul %187, %9, %cst_37 {dimension_numbers = #tpu.dot_dimension_numbers<[1], [0], [0], [1], [0, 0, 1, 1], [], []>} : vector<2x32xf32>, vector<32x32xf32>, vector<2x32xf32> -> vector<2x32xf32>
    %192 = arith.addf %191, %12 : vector<2x32xf32>
    %193 = arith.index_cast %c2_i32 : i32 to index
    %c0_38 = arith.constant 0 : index
    %c0_39 = arith.constant 0 : index
    %194 = vector.load %arg8[%193, %c0_38, %c0_39] : memref<8x2x32xf32, #tpu.memory_space<vmem>>, vector<1x2x32xf32>
    %195 = vector.shape_cast %194 : vector<1x2x32xf32> to vector<2x32xf32>
    %196 = vector.shape_cast %192 : vector<2x32xf32> to vector<1x2x32xf32>
    tpu.vector_store %arg8[%193, %c0_38, %c0_39], %196 {strides = array<i32>} : memref<8x2x32xf32, #tpu.memory_space<vmem>>, vector<1x2x32xf32>,
    %c3_i32 = arith.constant 3 : i32
    %197 = arith.index_cast %c3_i32 : i32 to index
    %c0_40 = arith.constant 0 : index
    %c0_41 = arith.constant 0 : index
    %198 = vector.load %arg1[%197, %c0_40, %c0_41] : memref<8x2x16xf32, #tpu.memory_space<vmem>>, vector<1x2x16xf32>
    %199 = vector.shape_cast %198 : vector<1x2x16xf32> to vector<2x16xf32>
    %200 = vector.broadcast %c3_i32 : i32 to vector<2x1xi32>
    %201 = arith.cmpi slt, %200, %0 : vector<2x1xi32>
    %202 = tpu.concatenate %199, %162 in 1 : vector<2x16xf32>, vector<2x32xf32> -> vector<2x48xf32>
    %cst_42 = arith.constant dense<0.000000e+00> : vector<2x128xf32>
    %203 = tpu.matmul %202, %1, %cst_42 {dimension_numbers = #tpu.dot_dimension_numbers<[1], [0], [0], [1], [0, 0, 1, 1], [], []>} : vector<2x48xf32>, vector<48x128xf32>, vector<2x128xf32> -> vector<2x128xf32>
    %204 = arith.addf %203, %5 : vector<2x128xf32>
    %205 = vector.extract_strided_slice %204 {offsets = [0, 0], sizes = [2, 96], strides = [1, 1]} : vector<2x128xf32> to vector<2x96xf32>
    %206 = arith.negf %205 : vector<2x96xf32>
    %207 = math.exp %206 : vector<2x96xf32>
    %cst_43 = arith.constant 1.000000e+00 : f32
    %208 = vector.broadcast %cst_43 : f32 to vector<2x96xf32>
    %209 = arith.addf %208, %207 : vector<2x96xf32>
    %210 = arith.divf %208, %209 : vector<2x96xf32>
    %211 = vector.extract_strided_slice %210 {offsets = [0, 0], sizes = [2, 32], strides = [1, 1]} : vector<2x96xf32> to vector<2x32xf32>
    %212 = vector.extract_strided_slice %210 {offsets = [0, 32], sizes = [2, 32], strides = [1, 1]} : vector<2x96xf32> to vector<2x32xf32>
    %213 = vector.extract_strided_slice %210 {offsets = [0, 64], sizes = [2, 32], strides = [1, 1]} : vector<2x96xf32> to vector<2x32xf32>
    %214 = vector.extract_strided_slice %204 {offsets = [0, 96], sizes = [2, 32], strides = [1, 1]} : vector<2x128xf32> to vector<2x32xf32>
    %215 = math.tanh %214 : vector<2x32xf32>
    %216 = arith.mulf %212, %165 : vector<2x32xf32>
    %217 = arith.mulf %211, %215 : vector<2x32xf32>
    %218 = arith.addf %216, %217 : vector<2x32xf32>
    %219 = math.tanh %218 : vector<2x32xf32>
    %220 = arith.mulf %213, %219 : vector<2x32xf32>
    %221 = vector.shape_cast %201 : vector<2x1xi1> to vector<2x1xi1>
    %222 = vector.broadcast %221 : vector<2x1xi1> to vector<2x32xi1>
    %223 = arith.select %222, %220, %162 : vector<2x32xi1>, vector<2x32xf32>
    %224 = vector.shape_cast %201 : vector<2x1xi1> to vector<2x1xi1>
    %225 = vector.broadcast %224 : vector<2x1xi1> to vector<2x32xi1>
    %226 = arith.select %225, %218, %165 : vector<2x32xi1>, vector<2x32xf32>
    %227 = tpu.concatenate %223, %187 in 1 : vector<2x32xf32>, vector<2x32xf32> -> vector<2x64xf32>
    %cst_44 = arith.constant dense<0.000000e+00> : vector<2x128xf32>
    %228 = tpu.matmul %227, %2, %cst_44 {dimension_numbers = #tpu.dot_dimension_numbers<[1], [0], [0], [1], [0, 0, 1, 1], [], []>} : vector<2x64xf32>, vector<64x128xf32>, vector<2x128xf32> -> vector<2x128xf32>
    %229 = arith.addf %228, %8 : vector<2x128xf32>
    %230 = vector.extract_strided_slice %229 {offsets = [0, 0], sizes = [2, 96], strides = [1, 1]} : vector<2x128xf32> to vector<2x96xf32>
    %231 = arith.negf %230 : vector<2x96xf32>
    %232 = math.exp %231 : vector<2x96xf32>
    %cst_45 = arith.constant 1.000000e+00 : f32
    %233 = vector.broadcast %cst_45 : f32 to vector<2x96xf32>
    %234 = arith.addf %233, %232 : vector<2x96xf32>
    %235 = arith.divf %233, %234 : vector<2x96xf32>
    %236 = vector.extract_strided_slice %235 {offsets = [0, 0], sizes = [2, 32], strides = [1, 1]} : vector<2x96xf32> to vector<2x32xf32>
    %237 = vector.extract_strided_slice %235 {offsets = [0, 32], sizes = [2, 32], strides = [1, 1]} : vector<2x96xf32> to vector<2x32xf32>
    %238 = vector.extract_strided_slice %235 {offsets = [0, 64], sizes = [2, 32], strides = [1, 1]} : vector<2x96xf32> to vector<2x32xf32>
    %239 = vector.extract_strided_slice %229 {offsets = [0, 96], sizes = [2, 32], strides = [1, 1]} : vector<2x128xf32> to vector<2x32xf32>
    %240 = math.tanh %239 : vector<2x32xf32>
    %241 = arith.mulf %237, %190 : vector<2x32xf32>
    %242 = arith.mulf %236, %240 : vector<2x32xf32>
    %243 = arith.addf %241, %242 : vector<2x32xf32>
    %244 = math.tanh %243 : vector<2x32xf32>
    %245 = arith.mulf %238, %244 : vector<2x32xf32>
    %246 = vector.shape_cast %201 : vector<2x1xi1> to vector<2x1xi1>
    %247 = vector.broadcast %246 : vector<2x1xi1> to vector<2x32xi1>
    %248 = arith.select %247, %245, %187 : vector<2x32xi1>, vector<2x32xf32>
    %249 = vector.shape_cast %201 : vector<2x1xi1> to vector<2x1xi1>
    %250 = vector.broadcast %249 : vector<2x1xi1> to vector<2x32xi1>
    %251 = arith.select %250, %243, %190 : vector<2x32xi1>, vector<2x32xf32>
    %cst_46 = arith.constant dense<0.000000e+00> : vector<2x32xf32>
    %252 = tpu.matmul %248, %9, %cst_46 {dimension_numbers = #tpu.dot_dimension_numbers<[1], [0], [0], [1], [0, 0, 1, 1], [], []>} : vector<2x32xf32>, vector<32x32xf32>, vector<2x32xf32> -> vector<2x32xf32>
    %253 = arith.addf %252, %12 : vector<2x32xf32>
    %254 = arith.index_cast %c3_i32 : i32 to index
    %c0_47 = arith.constant 0 : index
    %c0_48 = arith.constant 0 : index
    %255 = vector.load %arg8[%254, %c0_47, %c0_48] : memref<8x2x32xf32, #tpu.memory_space<vmem>>, vector<1x2x32xf32>
    %256 = vector.shape_cast %255 : vector<1x2x32xf32> to vector<2x32xf32>
    %257 = vector.shape_cast %253 : vector<2x32xf32> to vector<1x2x32xf32>
    tpu.vector_store %arg8[%254, %c0_47, %c0_48], %257 {strides = array<i32>} : memref<8x2x32xf32, #tpu.memory_space<vmem>>, vector<1x2x32xf32>,
    %c4_i32 = arith.constant 4 : i32
    %258 = arith.index_cast %c4_i32 : i32 to index
    %c0_49 = arith.constant 0 : index
    %c0_50 = arith.constant 0 : index
    %259 = vector.load %arg1[%258, %c0_49, %c0_50] : memref<8x2x16xf32, #tpu.memory_space<vmem>>, vector<1x2x16xf32>
    %260 = vector.shape_cast %259 : vector<1x2x16xf32> to vector<2x16xf32>
    %261 = vector.broadcast %c4_i32 : i32 to vector<2x1xi32>
    %262 = arith.cmpi slt, %261, %0 : vector<2x1xi32>
    %263 = tpu.concatenate %260, %223 in 1 : vector<2x16xf32>, vector<2x32xf32> -> vector<2x48xf32>
    %cst_51 = arith.constant dense<0.000000e+00> : vector<2x128xf32>
    %264 = tpu.matmul %263, %1, %cst_51 {dimension_numbers = #tpu.dot_dimension_numbers<[1], [0], [0], [1], [0, 0, 1, 1], [], []>} : vector<2x48xf32>, vector<48x128xf32>, vector<2x128xf32> -> vector<2x128xf32>
    %265 = arith.addf %264, %5 : vector<2x128xf32>
    %266 = vector.extract_strided_slice %265 {offsets = [0, 0], sizes = [2, 96], strides = [1, 1]} : vector<2x128xf32> to vector<2x96xf32>
    %267 = arith.negf %266 : vector<2x96xf32>
    %268 = math.exp %267 : vector<2x96xf32>
    %cst_52 = arith.constant 1.000000e+00 : f32
    %269 = vector.broadcast %cst_52 : f32 to vector<2x96xf32>
    %270 = arith.addf %269, %268 : vector<2x96xf32>
    %271 = arith.divf %269, %270 : vector<2x96xf32>
    %272 = vector.extract_strided_slice %271 {offsets = [0, 0], sizes = [2, 32], strides = [1, 1]} : vector<2x96xf32> to vector<2x32xf32>
    %273 = vector.extract_strided_slice %271 {offsets = [0, 32], sizes = [2, 32], strides = [1, 1]} : vector<2x96xf32> to vector<2x32xf32>
    %274 = vector.extract_strided_slice %271 {offsets = [0, 64], sizes = [2, 32], strides = [1, 1]} : vector<2x96xf32> to vector<2x32xf32>
    %275 = vector.extract_strided_slice %265 {offsets = [0, 96], sizes = [2, 32], strides = [1, 1]} : vector<2x128xf32> to vector<2x32xf32>
    %276 = math.tanh %275 : vector<2x32xf32>
    %277 = arith.mulf %273, %226 : vector<2x32xf32>
    %278 = arith.mulf %272, %276 : vector<2x32xf32>
    %279 = arith.addf %277, %278 : vector<2x32xf32>
    %280 = math.tanh %279 : vector<2x32xf32>
    %281 = arith.mulf %274, %280 : vector<2x32xf32>
    %282 = vector.shape_cast %262 : vector<2x1xi1> to vector<2x1xi1>
    %283 = vector.broadcast %282 : vector<2x1xi1> to vector<2x32xi1>
    %284 = arith.select %283, %281, %223 : vector<2x32xi1>, vector<2x32xf32>
    %285 = vector.shape_cast %262 : vector<2x1xi1> to vector<2x1xi1>
    %286 = vector.broadcast %285 : vector<2x1xi1> to vector<2x32xi1>
    %287 = arith.select %286, %279, %226 : vector<2x32xi1>, vector<2x32xf32>
    %288 = tpu.concatenate %284, %248 in 1 : vector<2x32xf32>, vector<2x32xf32> -> vector<2x64xf32>
    %cst_53 = arith.constant dense<0.000000e+00> : vector<2x128xf32>
    %289 = tpu.matmul %288, %2, %cst_53 {dimension_numbers = #tpu.dot_dimension_numbers<[1], [0], [0], [1], [0, 0, 1, 1], [], []>} : vector<2x64xf32>, vector<64x128xf32>, vector<2x128xf32> -> vector<2x128xf32>
    %290 = arith.addf %289, %8 : vector<2x128xf32>
    %291 = vector.extract_strided_slice %290 {offsets = [0, 0], sizes = [2, 96], strides = [1, 1]} : vector<2x128xf32> to vector<2x96xf32>
    %292 = arith.negf %291 : vector<2x96xf32>
    %293 = math.exp %292 : vector<2x96xf32>
    %cst_54 = arith.constant 1.000000e+00 : f32
    %294 = vector.broadcast %cst_54 : f32 to vector<2x96xf32>
    %295 = arith.addf %294, %293 : vector<2x96xf32>
    %296 = arith.divf %294, %295 : vector<2x96xf32>
    %297 = vector.extract_strided_slice %296 {offsets = [0, 0], sizes = [2, 32], strides = [1, 1]} : vector<2x96xf32> to vector<2x32xf32>
    %298 = vector.extract_strided_slice %296 {offsets = [0, 32], sizes = [2, 32], strides = [1, 1]} : vector<2x96xf32> to vector<2x32xf32>
    %299 = vector.extract_strided_slice %296 {offsets = [0, 64], sizes = [2, 32], strides = [1, 1]} : vector<2x96xf32> to vector<2x32xf32>
    %300 = vector.extract_strided_slice %290 {offsets = [0, 96], sizes = [2, 32], strides = [1, 1]} : vector<2x128xf32> to vector<2x32xf32>
    %301 = math.tanh %300 : vector<2x32xf32>
    %302 = arith.mulf %298, %251 : vector<2x32xf32>
    %303 = arith.mulf %297, %301 : vector<2x32xf32>
    %304 = arith.addf %302, %303 : vector<2x32xf32>
    %305 = math.tanh %304 : vector<2x32xf32>
    %306 = arith.mulf %299, %305 : vector<2x32xf32>
    %307 = vector.shape_cast %262 : vector<2x1xi1> to vector<2x1xi1>
    %308 = vector.broadcast %307 : vector<2x1xi1> to vector<2x32xi1>
    %309 = arith.select %308, %306, %248 : vector<2x32xi1>, vector<2x32xf32>
    %310 = vector.shape_cast %262 : vector<2x1xi1> to vector<2x1xi1>
    %311 = vector.broadcast %310 : vector<2x1xi1> to vector<2x32xi1>
    %312 = arith.select %311, %304, %251 : vector<2x32xi1>, vector<2x32xf32>
    %cst_55 = arith.constant dense<0.000000e+00> : vector<2x32xf32>
    %313 = tpu.matmul %309, %9, %cst_55 {dimension_numbers = #tpu.dot_dimension_numbers<[1], [0], [0], [1], [0, 0, 1, 1], [], []>} : vector<2x32xf32>, vector<32x32xf32>, vector<2x32xf32> -> vector<2x32xf32>
    %314 = arith.addf %313, %12 : vector<2x32xf32>
    %315 = arith.index_cast %c4_i32 : i32 to index
    %c0_56 = arith.constant 0 : index
    %c0_57 = arith.constant 0 : index
    %316 = vector.load %arg8[%315, %c0_56, %c0_57] : memref<8x2x32xf32, #tpu.memory_space<vmem>>, vector<1x2x32xf32>
    %317 = vector.shape_cast %316 : vector<1x2x32xf32> to vector<2x32xf32>
    %318 = vector.shape_cast %314 : vector<2x32xf32> to vector<1x2x32xf32>
    tpu.vector_store %arg8[%315, %c0_56, %c0_57], %318 {strides = array<i32>} : memref<8x2x32xf32, #tpu.memory_space<vmem>>, vector<1x2x32xf32>,
    %c5_i32 = arith.constant 5 : i32
    %319 = arith.index_cast %c5_i32 : i32 to index
    %c0_58 = arith.constant 0 : index
    %c0_59 = arith.constant 0 : index
    %320 = vector.load %arg1[%319, %c0_58, %c0_59] : memref<8x2x16xf32, #tpu.memory_space<vmem>>, vector<1x2x16xf32>
    %321 = vector.shape_cast %320 : vector<1x2x16xf32> to vector<2x16xf32>
    %322 = vector.broadcast %c5_i32 : i32 to vector<2x1xi32>
    %323 = arith.cmpi slt, %322, %0 : vector<2x1xi32>
    %324 = tpu.concatenate %321, %284 in 1 : vector<2x16xf32>, vector<2x32xf32> -> vector<2x48xf32>
    %cst_60 = arith.constant dense<0.000000e+00> : vector<2x128xf32>
    %325 = tpu.matmul %324, %1, %cst_60 {dimension_numbers = #tpu.dot_dimension_numbers<[1], [0], [0], [1], [0, 0, 1, 1], [], []>} : vector<2x48xf32>, vector<48x128xf32>, vector<2x128xf32> -> vector<2x128xf32>
    %326 = arith.addf %325, %5 : vector<2x128xf32>
    %327 = vector.extract_strided_slice %326 {offsets = [0, 0], sizes = [2, 96], strides = [1, 1]} : vector<2x128xf32> to vector<2x96xf32>
    %328 = arith.negf %327 : vector<2x96xf32>
    %329 = math.exp %328 : vector<2x96xf32>
    %cst_61 = arith.constant 1.000000e+00 : f32
    %330 = vector.broadcast %cst_61 : f32 to vector<2x96xf32>
    %331 = arith.addf %330, %329 : vector<2x96xf32>
    %332 = arith.divf %330, %331 : vector<2x96xf32>
    %333 = vector.extract_strided_slice %332 {offsets = [0, 0], sizes = [2, 32], strides = [1, 1]} : vector<2x96xf32> to vector<2x32xf32>
    %334 = vector.extract_strided_slice %332 {offsets = [0, 32], sizes = [2, 32], strides = [1, 1]} : vector<2x96xf32> to vector<2x32xf32>
    %335 = vector.extract_strided_slice %332 {offsets = [0, 64], sizes = [2, 32], strides = [1, 1]} : vector<2x96xf32> to vector<2x32xf32>
    %336 = vector.extract_strided_slice %326 {offsets = [0, 96], sizes = [2, 32], strides = [1, 1]} : vector<2x128xf32> to vector<2x32xf32>
    %337 = math.tanh %336 : vector<2x32xf32>
    %338 = arith.mulf %334, %287 : vector<2x32xf32>
    %339 = arith.mulf %333, %337 : vector<2x32xf32>
    %340 = arith.addf %338, %339 : vector<2x32xf32>
    %341 = math.tanh %340 : vector<2x32xf32>
    %342 = arith.mulf %335, %341 : vector<2x32xf32>
    %343 = vector.shape_cast %323 : vector<2x1xi1> to vector<2x1xi1>
    %344 = vector.broadcast %343 : vector<2x1xi1> to vector<2x32xi1>
    %345 = arith.select %344, %342, %284 : vector<2x32xi1>, vector<2x32xf32>
    %346 = vector.shape_cast %323 : vector<2x1xi1> to vector<2x1xi1>
    %347 = vector.broadcast %346 : vector<2x1xi1> to vector<2x32xi1>
    %348 = arith.select %347, %340, %287 : vector<2x32xi1>, vector<2x32xf32>
    %349 = tpu.concatenate %345, %309 in 1 : vector<2x32xf32>, vector<2x32xf32> -> vector<2x64xf32>
    %cst_62 = arith.constant dense<0.000000e+00> : vector<2x128xf32>
    %350 = tpu.matmul %349, %2, %cst_62 {dimension_numbers = #tpu.dot_dimension_numbers<[1], [0], [0], [1], [0, 0, 1, 1], [], []>} : vector<2x64xf32>, vector<64x128xf32>, vector<2x128xf32> -> vector<2x128xf32>
    %351 = arith.addf %350, %8 : vector<2x128xf32>
    %352 = vector.extract_strided_slice %351 {offsets = [0, 0], sizes = [2, 96], strides = [1, 1]} : vector<2x128xf32> to vector<2x96xf32>
    %353 = arith.negf %352 : vector<2x96xf32>
    %354 = math.exp %353 : vector<2x96xf32>
    %cst_63 = arith.constant 1.000000e+00 : f32
    %355 = vector.broadcast %cst_63 : f32 to vector<2x96xf32>
    %356 = arith.addf %355, %354 : vector<2x96xf32>
    %357 = arith.divf %355, %356 : vector<2x96xf32>
    %358 = vector.extract_strided_slice %357 {offsets = [0, 0], sizes = [2, 32], strides = [1, 1]} : vector<2x96xf32> to vector<2x32xf32>
    %359 = vector.extract_strided_slice %357 {offsets = [0, 32], sizes = [2, 32], strides = [1, 1]} : vector<2x96xf32> to vector<2x32xf32>
    %360 = vector.extract_strided_slice %357 {offsets = [0, 64], sizes = [2, 32], strides = [1, 1]} : vector<2x96xf32> to vector<2x32xf32>
    %361 = vector.extract_strided_slice %351 {offsets = [0, 96], sizes = [2, 32], strides = [1, 1]} : vector<2x128xf32> to vector<2x32xf32>
    %362 = math.tanh %361 : vector<2x32xf32>
    %363 = arith.mulf %359, %312 : vector<2x32xf32>
    %364 = arith.mulf %358, %362 : vector<2x32xf32>
    %365 = arith.addf %363, %364 : vector<2x32xf32>
    %366 = math.tanh %365 : vector<2x32xf32>
    %367 = arith.mulf %360, %366 : vector<2x32xf32>
    %368 = vector.shape_cast %323 : vector<2x1xi1> to vector<2x1xi1>
    %369 = vector.broadcast %368 : vector<2x1xi1> to vector<2x32xi1>
    %370 = arith.select %369, %367, %309 : vector<2x32xi1>, vector<2x32xf32>
    %371 = vector.shape_cast %323 : vector<2x1xi1> to vector<2x1xi1>
    %372 = vector.broadcast %371 : vector<2x1xi1> to vector<2x32xi1>
    %373 = arith.select %372, %365, %312 : vector<2x32xi1>, vector<2x32xf32>
    %cst_64 = arith.constant dense<0.000000e+00> : vector<2x32xf32>
    %374 = tpu.matmul %370, %9, %cst_64 {dimension_numbers = #tpu.dot_dimension_numbers<[1], [0], [0], [1], [0, 0, 1, 1], [], []>} : vector<2x32xf32>, vector<32x32xf32>, vector<2x32xf32> -> vector<2x32xf32>
    %375 = arith.addf %374, %12 : vector<2x32xf32>
    %376 = arith.index_cast %c5_i32 : i32 to index
    %c0_65 = arith.constant 0 : index
    %c0_66 = arith.constant 0 : index
    %377 = vector.load %arg8[%376, %c0_65, %c0_66] : memref<8x2x32xf32, #tpu.memory_space<vmem>>, vector<1x2x32xf32>
    %378 = vector.shape_cast %377 : vector<1x2x32xf32> to vector<2x32xf32>
    %379 = vector.shape_cast %375 : vector<2x32xf32> to vector<1x2x32xf32>
    tpu.vector_store %arg8[%376, %c0_65, %c0_66], %379 {strides = array<i32>} : memref<8x2x32xf32, #tpu.memory_space<vmem>>, vector<1x2x32xf32>,
    %c6_i32 = arith.constant 6 : i32
    %380 = arith.index_cast %c6_i32 : i32 to index
    %c0_67 = arith.constant 0 : index
    %c0_68 = arith.constant 0 : index
    %381 = vector.load %arg1[%380, %c0_67, %c0_68] : memref<8x2x16xf32, #tpu.memory_space<vmem>>, vector<1x2x16xf32>
    %382 = vector.shape_cast %381 : vector<1x2x16xf32> to vector<2x16xf32>
    %383 = vector.broadcast %c6_i32 : i32 to vector<2x1xi32>
    %384 = arith.cmpi slt, %383, %0 : vector<2x1xi32>
    %385 = tpu.concatenate %382, %345 in 1 : vector<2x16xf32>, vector<2x32xf32> -> vector<2x48xf32>
    %cst_69 = arith.constant dense<0.000000e+00> : vector<2x128xf32>
    %386 = tpu.matmul %385, %1, %cst_69 {dimension_numbers = #tpu.dot_dimension_numbers<[1], [0], [0], [1], [0, 0, 1, 1], [], []>} : vector<2x48xf32>, vector<48x128xf32>, vector<2x128xf32> -> vector<2x128xf32>
    %387 = arith.addf %386, %5 : vector<2x128xf32>
    %388 = vector.extract_strided_slice %387 {offsets = [0, 0], sizes = [2, 96], strides = [1, 1]} : vector<2x128xf32> to vector<2x96xf32>
    %389 = arith.negf %388 : vector<2x96xf32>
    %390 = math.exp %389 : vector<2x96xf32>
    %cst_70 = arith.constant 1.000000e+00 : f32
    %391 = vector.broadcast %cst_70 : f32 to vector<2x96xf32>
    %392 = arith.addf %391, %390 : vector<2x96xf32>
    %393 = arith.divf %391, %392 : vector<2x96xf32>
    %394 = vector.extract_strided_slice %393 {offsets = [0, 0], sizes = [2, 32], strides = [1, 1]} : vector<2x96xf32> to vector<2x32xf32>
    %395 = vector.extract_strided_slice %393 {offsets = [0, 32], sizes = [2, 32], strides = [1, 1]} : vector<2x96xf32> to vector<2x32xf32>
    %396 = vector.extract_strided_slice %393 {offsets = [0, 64], sizes = [2, 32], strides = [1, 1]} : vector<2x96xf32> to vector<2x32xf32>
    %397 = vector.extract_strided_slice %387 {offsets = [0, 96], sizes = [2, 32], strides = [1, 1]} : vector<2x128xf32> to vector<2x32xf32>
    %398 = math.tanh %397 : vector<2x32xf32>
    %399 = arith.mulf %395, %348 : vector<2x32xf32>
    %400 = arith.mulf %394, %398 : vector<2x32xf32>
    %401 = arith.addf %399, %400 : vector<2x32xf32>
    %402 = math.tanh %401 : vector<2x32xf32>
    %403 = arith.mulf %396, %402 : vector<2x32xf32>
    %404 = vector.shape_cast %384 : vector<2x1xi1> to vector<2x1xi1>
    %405 = vector.broadcast %404 : vector<2x1xi1> to vector<2x32xi1>
    %406 = arith.select %405, %403, %345 : vector<2x32xi1>, vector<2x32xf32>
    %407 = vector.shape_cast %384 : vector<2x1xi1> to vector<2x1xi1>
    %408 = vector.broadcast %407 : vector<2x1xi1> to vector<2x32xi1>
    %409 = arith.select %408, %401, %348 : vector<2x32xi1>, vector<2x32xf32>
    %410 = tpu.concatenate %406, %370 in 1 : vector<2x32xf32>, vector<2x32xf32> -> vector<2x64xf32>
    %cst_71 = arith.constant dense<0.000000e+00> : vector<2x128xf32>
    %411 = tpu.matmul %410, %2, %cst_71 {dimension_numbers = #tpu.dot_dimension_numbers<[1], [0], [0], [1], [0, 0, 1, 1], [], []>} : vector<2x64xf32>, vector<64x128xf32>, vector<2x128xf32> -> vector<2x128xf32>
    %412 = arith.addf %411, %8 : vector<2x128xf32>
    %413 = vector.extract_strided_slice %412 {offsets = [0, 0], sizes = [2, 96], strides = [1, 1]} : vector<2x128xf32> to vector<2x96xf32>
    %414 = arith.negf %413 : vector<2x96xf32>
    %415 = math.exp %414 : vector<2x96xf32>
    %cst_72 = arith.constant 1.000000e+00 : f32
    %416 = vector.broadcast %cst_72 : f32 to vector<2x96xf32>
    %417 = arith.addf %416, %415 : vector<2x96xf32>
    %418 = arith.divf %416, %417 : vector<2x96xf32>
    %419 = vector.extract_strided_slice %418 {offsets = [0, 0], sizes = [2, 32], strides = [1, 1]} : vector<2x96xf32> to vector<2x32xf32>
    %420 = vector.extract_strided_slice %418 {offsets = [0, 32], sizes = [2, 32], strides = [1, 1]} : vector<2x96xf32> to vector<2x32xf32>
    %421 = vector.extract_strided_slice %418 {offsets = [0, 64], sizes = [2, 32], strides = [1, 1]} : vector<2x96xf32> to vector<2x32xf32>
    %422 = vector.extract_strided_slice %412 {offsets = [0, 96], sizes = [2, 32], strides = [1, 1]} : vector<2x128xf32> to vector<2x32xf32>
    %423 = math.tanh %422 : vector<2x32xf32>
    %424 = arith.mulf %420, %373 : vector<2x32xf32>
    %425 = arith.mulf %419, %423 : vector<2x32xf32>
    %426 = arith.addf %424, %425 : vector<2x32xf32>
    %427 = math.tanh %426 : vector<2x32xf32>
    %428 = arith.mulf %421, %427 : vector<2x32xf32>
    %429 = vector.shape_cast %384 : vector<2x1xi1> to vector<2x1xi1>
    %430 = vector.broadcast %429 : vector<2x1xi1> to vector<2x32xi1>
    %431 = arith.select %430, %428, %370 : vector<2x32xi1>, vector<2x32xf32>
    %432 = vector.shape_cast %384 : vector<2x1xi1> to vector<2x1xi1>
    %433 = vector.broadcast %432 : vector<2x1xi1> to vector<2x32xi1>
    %434 = arith.select %433, %426, %373 : vector<2x32xi1>, vector<2x32xf32>
    %cst_73 = arith.constant dense<0.000000e+00> : vector<2x32xf32>
    %435 = tpu.matmul %431, %9, %cst_73 {dimension_numbers = #tpu.dot_dimension_numbers<[1], [0], [0], [1], [0, 0, 1, 1], [], []>} : vector<2x32xf32>, vector<32x32xf32>, vector<2x32xf32> -> vector<2x32xf32>
    %436 = arith.addf %435, %12 : vector<2x32xf32>
    %437 = arith.index_cast %c6_i32 : i32 to index
    %c0_74 = arith.constant 0 : index
    %c0_75 = arith.constant 0 : index
    %438 = vector.load %arg8[%437, %c0_74, %c0_75] : memref<8x2x32xf32, #tpu.memory_space<vmem>>, vector<1x2x32xf32>
    %439 = vector.shape_cast %438 : vector<1x2x32xf32> to vector<2x32xf32>
    %440 = vector.shape_cast %436 : vector<2x32xf32> to vector<1x2x32xf32>
    tpu.vector_store %arg8[%437, %c0_74, %c0_75], %440 {strides = array<i32>} : memref<8x2x32xf32, #tpu.memory_space<vmem>>, vector<1x2x32xf32>,
    %c7_i32 = arith.constant 7 : i32
    %441 = arith.index_cast %c7_i32 : i32 to index
    %c0_76 = arith.constant 0 : index
    %c0_77 = arith.constant 0 : index
    %442 = vector.load %arg1[%441, %c0_76, %c0_77] : memref<8x2x16xf32, #tpu.memory_space<vmem>>, vector<1x2x16xf32>
    %443 = vector.shape_cast %442 : vector<1x2x16xf32> to vector<2x16xf32>
    %444 = vector.broadcast %c7_i32 : i32 to vector<2x1xi32>
    %445 = arith.cmpi slt, %444, %0 : vector<2x1xi32>
    %446 = tpu.concatenate %443, %406 in 1 : vector<2x16xf32>, vector<2x32xf32> -> vector<2x48xf32>
    %cst_78 = arith.constant dense<0.000000e+00> : vector<2x128xf32>
    %447 = tpu.matmul %446, %1, %cst_78 {dimension_numbers = #tpu.dot_dimension_numbers<[1], [0], [0], [1], [0, 0, 1, 1], [], []>} : vector<2x48xf32>, vector<48x128xf32>, vector<2x128xf32> -> vector<2x128xf32>
    %448 = arith.addf %447, %5 : vector<2x128xf32>
    %449 = vector.extract_strided_slice %448 {offsets = [0, 0], sizes = [2, 96], strides = [1, 1]} : vector<2x128xf32> to vector<2x96xf32>
    %450 = arith.negf %449 : vector<2x96xf32>
    %451 = math.exp %450 : vector<2x96xf32>
    %cst_79 = arith.constant 1.000000e+00 : f32
    %452 = vector.broadcast %cst_79 : f32 to vector<2x96xf32>
    %453 = arith.addf %452, %451 : vector<2x96xf32>
    %454 = arith.divf %452, %453 : vector<2x96xf32>
    %455 = vector.extract_strided_slice %454 {offsets = [0, 0], sizes = [2, 32], strides = [1, 1]} : vector<2x96xf32> to vector<2x32xf32>
    %456 = vector.extract_strided_slice %454 {offsets = [0, 32], sizes = [2, 32], strides = [1, 1]} : vector<2x96xf32> to vector<2x32xf32>
    %457 = vector.extract_strided_slice %454 {offsets = [0, 64], sizes = [2, 32], strides = [1, 1]} : vector<2x96xf32> to vector<2x32xf32>
    %458 = vector.extract_strided_slice %448 {offsets = [0, 96], sizes = [2, 32], strides = [1, 1]} : vector<2x128xf32> to vector<2x32xf32>
    %459 = math.tanh %458 : vector<2x32xf32>
    %460 = arith.mulf %456, %409 : vector<2x32xf32>
    %461 = arith.mulf %455, %459 : vector<2x32xf32>
    %462 = arith.addf %460, %461 : vector<2x32xf32>
    %463 = math.tanh %462 : vector<2x32xf32>
    %464 = arith.mulf %457, %463 : vector<2x32xf32>
    %465 = vector.shape_cast %445 : vector<2x1xi1> to vector<2x1xi1>
    %466 = vector.broadcast %465 : vector<2x1xi1> to vector<2x32xi1>
    %467 = arith.select %466, %464, %406 : vector<2x32xi1>, vector<2x32xf32>
    %468 = vector.shape_cast %445 : vector<2x1xi1> to vector<2x1xi1>
    %469 = vector.broadcast %468 : vector<2x1xi1> to vector<2x32xi1>
    %470 = arith.select %469, %462, %409 : vector<2x32xi1>, vector<2x32xf32>
    %471 = tpu.concatenate %467, %431 in 1 : vector<2x32xf32>, vector<2x32xf32> -> vector<2x64xf32>
    %cst_80 = arith.constant dense<0.000000e+00> : vector<2x128xf32>
    %472 = tpu.matmul %471, %2, %cst_80 {dimension_numbers = #tpu.dot_dimension_numbers<[1], [0], [0], [1], [0, 0, 1, 1], [], []>} : vector<2x64xf32>, vector<64x128xf32>, vector<2x128xf32> -> vector<2x128xf32>
    %473 = arith.addf %472, %8 : vector<2x128xf32>
    %474 = vector.extract_strided_slice %473 {offsets = [0, 0], sizes = [2, 96], strides = [1, 1]} : vector<2x128xf32> to vector<2x96xf32>
    %475 = arith.negf %474 : vector<2x96xf32>
    %476 = math.exp %475 : vector<2x96xf32>
    %cst_81 = arith.constant 1.000000e+00 : f32
    %477 = vector.broadcast %cst_81 : f32 to vector<2x96xf32>
    %478 = arith.addf %477, %476 : vector<2x96xf32>
    %479 = arith.divf %477, %478 : vector<2x96xf32>
    %480 = vector.extract_strided_slice %479 {offsets = [0, 0], sizes = [2, 32], strides = [1, 1]} : vector<2x96xf32> to vector<2x32xf32>
    %481 = vector.extract_strided_slice %479 {offsets = [0, 32], sizes = [2, 32], strides = [1, 1]} : vector<2x96xf32> to vector<2x32xf32>
    %482 = vector.extract_strided_slice %479 {offsets = [0, 64], sizes = [2, 32], strides = [1, 1]} : vector<2x96xf32> to vector<2x32xf32>
    %483 = vector.extract_strided_slice %473 {offsets = [0, 96], sizes = [2, 32], strides = [1, 1]} : vector<2x128xf32> to vector<2x32xf32>
    %484 = math.tanh %483 : vector<2x32xf32>
    %485 = arith.mulf %481, %434 : vector<2x32xf32>
    %486 = arith.mulf %480, %484 : vector<2x32xf32>
    %487 = arith.addf %485, %486 : vector<2x32xf32>
    %488 = math.tanh %487 : vector<2x32xf32>
    %489 = arith.mulf %482, %488 : vector<2x32xf32>
    %490 = vector.shape_cast %445 : vector<2x1xi1> to vector<2x1xi1>
    %491 = vector.broadcast %490 : vector<2x1xi1> to vector<2x32xi1>
    %492 = arith.select %491, %489, %431 : vector<2x32xi1>, vector<2x32xf32>
    %493 = vector.shape_cast %445 : vector<2x1xi1> to vector<2x1xi1>
    %494 = vector.broadcast %493 : vector<2x1xi1> to vector<2x32xi1>
    %495 = arith.select %494, %487, %434 : vector<2x32xi1>, vector<2x32xf32>
    %cst_82 = arith.constant dense<0.000000e+00> : vector<2x32xf32>
    %496 = tpu.matmul %492, %9, %cst_82 {dimension_numbers = #tpu.dot_dimension_numbers<[1], [0], [0], [1], [0, 0, 1, 1], [], []>} : vector<2x32xf32>, vector<32x32xf32>, vector<2x32xf32> -> vector<2x32xf32>
    %497 = arith.addf %496, %12 : vector<2x32xf32>
    %498 = arith.index_cast %c7_i32 : i32 to index
    %c0_83 = arith.constant 0 : index
    %c0_84 = arith.constant 0 : index
    %499 = vector.load %arg8[%498, %c0_83, %c0_84] : memref<8x2x32xf32, #tpu.memory_space<vmem>>, vector<1x2x32xf32>
    %500 = vector.shape_cast %499 : vector<1x2x32xf32> to vector<2x32xf32>
    %501 = vector.shape_cast %497 : vector<2x32xf32> to vector<1x2x32xf32>
    tpu.vector_store %arg8[%498, %c0_83, %c0_84], %501 {strides = array<i32>} : memref<8x2x32xf32, #tpu.memory_space<vmem>>, vector<1x2x32xf32>,
    %c8_i32 = arith.constant 8 : i32
    %c0_85 = arith.constant 0 : index
    %c0_86 = arith.constant 0 : index
    %c0_87 = arith.constant 0 : index
    %502 = vector.load %arg9[%c0_85, %c0_86, %c0_87] : memref<2x2x32xf32, #tpu.memory_space<vmem>>, vector<1x2x32xf32>
    %503 = vector.shape_cast %502 : vector<1x2x32xf32> to vector<2x32xf32>
    %504 = vector.shape_cast %467 : vector<2x32xf32> to vector<1x2x32xf32>
    tpu.vector_store %arg9[%c0_85, %c0_86, %c0_87], %504 {strides = array<i32>} : memref<2x2x32xf32, #tpu.memory_space<vmem>>, vector<1x2x32xf32>,
    %c0_88 = arith.constant 0 : index
    %c0_89 = arith.constant 0 : index
    %c0_90 = arith.constant 0 : index
    %505 = vector.load %arg10[%c0_88, %c0_89, %c0_90] : memref<2x2x32xf32, #tpu.memory_space<vmem>>, vector<1x2x32xf32>
    %506 = vector.shape_cast %505 : vector<1x2x32xf32> to vector<2x32xf32>
    %507 = vector.shape_cast %470 : vector<2x32xf32> to vector<1x2x32xf32>
    tpu.vector_store %arg10[%c0_88, %c0_89, %c0_90], %507 {strides = array<i32>} : memref<2x2x32xf32, #tpu.memory_space<vmem>>, vector<1x2x32xf32>,
    %c1 = arith.constant 1 : index
    %c0_91 = arith.constant 0 : index
    %c0_92 = arith.constant 0 : index
    %508 = vector.load %arg9[%c1, %c0_91, %c0_92] : memref<2x2x32xf32, #tpu.memory_space<vmem>>, vector<1x2x32xf32>
    %509 = vector.shape_cast %508 : vector<1x2x32xf32> to vector<2x32xf32>
    %510 = vector.shape_cast %492 : vector<2x32xf32> to vector<1x2x32xf32>
    tpu.vector_store %arg9[%c1, %c0_91, %c0_92], %510 {strides = array<i32>} : memref<2x2x32xf32, #tpu.memory_space<vmem>>, vector<1x2x32xf32>,
    %c1_93 = arith.constant 1 : index
    %c0_94 = arith.constant 0 : index
    %c0_95 = arith.constant 0 : index
    %511 = vector.load %arg10[%c1_93, %c0_94, %c0_95] : memref<2x2x32xf32, #tpu.memory_space<vmem>>, vector<1x2x32xf32>
    %512 = vector.shape_cast %511 : vector<1x2x32xf32> to vector<2x32xf32>
    %513 = vector.shape_cast %495 : vector<2x32xf32> to vector<1x2x32xf32>
    tpu.vector_store %arg10[%c1_93, %c0_94, %c0_95], %513 {strides = array<i32>} : memref<2x2x32xf32, #tpu.memory_space<vmem>>, vector<1x2x32xf32>,
    return
  }
}

</mosaic_0001>

<llo_original>
// kernel: tpu_custom_call.1
$region0: #{tpu_custom_call.1}
  #allocation0 [shape = 'u32[]', space=smem, size = 0x4, offset = 0x4, fixed_abs, tag = 'smem constant byte address 0x4 - core index']
  #allocation1 [shape = 'u32[144,128]{1,0:T(1,128)}', space=vmem, size = 0x12000, scoped, tag = 'internal scratch']
  %s0 = inlined_call_operand.vmem [shape: s32[2,1], index: 0, kind: input, shape index: {}]
  %s1 = inlined_call_operand.hbm [shape: f32[8,2,16], index: 1, kind: input, shape index: {}]
  %s2 = inlined_call_operand.hbm [shape: f32[48,128], index: 2, kind: input, shape index: {}]
  %s3 = inlined_call_operand.vmem [shape: f32[1,128], index: 3, kind: input, shape index: {}]
  %s4 = inlined_call_operand.hbm [shape: f32[64,128], index: 4, kind: input, shape index: {}]
  %s5 = inlined_call_operand.vmem [shape: f32[1,128], index: 5, kind: input, shape index: {}]
  %s6 = inlined_call_operand.hbm [shape: f32[32,32], index: 6, kind: input, shape index: {}]
  %s7 = inlined_call_operand.vmem [shape: f32[1,32], index: 7, kind: input, shape index: {}]
  %s8 = inlined_call_operand.hbm [shape: f32[8,2,32], index: 8, kind: output, shape index: {0}]
  %s9 = inlined_call_operand.hbm [shape: f32[2,2,32], index: 9, kind: output, shape index: {1}]
  %s10 = inlined_call_operand.hbm [shape: f32[2,2,32], index: 10, kind: output, shape index: {2}]
  %11 = xla_tuple %s8, %s9, %s10
  %s12 = sld [smem:[#allocation0]]
  $region74: #{tpu_custom_call.1} parent=0
    _
  %s14 = ssub.s32 1, %s12
  %s15 = scalar_select 0, %s14, %s12
  $region1: #{tpu_custom_call.1} parent=0
    #allocation2 [shape = 'u8[8192]{0}', space=vmem, size = 0x2000, scoped, tag = 'input window, operand 1, single buffered']
    #allocation3 [shape = 's32[1]{0}', space=sflag, size = 0x4, scoped, tag = 'scoped memory for tpu_custom_call.1']
    #allocation4 [shape = 's32[1]{0}', space=sflag, size = 0x4, scoped, tag = 'scoped memory for tpu_custom_call.1']
    #allocation5 [shape = 'u8[24576]{0}', space=vmem, size = 0x6000, scoped, tag = 'input window, operand 2, single buffered']
    #allocation6 [shape = 's32[1]{0}', space=sflag, size = 0x4, scoped, tag = 'scoped memory for tpu_custom_call.1']
    #allocation7 [shape = 'u8[32768]{0}', space=vmem, size = 0x8000, scoped, tag = 'input window, operand 4, single buffered']
    #allocation8 [shape = 'u8[16384]{0}', space=vmem, size = 0x4000, scoped, tag = 'input window, operand 6, single buffered']
    #allocation9 [shape = 's32[1]{0}', space=sflag, size = 0x4, scoped, tag = 'scoped memory for tpu_custom_call.1']
    #allocation10 [shape = 'u8[8192]{0}', space=vmem, size = 0x2000, scoped, tag = 'output window, operand 0, single buffered']
    #allocation11 [shape = 'u8[2048]{0}', space=vmem, size = 0x800, scoped, tag = 'output window, operand 1, single buffered']
    #allocation12 [shape = 's32[1]{0}', space=sflag, size = 0x4, scoped, tag = 'scoped memory for tpu_custom_call.1']
    #allocation13 [shape = 'u8[2048]{0}', space=vmem, size = 0x800, scoped, tag = 'output window, operand 2, single buffered']
    %16 = vsyncpa [#allocation3], 0
    %17 = vsyncpa [#allocation6], 0
    %18 = vsyncpa [#allocation9], 0
    %19 = vsyncpa [#allocation4], 0
    %20 = vsyncpa [#allocation12], 0
    // Predicated region
    $region2: #{tpu_custom_call.1} parent=1 // pred_check
      _
    $region3: #{tpu_custom_call.1} parent=1 // pred_check_branch
      %22 = sbr.rel (0) target = $region5
    $region4: #{tpu_custom_call.1} parent=1 // pred_region
      _
    $region5: #{tpu_custom_call.1} parent=1 // pred_fallthru
      _
    // Predicated region
    $region6: #{tpu_custom_call.1} parent=1 // pred_check
      _
    $region7: #{tpu_custom_call.1} parent=1 // pred_check_branch
      %24 = sbr.rel (0) target = $region9
    $region8: #{tpu_custom_call.1} parent=1 // pred_region
      %s26 = ssub.s32 256, 256
      %27 = vsyncadd [#allocation3], %s26
      %s28 = sshll.u32 [#allocation2], 4
      %s29 = int_to_ptr.vmem [resolvable:$true] %s28
      %34 = dma.hbm_to_vmem [thread:$0]  %s1, 256, %s29, [#allocation3], 32, 32, 2
    $region9: #{tpu_custom_call.1} parent=1 // pred_fallthru
      _
    // Predicated region
    $region10: #{tpu_custom_call.1} parent=1 // pred_check
      _
    $region11: #{tpu_custom_call.1} parent=1 // pred_check_branch
      %36 = sbr.rel (0) target = $region13
    $region12: #{tpu_custom_call.1} parent=1 // pred_region
      %s38 = ssub.s32 768, 768
      %39 = vsyncadd [#allocation6], %s38
      %s40 = sshll.u32 [#allocation5], 4
      %s41 = int_to_ptr.vmem [resolvable:$true] %s40
      %46 = dma.hbm_to_vmem [thread:$0]  %s2, 768, %s41, [#allocation6], 128, 128, 8
    $region13: #{tpu_custom_call.1} parent=1 // pred_fallthru
      _
    // Predicated region
    $region14: #{tpu_custom_call.1} parent=1 // pred_check
      _
    $region15: #{tpu_custom_call.1} parent=1 // pred_check_branch
      %48 = sbr.rel (0) target = $region17
    $region16: #{tpu_custom_call.1} parent=1 // pred_region
      _
    $region17: #{tpu_custom_call.1} parent=1 // pred_fallthru
      _
    // Predicated region
    $region18: #{tpu_custom_call.1} parent=1 // pred_check
      _
    $region19: #{tpu_custom_call.1} parent=1 // pred_check_branch
      %50 = sbr.rel (0) target = $region21
    $region20: #{tpu_custom_call.1} parent=1 // pred_region
      %s52 = ssub.s32 1024, 1024
      %53 = vsyncadd [#allocation6], %s52
      %s54 = sshll.u32 [#allocation7], 4
      %s55 = int_to_ptr.vmem [resolvable:$true] %s54
      %60 = dma.hbm_to_vmem [thread:$0]  %s4, 1024, %s55, [#allocation6], 128, 128, 8
    $region21: #{tpu_custom_call.1} parent=1 // pred_fallthru
      _
    // Predicated region
    $region22: #{tpu_custom_call.1} parent=1 // pred_check
      _
    $region23: #{tpu_custom_call.1} parent=1 // pred_check_branch
      %62 = sbr.rel (0) target = $region25
    $region24: #{tpu_custom_call.1} parent=1 // pred_region
      _
    $region25: #{tpu_custom_call.1} parent=1 // pred_fallthru
      _
    // Predicated region
    $region26: #{tpu_custom_call.1} parent=1 // pred_check
      _
    $region27: #{tpu_custom_call.1} parent=1 // pred_check_branch
      %64 = sbr.rel (0) target = $region29
    $region28: #{tpu_custom_call.1} parent=1 // pred_region
      %s66 = ssub.s32 512, 512
      %67 = vsyncadd [#allocation9], %s66
      %s68 = sshll.u32 [#allocation8], 4
      %s69 = int_to_ptr.vmem [resolvable:$true] %s68
      %74 = dma.hbm_to_vmem [thread:$0]  %s6, 512, %s69, [#allocation9], 128, 128, 8
    $region29: #{tpu_custom_call.1} parent=1 // pred_fallthru
      _
    // Predicated region
    $region30: #{tpu_custom_call.1} parent=1 // pred_check
      _
    $region31: #{tpu_custom_call.1} parent=1 // pred_check_branch
      %76 = sbr.rel (0) target = $region33
    $region32: #{tpu_custom_call.1} parent=1 // pred_region
      _
    $region33: #{tpu_custom_call.1} parent=1 // pred_fallthru
      _
    // Predicated region
    $region34: #{tpu_custom_call.1} parent=1 // pred_check
      _
    $region35: #{tpu_custom_call.1} parent=1 // pred_check_branch
      %78 = sbr.rel (0) target = $region37
    $region36: #{tpu_custom_call.1} parent=1 // pred_region
      %79 = dma.done [#allocation3], 256
    $region37: #{tpu_custom_call.1} parent=1 // pred_fallthru
      _
    // Predicated region
    $region38: #{tpu_custom_call.1} parent=1 // pred_check
      _
    $region39: #{tpu_custom_call.1} parent=1 // pred_check_branch
      %81 = sbr.rel (0) target = $region41
    $region40: #{tpu_custom_call.1} parent=1 // pred_region
      %82 = dma.done [#allocation6], 768
    $region41: #{tpu_custom_call.1} parent=1 // pred_fallthru
      _
    // Predicated region
    $region42: #{tpu_custom_call.1} parent=1 // pred_check
      _
    $region43: #{tpu_custom_call.1} parent=1 // pred_check_branch
      %84 = sbr.rel (0) target = $region45
    $region44: #{tpu_custom_call.1} parent=1 // pred_region
      %85 = dma.done [#allocation6], 1024
    $region45: #{tpu_custom_call.1} parent=1 // pred_fallthru
      _
    // Predicated region
    $region46: #{tpu_custom_call.1} parent=1 // pred_check
      _
    $region47: #{tpu_custom_call.1} parent=1 // pred_check_branch
      %87 = sbr.rel (0) target = $region49
    $region48: #{tpu_custom_call.1} parent=1 // pred_region
      %88 = dma.done [#allocation9], 512
    $region49: #{tpu_custom_call.1} parent=1 // pred_fallthru
      _
    %v89 = vld [vmem:[%s0] sm:$0x3]
    %v90 = vld [vmem:[#allocation5] sm:$0xff]
    %v91 = vld [vmem:[#allocation5 + $0x8] sm:$0xff]
    %v92 = vld [vmem:[#allocation5 + $0x10] sm:$0xff]
    %v93 = vld [vmem:[#allocation5 + $0x18] sm:$0xff]
    %v94 = vld [vmem:[#allocation5 + $0x20] sm:$0xff]
    %v95 = vld [vmem:[#allocation5 + $0x28] sm:$0xff]
    %v96 = vld [vmem:[#allocation7] sm:$0xff]
    %v97 = vld [vmem:[#allocation7 + $0x8] sm:$0xff]
    %v98 = vld [vmem:[#allocation7 + $0x10] sm:$0xff]
    %v99 = vld [vmem:[#allocation7 + $0x18] sm:$0xff]
    %v100 = vld [vmem:[#allocation7 + $0x20] sm:$0xff]
    %v101 = vld [vmem:[#allocation7 + $0x28] sm:$0xff]
    %v102 = vld [vmem:[#allocation7 + $0x30] sm:$0xff]
    %v103 = vld [vmem:[#allocation7 + $0x38] sm:$0xff]
    %v104 = vld [vmem:[%s3] sm:$0x1]
    %v106 = vlaneseq
    %v107 = vshrl.u32 %v106, 7
    %v108 = vsub.s32 0, %v107
    %v109 = vrot.slane %v104, %v108
    %v111 = vld [vmem:[%s5] sm:$0x1]
    %v113 = vlaneseq
    %v114 = vshrl.u32 %v113, 7
    %v115 = vsub.s32 0, %v114
    %v116 = vrot.slane %v111, %v115
    %v118 = vld [vmem:[#allocation8] sm:$0xff]
    %v119 = vld [vmem:[#allocation8 + $0x8] sm:$0xff]
    %v120 = vld [vmem:[#allocation8 + $0x10] sm:$0xff]
    %v121 = vld [vmem:[#allocation8 + $0x18] sm:$0xff]
    %v122 = vld [vmem:[%s7] sm:$0x1]
    %v124 = vlaneseq
    %v125 = vshrl.u32 %v124, 7
    %v126 = vsub.s32 0, %v125
    %v127 = vrot.slane %v122, %v126
    %v129 = vld [vmem:[#allocation2] sm:$0x3]
    %vm130 = vcmp.gt.s32.totalorder %v89, 0
    %vm131 = vcmask 130048
    %v132 = vsel %vm131, %v129, 0.0
    %vm133 = vcmask 392192
    %v135 = vsel %vm133, %v132, 0
    %137 = vmatprep.subr.mxu0 0.0
    %138 = vmatpush1.msra.mxu0 %v90
    %139 = vmatprep.subr.mxu0 0.0
    %140 = vmatpush1.msra.mxu0 %v91
    %141 = vmatprep.subr.mxu0 0.0
    %142 = vmatpush1.msra.mxu0 %v92
    %143 = vmatprep.subr.mxu0 0.0
    %144 = vmatpush1.msra.mxu0 %v93
    %145 = vmatprep.subr.mxu0 0.0
    %146 = vmatpush1.msra.mxu0 %v94
    %147 = vmatprep.subr.mxu0 0.0
    %148 = vmatpush1.msra.mxu0 %v95
    %149 = vmatprep.subr.mxu0 0.0
    %150 = vmatpush1.msra.mxu0 0.0
    %151 = vmatprep.subr.mxu0 0.0
    %152 = vmatpush1.msra.mxu0 0.0
    %153 = vmatprep.subr.mxu0 0.0
    %154 = vmatpush1.msra.mxu0 0.0
    %155 = vmatprep.subr.mxu0 0.0
    %156 = vmatpush1.msra.mxu0 0.0
    %157 = vmatprep.subr.mxu0 0.0
    %158 = vmatpush1.msra.mxu0 0.0
    %159 = vmatprep.subr.mxu0 0.0
    %160 = vmatpush1.msra.mxu0 0.0
    %161 = vmatprep.subr.mxu0 0.0
    %162 = vmatpush1.msra.mxu0 0.0
    %163 = vmatprep.subr.mxu0 0.0
    %164 = vmatpush1.msra.mxu0 0.0
    %165 = vmatprep.subr.mxu0 0.0
    %166 = vmatpush1.msra.mxu0 0.0
    %167 = vmatprep.subr.mxu0 0.0
    %168 = vmatpush1.msra.mxu0 0.0
    %169 = vmatprep.subr.mxu0 0.0
    %170 = vmatpush1.msra.mxu0 0.0
    %171 = vmatprep.subr.mxu0 0.0
    %172 = vmatpush1.msra.mxu0 0.0
    %173 = vmatprep.subr.mxu0 0.0
    %174 = vmatpush1.msra.mxu0 0.0
    %175 = vmatprep.subr.mxu0 0.0
    %176 = vmatpush1.msra.mxu0 0.0
    %177 = vmatprep.subr.mxu0 0.0
    %178 = vmatpush1.msra.mxu0 0.0
    %179 = vmatprep.subr.mxu0 0.0
    %180 = vmatpush1.msra.mxu0 0.0
    %181 = vmatprep.subr.mxu0 0.0
    %182 = vmatpush1.msra.mxu0 0.0
    %183 = vmatprep.subr.mxu0 0.0
    %184 = vmatpush1.msra.mxu0 0.0
    %185 = vmatprep.subr.mxu0 0.0
    %186 = vmatpush1.msra.mxu0 0.0
    %187 = vmatprep.subr.mxu0 0.0
    %188 = vmatpush1.msra.mxu0 0.0
    %189 = vmatprep.subr.mxu0 0.0
    %190 = vmatpush1.msra.mxu0 0.0
    %191 = vmatprep.subr.mxu0 0.0
    %192 = vmatpush1.msra.mxu0 0.0
    %193 = vmatprep.subr.mxu0 0.0
    %194 = vmatpush1.msra.mxu0 0.0
    %195 = vmatprep.subr.mxu0 0.0
    %196 = vmatpush1.msra.mxu0 0.0
    %197 = vmatprep.subr.mxu0 0.0
    %198 = vmatpush1.msra.mxu0 0.0
    %199 = vmatprep.subr.mxu0 0.0
    %200 = vmatpush1.msra.mxu0 0.0
    %201 = vmatprep.mubr.f32.mxu0 0.0
    %202 = vmatmul.mubr.f32.gmra.mrb[0].mxu0 %v135
    %v203 = vpop.f32.mrb[0].mxu0
    %v204 = vadd.f32 %v109, %v203
    %v205 = vpop.f32.mrb[0].mxu0
    %206 = vdwg.mxu0
    %v207 = vxor.u32 %v204, 2147483648
    %v208 = vmul.f32 %v207, 1.442695
    %v209 = vpow.pop %v208
    %v210 = vadd.f32 %v209, 1.0
    %v211 = vrcp.pop %v210
    %v212 = vmul.f32 1.0, %v211
    %v213 = vtanh.pop %v204
    %v214 = vmul.f32 %v212, 0.0
    %216 = vrot.lane.b32.xlu0 %v213, 32
    %v217 = vpop.permute.xlu0 %216
    %v219 = vmul.f32 %v212, %v217
    %221 = vrot.lane.b32.xlu0 %v219, 32
    %v222 = vpop.permute.xlu0 %221
    %v224 = vadd.f32 %v214, %v222
    %v225 = vtanh.pop %v224
    %227 = vrot.lane.b32.xlu0 %v225, 32
    %v228 = vpop.permute.xlu0 %227
    %v230 = vmul.f32 %v212, %v228
    %v231 = vsel %vm130, 1, 0
    %232 = vset.pattern.permute.xlu0 0
    %233 = vperm.xlu0 %232, %v231
    %v234 = vpop.permute.xlu0 %233
    %vm235 = vcmp.eq.s32.totalorder %v234, 1
    %v236 = vsel %vm235, %v230, 0.0
    %v237 = vsel %vm235, %v224, 0.0
    %239 = vrot.lane.b32.xlu0 %v236, 64
    %v240 = vpop.permute.xlu0 %239
    %vm242 = vcmask 261120
    %v243 = vsel %vm242, %v240, 0.0
    %vm244 = vcmask 523264
    %v246 = vsel %vm244, %v243, 0
    %248 = vmatprep.subr.mxu0 0.0
    %249 = vmatpush1.msra.mxu0 %v96
    %250 = vmatprep.subr.mxu0 0.0
    %251 = vmatpush1.msra.mxu0 %v97
    %252 = vmatprep.subr.mxu0 0.0
    %253 = vmatpush1.msra.mxu0 %v98
    %254 = vmatprep.subr.mxu0 0.0
    %255 = vmatpush1.msra.mxu0 %v99
    %256 = vmatprep.subr.mxu0 0.0
    %257 = vmatpush1.msra.mxu0 %v100
    %258 = vmatprep.subr.mxu0 0.0
    %259 = vmatpush1.msra.mxu0 %v101
    %260 = vmatprep.subr.mxu0 0.0
    %261 = vmatpush1.msra.mxu0 %v102
    %262 = vmatprep.subr.mxu0 0.0
    %263 = vmatpush1.msra.mxu0 %v103
    %264 = vmatprep.subr.mxu0 0.0
    %265 = vmatpush1.msra.mxu0 0.0
    %266 = vmatprep.subr.mxu0 0.0
    %267 = vmatpush1.msra.mxu0 0.0
    %268 = vmatprep.subr.mxu0 0.0
    %269 = vmatpush1.msra.mxu0 0.0
    %270 = vmatprep.subr.mxu0 0.0
    %271 = vmatpush1.msra.mxu0 0.0
    %272 = vmatprep.subr.mxu0 0.0
    %273 = vmatpush1.msra.mxu0 0.0
    %274 = vmatprep.subr.mxu0 0.0
    %275 = vmatpush1.msra.mxu0 0.0
    %276 = vmatprep.subr.mxu0 0.0
    %277 = vmatpush1.msra.mxu0 0.0
    %278 = vmatprep.subr.mxu0 0.0
    %279 = vmatpush1.msra.mxu0 0.0
    %280 = vmatprep.subr.mxu0 0.0
    %281 = vmatpush1.msra.mxu0 0.0
    %282 = vmatprep.subr.mxu0 0.0
    %283 = vmatpush1.msra.mxu0 0.0
    %284 = vmatprep.subr.mxu0 0.0
    %285 = vmatpush1.msra.mxu0 0.0
    %286 = vmatprep.subr.mxu0 0.0
    %287 = vmatpush1.msra.mxu0 0.0
    %288 = vmatprep.subr.mxu0 0.0
    %289 = vmatpush1.msra.mxu0 0.0
    %290 = vmatprep.subr.mxu0 0.0
    %291 = vmatpush1.msra.mxu0 0.0
    %292 = vmatprep.subr.mxu0 0.0
    %293 = vmatpush1.msra.mxu0 0.0
    %294 = vmatprep.subr.mxu0 0.0
    %295 = vmatpush1.msra.mxu0 0.0
    %296 = vmatprep.subr.mxu0 0.0
    %297 = vmatpush1.msra.mxu0 0.0
    %298 = vmatprep.subr.mxu0 0.0
    %299 = vmatpush1.msra.mxu0 0.0
    %300 = vmatprep.subr.mxu0 0.0
    %301 = vmatpush1.msra.mxu0 0.0
    %302 = vmatprep.subr.mxu0 0.0
    %303 = vmatpush1.msra.mxu0 0.0
    %304 = vmatprep.subr.mxu0 0.0
    %305 = vmatpush1.msra.mxu0 0.0
    %306 = vmatprep.subr.mxu0 0.0
    %307 = vmatpush1.msra.mxu0 0.0
    %308 = vmatprep.subr.mxu0 0.0
    %309 = vmatpush1.msra.mxu0 0.0
    %310 = vmatprep.subr.mxu0 0.0
    %311 = vmatpush1.msra.mxu0 0.0
    %312 = vmatprep.mubr.f32.mxu0 0.0
    %313 = vmatmul.mubr.f32.gmra.mrb[0].mxu0 %v246
    %v314 = vpop.f32.mrb[0].mxu0
    %v315 = vadd.f32 %v116, %v314
    %v316 = vpop.f32.mrb[0].mxu0
    %317 = vdwg.mxu0
    %v318 = vxor.u32 %v315, 2147483648
    %v319 = vmul.f32 %v318, 1.442695
    %v320 = vpow.pop %v319
    %v321 = vadd.f32 %v320, 1.0
    %v322 = vrcp.pop %v321
    %v323 = vmul.f32 1.0, %v322
    %v324 = vtanh.pop %v315
    %v325 = vmul.f32 %v323, 0.0
    %327 = vrot.lane.b32.xlu0 %v324, 32
    %v328 = vpop.permute.xlu0 %327
    %v330 = vmul.f32 %v323, %v328
    %332 = vrot.lane.b32.xlu0 %v330, 32
    %v333 = vpop.permute.xlu0 %332
    %v335 = vadd.f32 %v325, %v333
    %v336 = vtanh.pop %v335
    %338 = vrot.lane.b32.xlu0 %v336, 32
    %v339 = vpop.permute.xlu0 %338
    %v341 = vmul.f32 %v323, %v339
    %v342 = vsel %vm235, %v341, 0.0
    %v343 = vsel %vm235, %v335, 0.0
    %345 = vrot.lane.b32.xlu0 %v342, 64
    %v346 = vpop.permute.xlu0 %345
    %v347 = vsel %vm242, %v346, 0
    %349 = vmatprep.subr.mxu0 0.0
    %350 = vmatpush1.msra.mxu0 %v118
    %351 = vmatprep.subr.mxu0 0.0
    %352 = vmatpush1.msra.mxu0 %v119
    %353 = vmatprep.subr.mxu0 0.0
    %354 = vmatpush1.msra.mxu0 %v120
    %355 = vmatprep.subr.mxu0 0.0
    %356 = vmatpush1.msra.mxu0 %v121
    %357 = vmatprep.subr.mxu0 0.0
    %358 = vmatpush1.msra.mxu0 0.0
    %359 = vmatprep.subr.mxu0 0.0
    %360 = vmatpush1.msra.mxu0 0.0
    %361 = vmatprep.subr.mxu0 0.0
    %362 = vmatpush1.msra.mxu0 0.0
    %363 = vmatprep.subr.mxu0 0.0
    %364 = vmatpush1.msra.mxu0 0.0
    %365 = vmatprep.subr.mxu0 0.0
    %366 = vmatpush1.msra.mxu0 0.0
    %367 = vmatprep.subr.mxu0 0.0
    %368 = vmatpush1.msra.mxu0 0.0
    %369 = vmatprep.subr.mxu0 0.0
    %370 = vmatpush1.msra.mxu0 0.0
    %371 = vmatprep.subr.mxu0 0.0
    %372 = vmatpush1.msra.mxu0 0.0
    %373 = vmatprep.subr.mxu0 0.0
    %374 = vmatpush1.msra.mxu0 0.0
    %375 = vmatprep.subr.mxu0 0.0
    %376 = vmatpush1.msra.mxu0 0.0
    %377 = vmatprep.subr.mxu0 0.0
    %378 = vmatpush1.msra.mxu0 0.0
    %379 = vmatprep.subr.mxu0 0.0
    %380 = vmatpush1.msra.mxu0 0.0
    %381 = vmatprep.subr.mxu0 0.0
    %382 = vmatpush1.msra.mxu0 0.0
    %383 = vmatprep.subr.mxu0 0.0
    %384 = vmatpush1.msra.mxu0 0.0
    %385 = vmatprep.subr.mxu0 0.0
    %386 = vmatpush1.msra.mxu0 0.0
    %387 = vmatprep.subr.mxu0 0.0
    %388 = vmatpush1.msra.mxu0 0.0
    %389 = vmatprep.subr.mxu0 0.0
    %390 = vmatpush1.msra.mxu0 0.0
    %391 = vmatprep.subr.mxu0 0.0
    %392 = vmatpush1.msra.mxu0 0.0
    %393 = vmatprep.subr.mxu0 0.0
    %394 = vmatpush1.msra.mxu0 0.0
    %395 = vmatprep.subr.mxu0 0.0
    %396 = vmatpush1.msra.mxu0 0.0
    %397 = vmatprep.subr.mxu0 0.0
    %398 = vmatpush1.msra.mxu0 0.0
    %399 = vmatprep.subr.mxu0 0.0
    %400 = vmatpush1.msra.mxu0 0.0
    %401 = vmatprep.subr.mxu0 0.0
    %402 = vmatpush1.msra.mxu0 0.0
    %403 = vmatprep.subr.mxu0 0.0
    %404 = vmatpush1.msra.mxu0 0.0
    %405 = vmatprep.subr.mxu0 0.0
    %406 = vmatpush1.msra.mxu0 0.0
    %407 = vmatprep.subr.mxu0 0.0
    %408 = vmatpush1.msra.mxu0 0.0
    %409 = vmatprep.subr.mxu0 0.0
    %410 = vmatpush1.msra.mxu0 0.0
    %411 = vmatprep.subr.mxu0 0.0
    %412 = vmatpush1.msra.mxu0 0.0
    %413 = vmatprep.mubr.f32.mxu0 0.0
    %414 = vmatmul.mubr.f32.gmra.mrb[0].mxu0 %v347
    %v415 = vpop.f32.mrb[0].mxu0
    %v416 = vadd.f32 %v127, %v415
    %v417 = vpop.f32.mrb[0].mxu0
    %418 = vdwg.mxu0
    %vm419 = vcmask 254976
    %420 = vst.msk [vmem:[#allocation10] sm:$0x3] %vm419, %v416
    %s421 = scalar_lea.vmem [#allocation2], 2
    %v422 = vld [vmem:[%s421] sm:$0x3]
    %vm423 = vcmp.gt.s32.totalorder %v89, 1
    %424 = vrot.lane.b32.xlu0 %v236, 80
    %v425 = vpop.permute.xlu0 %424
    %v427 = vsel %vm131, %v422, %v425
    %v429 = vsel %vm133, %v427, 0
    %431 = vmatprep.subr.mxu0 0.0
    %432 = vmatpush1.msra.mxu0 %v90
    %433 = vmatprep.subr.mxu0 0.0
    %434 = vmatpush1.msra.mxu0 %v91
    %435 = vmatprep.subr.mxu0 0.0
    %436 = vmatpush1.msra.mxu0 %v92
    %437 = vmatprep.subr.mxu0 0.0
    %438 = vmatpush1.msra.mxu0 %v93
    %439 = vmatprep.subr.mxu0 0.0
    %440 = vmatpush1.msra.mxu0 %v94
    %441 = vmatprep.subr.mxu0 0.0
    %442 = vmatpush1.msra.mxu0 %v95
    %443 = vmatprep.subr.mxu0 0.0
    %444 = vmatpush1.msra.mxu0 0.0
    %445 = vmatprep.subr.mxu0 0.0
    %446 = vmatpush1.msra.mxu0 0.0
    %447 = vmatprep.subr.mxu0 0.0
    %448 = vmatpush1.msra.mxu0 0.0
    %449 = vmatprep.subr.mxu0 0.0
    %450 = vmatpush1.msra.mxu0 0.0
    %451 = vmatprep.subr.mxu0 0.0
    %452 = vmatpush1.msra.mxu0 0.0
    %453 = vmatprep.subr.mxu0 0.0
    %454 = vmatpush1.msra.mxu0 0.0
    %455 = vmatprep.subr.mxu0 0.0
    %456 = vmatpush1.msra.mxu0 0.0
    %457 = vmatprep.subr.mxu0 0.0
    %458 = vmatpush1.msra.mxu0 0.0
    %459 = vmatprep.subr.mxu0 0.0
    %460 = vmatpush1.msra.mxu0 0.0
    %461 = vmatprep.subr.mxu0 0.0
    %462 = vmatpush1.msra.mxu0 0.0
    %463 = vmatprep.subr.mxu0 0.0
    %464 = vmatpush1.msra.mxu0 0.0
    %465 = vmatprep.subr.mxu0 0.0
    %466 = vmatpush1.msra.mxu0 0.0
    %467 = vmatprep.subr.mxu0 0.0
    %468 = vmatpush1.msra.mxu0 0.0
    %469 = vmatprep.subr.mxu0 0.0
    %470 = vmatpush1.msra.mxu0 0.0
    %471 = vmatprep.subr.mxu0 0.0
    %472 = vmatpush1.msra.mxu0 0.0
    %473 = vmatprep.subr.mxu0 0.0
    %474 = vmatpush1.msra.mxu0 0.0
    %475 = vmatprep.subr.mxu0 0.0
    %476 = vmatpush1.msra.mxu0 0.0
    %477 = vmatprep.subr.mxu0 0.0
    %478 = vmatpush1.msra.mxu0 0.0
    %479 = vmatprep.subr.mxu0 0.0
    %480 = vmatpush1.msra.mxu0 0.0
    %481 = vmatprep.subr.mxu0 0.0
    %482 = vmatpush1.msra.mxu0 0.0
    %483 = vmatprep.subr.mxu0 0.0
    %484 = vmatpush1.msra.mxu0 0.0
    %485 = vmatprep.subr.mxu0 0.0
    %486 = vmatpush1.msra.mxu0 0.0
    %487 = vmatprep.subr.mxu0 0.0
    %488 = vmatpush1.msra.mxu0 0.0
    %489 = vmatprep.subr.mxu0 0.0
    %490 = vmatpush1.msra.mxu0 0.0
    %491 = vmatprep.subr.mxu0 0.0
    %492 = vmatpush1.msra.mxu0 0.0
    %493 = vmatprep.subr.mxu0 0.0
    %494 = vmatpush1.msra.mxu0 0.0
    %495 = vmatprep.mubr.f32.mxu0 0.0
    %496 = vmatmul.mubr.f32.gmra.mrb[0].mxu0 %v429
    %v497 = vpop.f32.mrb[0].mxu0
    %v498 = vadd.f32 %v109, %v497
    %v499 = vpop.f32.mrb[0].mxu0
    %500 = vdwg.mxu0
    %v501 = vxor.u32 %v498, 2147483648
    %v502 = vmul.f32 %v501, 1.442695
    %v503 = vpow.pop %v502
    %v504 = vadd.f32 %v503, 1.0
    %v505 = vrcp.pop %v504
    %v506 = vmul.f32 1.0, %v505
    %v507 = vtanh.pop %v498
    %v508 = vmul.f32 %v506, %v237
    %510 = vrot.lane.b32.xlu0 %v507, 32
    %v511 = vpop.permute.xlu0 %510
    %v513 = vmul.f32 %v506, %v511
    %515 = vrot.lane.b32.xlu0 %v513, 32
    %v516 = vpop.permute.xlu0 %515
    %v518 = vadd.f32 %v508, %v516
    %v519 = vtanh.pop %v518
    %521 = vrot.lane.b32.xlu0 %v519, 32
    %v522 = vpop.permute.xlu0 %521
    %v524 = vmul.f32 %v506, %v522
    %v525 = vsel %vm423, 1, 0
    %526 = vset.pattern.permute.xlu0 0
    %527 = vperm.xlu0 %526, %v525
    %v528 = vpop.permute.xlu0 %527
    %vm529 = vcmp.eq.s32.totalorder %v528, 1
    %v530 = vsel %vm529, %v524, %v236
    %v531 = vsel %vm529, %v518, %v237
    %533 = vrot.lane.b32.xlu0 %v530, 64
    %v534 = vpop.permute.xlu0 %533
    %536 = vrot.lane.b32.xlu0 %v342, 96
    %v537 = vpop.permute.xlu0 %536
    %v539 = vsel %vm242, %v534, %v537
    %v541 = vsel %vm244, %v539, 0
    %543 = vmatprep.subr.mxu0 0.0
    %544 = vmatpush1.msra.mxu0 %v96
    %545 = vmatprep.subr.mxu0 0.0
    %546 = vmatpush1.msra.mxu0 %v97
    %547 = vmatprep.subr.mxu0 0.0
    %548 = vmatpush1.msra.mxu0 %v98
    %549 = vmatprep.subr.mxu0 0.0
    %550 = vmatpush1.msra.mxu0 %v99
    %551 = vmatprep.subr.mxu0 0.0
    %552 = vmatpush1.msra.mxu0 %v100
    %553 = vmatprep.subr.mxu0 0.0
    %554 = vmatpush1.msra.mxu0 %v101
    %555 = vmatprep.subr.mxu0 0.0
    %556 = vmatpush1.msra.mxu0 %v102
    %557 = vmatprep.subr.mxu0 0.0
    %558 = vmatpush1.msra.mxu0 %v103
    %559 = vmatprep.subr.mxu0 0.0
    %560 = vmatpush1.msra.mxu0 0.0
    %561 = vmatprep.subr.mxu0 0.0
    %562 = vmatpush1.msra.mxu0 0.0
    %563 = vmatprep.subr.mxu0 0.0
    %564 = vmatpush1.msra.mxu0 0.0
    %565 = vmatprep.subr.mxu0 0.0
    %566 = vmatpush1.msra.mxu0 0.0
    %567 = vmatprep.subr.mxu0 0.0
    %568 = vmatpush1.msra.mxu0 0.0
    %569 = vmatprep.subr.mxu0 0.0
    %570 = vmatpush1.msra.mxu0 0.0
    %571 = vmatprep.subr.mxu0 0.0
    %572 = vmatpush1.msra.mxu0 0.0
    %573 = vmatprep.subr.mxu0 0.0
    %574 = vmatpush1.msra.mxu0 0.0
    %575 = vmatprep.subr.mxu0 0.0
    %576 = vmatpush1.msra.mxu0 0.0
    %577 = vmatprep.subr.mxu0 0.0
    %578 = vmatpush1.msra.mxu0 0.0
    %579 = vmatprep.subr.mxu0 0.0
    %580 = vmatpush1.msra.mxu0 0.0
    %581 = vmatprep.subr.mxu0 0.0
    %582 = vmatpush1.msra.mxu0 0.0
    %583 = vmatprep.subr.mxu0 0.0
    %584 = vmatpush1.msra.mxu0 0.0
    %585 = vmatprep.subr.mxu0 0.0
    %586 = vmatpush1.msra.mxu0 0.0
    %587 = vmatprep.subr.mxu0 0.0
    %588 = vmatpush1.msra.mxu0 0.0
    %589 = vmatprep.subr.mxu0 0.0
    %590 = vmatpush1.msra.mxu0 0.0
    %591 = vmatprep.subr.mxu0 0.0
    %592 = vmatpush1.msra.mxu0 0.0
    %593 = vmatprep.subr.mxu0 0.0
    %594 = vmatpush1.msra.mxu0 0.0
    %595 = vmatprep.subr.mxu0 0.0
    %596 = vmatpush1.msra.mxu0 0.0
    %597 = vmatprep.subr.mxu0 0.0
    %598 = vmatpush1.msra.mxu0 0.0
    %599 = vmatprep.subr.mxu0 0.0
    %600 = vmatpush1.msra.mxu0 0.0
    %601 = vmatprep.subr.mxu0 0.0
    %602 = vmatpush1.msra.mxu0 0.0
    %603 = vmatprep.subr.mxu0 0.0
    %604 = vmatpush1.msra.mxu0 0.0
    %605 = vmatprep.subr.mxu0 0.0
    %606 = vmatpush1.msra.mxu0 0.0
    %607 = vmatprep.mubr.f32.mxu0 0.0
    %608 = vmatmul.mubr.f32.gmra.mrb[0].mxu0 %v541
    %v609 = vpop.f32.mrb[0].mxu0
    %v610 = vadd.f32 %v116, %v609
    %v611 = vpop.f32.mrb[0].mxu0
    %612 = vdwg.mxu0
    %v613 = vxor.u32 %v610, 2147483648
    %v614 = vmul.f32 %v613, 1.442695
    %v615 = vpow.pop %v614
    %v616 = vadd.f32 %v615, 1.0
    %v617 = vrcp.pop %v616
    %v618 = vmul.f32 1.0, %v617
    %v619 = vtanh.pop %v610
    %v620 = vmul.f32 %v618, %v343
    %622 = vrot.lane.b32.xlu0 %v619, 32
    %v623 = vpop.permute.xlu0 %622
    %v625 = vmul.f32 %v618, %v623
    %627 = vrot.lane.b32.xlu0 %v625, 32
    %v628 = vpop.permute.xlu0 %627
    %v630 = vadd.f32 %v620, %v628
    %v631 = vtanh.pop %v630
    %633 = vrot.lane.b32.xlu0 %v631, 32
    %v634 = vpop.permute.xlu0 %633
    %v636 = vmul.f32 %v618, %v634
    %v637 = vsel %vm529, %v636, %v342
    %v638 = vsel %vm529, %v630, %v343
    %640 = vrot.lane.b32.xlu0 %v637, 64
    %v641 = vpop.permute.xlu0 %640
    %v642 = vsel %vm242, %v641, 0
    %644 = vmatprep.subr.mxu0 0.0
    %645 = vmatpush1.msra.mxu0 %v118
    %646 = vmatprep.subr.mxu0 0.0
    %647 = vmatpush1.msra.mxu0 %v119
    %648 = vmatprep.subr.mxu0 0.0
    %649 = vmatpush1.msra.mxu0 %v120
    %650 = vmatprep.subr.mxu0 0.0
    %651 = vmatpush1.msra.mxu0 %v121
    %652 = vmatprep.subr.mxu0 0.0
    %653 = vmatpush1.msra.mxu0 0.0
    %654 = vmatprep.subr.mxu0 0.0
    %655 = vmatpush1.msra.mxu0 0.0
    %656 = vmatprep.subr.mxu0 0.0
    %657 = vmatpush1.msra.mxu0 0.0
    %658 = vmatprep.subr.mxu0 0.0
    %659 = vmatpush1.msra.mxu0 0.0
    %660 = vmatprep.subr.mxu0 0.0
    %661 = vmatpush1.msra.mxu0 0.0
    %662 = vmatprep.subr.mxu0 0.0
    %663 = vmatpush1.msra.mxu0 0.0
    %664 = vmatprep.subr.mxu0 0.0
    %665 = vmatpush1.msra.mxu0 0.0
    %666 = vmatprep.subr.mxu0 0.0
    %667 = vmatpush1.msra.mxu0 0.0
    %668 = vmatprep.subr.mxu0 0.0
    %669 = vmatpush1.msra.mxu0 0.0
    %670 = vmatprep.subr.mxu0 0.0
    %671 = vmatpush1.msra.mxu0 0.0
    %672 = vmatprep.subr.mxu0 0.0
    %673 = vmatpush1.msra.mxu0 0.0
    %674 = vmatprep.subr.mxu0 0.0
    %675 = vmatpush1.msra.mxu0 0.0
    %676 = vmatprep.subr.mxu0 0.0
    %677 = vmatpush1.msra.mxu0 0.0
    %678 = vmatprep.subr.mxu0 0.0
    %679 = vmatpush1.msra.mxu0 0.0
    %680 = vmatprep.subr.mxu0 0.0
    %681 = vmatpush1.msra.mxu0 0.0
    %682 = vmatprep.subr.mxu0 0.0
    %683 = vmatpush1.msra.mxu0 0.0
    %684 = vmatprep.subr.mxu0 0.0
    %685 = vmatpush1.msra.mxu0 0.0
    %686 = vmatprep.subr.mxu0 0.0
    %687 = vmatpush1.msra.mxu0 0.0
    %688 = vmatprep.subr.mxu0 0.0
    %689 = vmatpush1.msra.mxu0 0.0
    %690 = vmatprep.subr.mxu0 0.0
    %691 = vmatpush1.msra.mxu0 0.0
    %692 = vmatprep.subr.mxu0 0.0
    %693 = vmatpush1.msra.mxu0 0.0
    %694 = vmatprep.subr.mxu0 0.0
    %695 = vmatpush1.msra.mxu0 0.0
    %696 = vmatprep.subr.mxu0 0.0
    %697 = vmatpush1.msra.mxu0 0.0
    %698 = vmatprep.subr.mxu0 0.0
    %699 = vmatpush1.msra.mxu0 0.0
    %700 = vmatprep.subr.mxu0 0.0
    %701 = vmatpush1.msra.mxu0 0.0
    %702 = vmatprep.subr.mxu0 0.0
    %703 = vmatpush1.msra.mxu0 0.0
    %704 = vmatprep.subr.mxu0 0.0
    %705 = vmatpush1.msra.mxu0 0.0
    %706 = vmatprep.subr.mxu0 0.0
    %707 = vmatpush1.msra.mxu0 0.0
    %708 = vmatprep.mubr.f32.mxu0 0.0
    %709 = vmatmul.mubr.f32.gmra.mrb[0].mxu0 %v642
    %v710 = vpop.f32.mrb[0].mxu0
    %v711 = vadd.f32 %v127, %v710
    %v712 = vpop.f32.mrb[0].mxu0
    %713 = vdwg.mxu0
    %s714 = scalar_lea.vmem [#allocation10], 2
    %715 = vst.msk [vmem:[%s714] sm:$0x3] %vm419, %v711
    %s716 = scalar_lea.vmem [#allocation2], 4
    %v717 = vld [vmem:[%s716] sm:$0x3]
    %vm718 = vcmp.gt.s32.totalorder %v89, 2
    %719 = vrot.lane.b32.xlu0 %v530, 80
    %v720 = vpop.permute.xlu0 %719
    %v722 = vsel %vm131, %v717, %v720
    %v724 = vsel %vm133, %v722, 0
    %726 = vmatprep.subr.mxu0 0.0
    %727 = vmatpush1.msra.mxu0 %v90
    %728 = vmatprep.subr.mxu0 0.0
    %729 = vmatpush1.msra.mxu0 %v91
    %730 = vmatprep.subr.mxu0 0.0
    %731 = vmatpush1.msra.mxu0 %v92
    %732 = vmatprep.subr.mxu0 0.0
    %733 = vmatpush1.msra.mxu0 %v93
    %734 = vmatprep.subr.mxu0 0.0
    %735 = vmatpush1.msra.mxu0 %v94
    %736 = vmatprep.subr.mxu0 0.0
    %737 = vmatpush1.msra.mxu0 %v95
    %738 = vmatprep.subr.mxu0 0.0
    %739 = vmatpush1.msra.mxu0 0.0
    %740 = vmatprep.subr.mxu0 0.0
    %741 = vmatpush1.msra.mxu0 0.0
    %742 = vmatprep.subr.mxu0 0.0
    %743 = vmatpush1.msra.mxu0 0.0
    %744 = vmatprep.subr.mxu0 0.0
    %745 = vmatpush1.msra.mxu0 0.0
    %746 = vmatprep.subr.mxu0 0.0
    %747 = vmatpush1.msra.mxu0 0.0
    %748 = vmatprep.subr.mxu0 0.0
    %749 = vmatpush1.msra.mxu0 0.0
    %750 = vmatprep.subr.mxu0 0.0
    %751 = vmatpush1.msra.mxu0 0.0
    %752 = vmatprep.subr.mxu0 0.0
    %753 = vmatpush1.msra.mxu0 0.0
    %754 = vmatprep.subr.mxu0 0.0
    %755 = vmatpush1.msra.mxu0 0.0
    %756 = vmatprep.subr.mxu0 0.0
    %757 = vmatpush1.msra.mxu0 0.0
    %758 = vmatprep.subr.mxu0 0.0
    %759 = vmatpush1.msra.mxu0 0.0
    %760 = vmatprep.subr.mxu0 0.0
    %761 = vmatpush1.msra.mxu0 0.0
    %762 = vmatprep.subr.mxu0 0.0
    %763 = vmatpush1.msra.mxu0 0.0
    %764 = vmatprep.subr.mxu0 0.0
    %765 = vmatpush1.msra.mxu0 0.0
    %766 = vmatprep.subr.mxu0 0.0
    %767 = vmatpush1.msra.mxu0 0.0
    %768 = vmatprep.subr.mxu0 0.0
    %769 = vmatpush1.msra.mxu0 0.0
    %770 = vmatprep.subr.mxu0 0.0
    %771 = vmatpush1.msra.mxu0 0.0
    %772 = vmatprep.subr.mxu0 0.0
    %773 = vmatpush1.msra.mxu0 0.0
    %774 = vmatprep.subr.mxu0 0.0
    %775 = vmatpush1.msra.mxu0 0.0
    %776 = vmatprep.subr.mxu0 0.0
    %777 = vmatpush1.msra.mxu0 0.0
    %778 = vmatprep.subr.mxu0 0.0
    %779 = vmatpush1.msra.mxu0 0.0
    %780 = vmatprep.subr.mxu0 0.0
    %781 = vmatpush1.msra.mxu0 0.0
    %782 = vmatprep.subr.mxu0 0.0
    %783 = vmatpush1.msra.mxu0 0.0
    %784 = vmatprep.subr.mxu0 0.0
    %785 = vmatpush1.msra.mxu0 0.0
    %786 = vmatprep.subr.mxu0 0.0
    %787 = vmatpush1.msra.mxu0 0.0
    %788 = vmatprep.subr.mxu0 0.0
    %789 = vmatpush1.msra.mxu0 0.0
    %790 = vmatprep.mubr.f32.mxu0 0.0
    %791 = vmatmul.mubr.f32.gmra.mrb[0].mxu0 %v724
    %v792 = vpop.f32.mrb[0].mxu0
    %v793 = vadd.f32 %v109, %v792
    %v794 = vpop.f32.mrb[0].mxu0
    %795 = vdwg.mxu0
    %v796 = vxor.u32 %v793, 2147483648
    %v797 = vmul.f32 %v796, 1.442695
    %v798 = vpow.pop %v797
    %v799 = vadd.f32 %v798, 1.0
    %v800 = vrcp.pop %v799
    %v801 = vmul.f32 1.0, %v800
    %v802 = vtanh.pop %v793
    %v803 = vmul.f32 %v801, %v531
    %805 = vrot.lane.b32.xlu0 %v802, 32
    %v806 = vpop.permute.xlu0 %805
    %v808 = vmul.f32 %v801, %v806
    %810 = vrot.lane.b32.xlu0 %v808, 32
    %v811 = vpop.permute.xlu0 %810
    %v813 = vadd.f32 %v803, %v811
    %v814 = vtanh.pop %v813
    %816 = vrot.lane.b32.xlu0 %v814, 32
    %v817 = vpop.permute.xlu0 %816
    %v819 = vmul.f32 %v801, %v817
    %v820 = vsel %vm718, 1, 0
    %821 = vset.pattern.permute.xlu0 0
    %822 = vperm.xlu0 %821, %v820
    %v823 = vpop.permute.xlu0 %822
    %vm824 = vcmp.eq.s32.totalorder %v823, 1
    %v825 = vsel %vm824, %v819, %v530
    %v826 = vsel %vm824, %v813, %v531
    %828 = vrot.lane.b32.xlu0 %v825, 64
    %v829 = vpop.permute.xlu0 %828
    %831 = vrot.lane.b32.xlu0 %v637, 96
    %v832 = vpop.permute.xlu0 %831
    %v834 = vsel %vm242, %v829, %v832
    %v836 = vsel %vm244, %v834, 0
    %838 = vmatprep.subr.mxu0 0.0
    %839 = vmatpush1.msra.mxu0 %v96
    %840 = vmatprep.subr.mxu0 0.0
    %841 = vmatpush1.msra.mxu0 %v97
    %842 = vmatprep.subr.mxu0 0.0
    %843 = vmatpush1.msra.mxu0 %v98
    %844 = vmatprep.subr.mxu0 0.0
    %845 = vmatpush1.msra.mxu0 %v99
    %846 = vmatprep.subr.mxu0 0.0
    %847 = vmatpush1.msra.mxu0 %v100
    %848 = vmatprep.subr.mxu0 0.0
    %849 = vmatpush1.msra.mxu0 %v101
    %850 = vmatprep.subr.mxu0 0.0
    %851 = vmatpush1.msra.mxu0 %v102
    %852 = vmatprep.subr.mxu0 0.0
    %853 = vmatpush1.msra.mxu0 %v103
    %854 = vmatprep.subr.mxu0 0.0
    %855 = vmatpush1.msra.mxu0 0.0
    %856 = vmatprep.subr.mxu0 0.0
    %857 = vmatpush1.msra.mxu0 0.0
    %858 = vmatprep.subr.mxu0 0.0
    %859 = vmatpush1.msra.mxu0 0.0
    %860 = vmatprep.subr.mxu0 0.0
    %861 = vmatpush1.msra.mxu0 0.0
    %862 = vmatprep.subr.mxu0 0.0
    %863 = vmatpush1.msra.mxu0 0.0
    %864 = vmatprep.subr.mxu0 0.0
    %865 = vmatpush1.msra.mxu0 0.0
    %866 = vmatprep.subr.mxu0 0.0
    %867 = vmatpush1.msra.mxu0 0.0
    %868 = vmatprep.subr.mxu0 0.0
    %869 = vmatpush1.msra.mxu0 0.0
    %870 = vmatprep.subr.mxu0 0.0
    %871 = vmatpush1.msra.mxu0 0.0
    %872 = vmatprep.subr.mxu0 0.0
    %873 = vmatpush1.msra.mxu0 0.0
    %874 = vmatprep.subr.mxu0 0.0
    %875 = vmatpush1.msra.mxu0 0.0
    %876 = vmatprep.subr.mxu0 0.0
    %877 = vmatpush1.msra.mxu0 0.0
    %878 = vmatprep.subr.mxu0 0.0
    %879 = vmatpush1.msra.mxu0 0.0
    %880 = vmatprep.subr.mxu0 0.0
    %881 = vmatpush1.msra.mxu0 0.0
    %882 = vmatprep.subr.mxu0 0.0
    %883 = vmatpush1.msra.mxu0 0.0
    %884 = vmatprep.subr.mxu0 0.0
    %885 = vmatpush1.msra.mxu0 0.0
    %886 = vmatprep.subr.mxu0 0.0
    %887 = vmatpush1.msra.mxu0 0.0
    %888 = vmatprep.subr.mxu0 0.0
    %889 = vmatpush1.msra.mxu0 0.0
    %890 = vmatprep.subr.mxu0 0.0
    %891 = vmatpush1.msra.mxu0 0.0
    %892 = vmatprep.subr.mxu0 0.0
    %893 = vmatpush1.msra.mxu0 0.0
    %894 = vmatprep.subr.mxu0 0.0
    %895 = vmatpush1.msra.mxu0 0.0
    %896 = vmatprep.subr.mxu0 0.0
    %897 = vmatpush1.msra.mxu0 0.0
    %898 = vmatprep.subr.mxu0 0.0
    %899 = vmatpush1.msra.mxu0 0.0
    %900 = vmatprep.subr.mxu0 0.0
    %901 = vmatpush1.msra.mxu0 0.0
    %902 = vmatprep.mubr.f32.mxu0 0.0
    %903 = vmatmul.mubr.f32.gmra.mrb[0].mxu0 %v836
    %v904 = vpop.f32.mrb[0].mxu0
    %v905 = vadd.f32 %v116, %v904
    %v906 = vpop.f32.mrb[0].mxu0
    %907 = vdwg.mxu0
    %v908 = vxor.u32 %v905, 2147483648
    %v909 = vmul.f32 %v908, 1.442695
    %v910 = vpow.pop %v909
    %v911 = vadd.f32 %v910, 1.0
    %v912 = vrcp.pop %v911
    %v913 = vmul.f32 1.0, %v912
    %v914 = vtanh.pop %v905
    %v915 = vmul.f32 %v913, %v638
    %917 = vrot.lane.b32.xlu0 %v914, 32
    %v918 = vpop.permute.xlu0 %917
    %v920 = vmul.f32 %v913, %v918
    %922 = vrot.lane.b32.xlu0 %v920, 32
    %v923 = vpop.permute.xlu0 %922
    %v925 = vadd.f32 %v915, %v923
    %v926 = vtanh.pop %v925
    %928 = vrot.lane.b32.xlu0 %v926, 32
    %v929 = vpop.permute.xlu0 %928
    %v931 = vmul.f32 %v913, %v929
    %v932 = vsel %vm824, %v931, %v637
    %v933 = vsel %vm824, %v925, %v638
    %935 = vrot.lane.b32.xlu0 %v932, 64
    %v936 = vpop.permute.xlu0 %935
    %v937 = vsel %vm242, %v936, 0
    %939 = vmatprep.subr.mxu0 0.0
    %940 = vmatpush1.msra.mxu0 %v118
    %941 = vmatprep.subr.mxu0 0.0
    %942 = vmatpush1.msra.mxu0 %v119
    %943 = vmatprep.subr.mxu0 0.0
    %944 = vmatpush1.msra.mxu0 %v120
    %945 = vmatprep.subr.mxu0 0.0
    %946 = vmatpush1.msra.mxu0 %v121
    %947 = vmatprep.subr.mxu0 0.0
    %948 = vmatpush1.msra.mxu0 0.0
    %949 = vmatprep.subr.mxu0 0.0
    %950 = vmatpush1.msra.mxu0 0.0
    %951 = vmatprep.subr.mxu0 0.0
    %952 = vmatpush1.msra.mxu0 0.0
    %953 = vmatprep.subr.mxu0 0.0
    %954 = vmatpush1.msra.mxu0 0.0
    %955 = vmatprep.subr.mxu0 0.0
    %956 = vmatpush1.msra.mxu0 0.0
    %957 = vmatprep.subr.mxu0 0.0
    %958 = vmatpush1.msra.mxu0 0.0
    %959 = vmatprep.subr.mxu0 0.0
    %960 = vmatpush1.msra.mxu0 0.0
    %961 = vmatprep.subr.mxu0 0.0
    %962 = vmatpush1.msra.mxu0 0.0
    %963 = vmatprep.subr.mxu0 0.0
    %964 = vmatpush1.msra.mxu0 0.0
    %965 = vmatprep.subr.mxu0 0.0
    %966 = vmatpush1.msra.mxu0 0.0
    %967 = vmatprep.subr.mxu0 0.0
    %968 = vmatpush1.msra.mxu0 0.0
    %969 = vmatprep.subr.mxu0 0.0
    %970 = vmatpush1.msra.mxu0 0.0
    %971 = vmatprep.subr.mxu0 0.0
    %972 = vmatpush1.msra.mxu0 0.0
    %973 = vmatprep.subr.mxu0 0.0
    %974 = vmatpush1.msra.mxu0 0.0
    %975 = vmatprep.subr.mxu0 0.0
    %976 = vmatpush1.msra.mxu0 0.0
    %977 = vmatprep.subr.mxu0 0.0
    %978 = vmatpush1.msra.mxu0 0.0
    %979 = vmatprep.subr.mxu0 0.0
    %980 = vmatpush1.msra.mxu0 0.0
    %981 = vmatprep.subr.mxu0 0.0
    %982 = vmatpush1.msra.mxu0 0.0
    %983 = vmatprep.subr.mxu0 0.0
    %984 = vmatpush1.msra.mxu0 0.0
    %985 = vmatprep.subr.mxu0 0.0
    %986 = vmatpush1.msra.mxu0 0.0
    %987 = vmatprep.subr.mxu0 0.0
    %988 = vmatpush1.msra.mxu0 0.0
    %989 = vmatprep.subr.mxu0 0.0
    %990 = vmatpush1.msra.mxu0 0.0
    %991 = vmatprep.subr.mxu0 0.0
    %992 = vmatpush1.msra.mxu0 0.0
    %993 = vmatprep.subr.mxu0 0.0
    %994 = vmatpush1.msra.mxu0 0.0
    %995 = vmatprep.subr.mxu0 0.0
    %996 = vmatpush1.msra.mxu0 0.0
    %997 = vmatprep.subr.mxu0 0.0
    %998 = vmatpush1.msra.mxu0 0.0
    %999 = vmatprep.subr.mxu0 0.0
    %1000 = vmatpush1.msra.mxu0 0.0
    %1001 = vmatprep.subr.mxu0 0.0
    %1002 = vmatpush1.msra.mxu0 0.0
    %1003 = vmatprep.mubr.f32.mxu0 0.0
    %1004 = vmatmul.mubr.f32.gmra.mrb[0].mxu0 %v937
    %v1005 = vpop.f32.mrb[0].mxu0
    %v1006 = vadd.f32 %v127, %v1005
    %v1007 = vpop.f32.mrb[0].mxu0
    %1008 = vdwg.mxu0
    %s1009 = scalar_lea.vmem [#allocation10], 4
    %1010 = vst.msk [vmem:[%s1009] sm:$0x3] %vm419, %v1006
    %s1011 = scalar_lea.vmem [#allocation2], 6
    %v1012 = vld [vmem:[%s1011] sm:$0x3]
    %vm1013 = vcmp.gt.s32.totalorder %v89, 3
    %1014 = vrot.lane.b32.xlu0 %v825, 80
    %v1015 = vpop.permute.xlu0 %1014
    %v1017 = vsel %vm131, %v1012, %v1015
    %v1019 = vsel %vm133, %v1017, 0
    %1021 = vmatprep.subr.mxu0 0.0
    %1022 = vmatpush1.msra.mxu0 %v90
    %1023 = vmatprep.subr.mxu0 0.0
    %1024 = vmatpush1.msra.mxu0 %v91
    %1025 = vmatprep.subr.mxu0 0.0
    %1026 = vmatpush1.msra.mxu0 %v92
    %1027 = vmatprep.subr.mxu0 0.0
    %1028 = vmatpush1.msra.mxu0 %v93
    %1029 = vmatprep.subr.mxu0 0.0
    %1030 = vmatpush1.msra.mxu0 %v94
    %1031 = vmatprep.subr.mxu0 0.0
    %1032 = vmatpush1.msra.mxu0 %v95
    %1033 = vmatprep.subr.mxu0 0.0
    %1034 = vmatpush1.msra.mxu0 0.0
    %1035 = vmatprep.subr.mxu0 0.0
    %1036 = vmatpush1.msra.mxu0 0.0
    %1037 = vmatprep.subr.mxu0 0.0
    %1038 = vmatpush1.msra.mxu0 0.0
    %1039 = vmatprep.subr.mxu0 0.0
    %1040 = vmatpush1.msra.mxu0 0.0
    %1041 = vmatprep.subr.mxu0 0.0
    %1042 = vmatpush1.msra.mxu0 0.0
    %1043 = vmatprep.subr.mxu0 0.0
    %1044 = vmatpush1.msra.mxu0 0.0
    %1045 = vmatprep.subr.mxu0 0.0
    %1046 = vmatpush1.msra.mxu0 0.0
    %1047 = vmatprep.subr.mxu0 0.0
    %1048 = vmatpush1.msra.mxu0 0.0
    %1049 = vmatprep.subr.mxu0 0.0
    %1050 = vmatpush1.msra.mxu0 0.0
    %1051 = vmatprep.subr.mxu0 0.0
    %1052 = vmatpush1.msra.mxu0 0.0
    %1053 = vmatprep.subr.mxu0 0.0
    %1054 = vmatpush1.msra.mxu0 0.0
    %1055 = vmatprep.subr.mxu0 0.0
    %1056 = vmatpush1.msra.mxu0 0.0
    %1057 = vmatprep.subr.mxu0 0.0
    %1058 = vmatpush1.msra.mxu0 0.0
    %1059 = vmatprep.subr.mxu0 0.0
    %1060 = vmatpush1.msra.mxu0 0.0
    %1061 = vmatprep.subr.mxu0 0.0
    %1062 = vmatpush1.msra.mxu0 0.0
    %1063 = vmatprep.subr.mxu0 0.0
    %1064 = vmatpush1.msra.mxu0 0.0
    %1065 = vmatprep.subr.mxu0 0.0
    %1066 = vmatpush1.msra.mxu0 0.0
    %1067 = vmatprep.subr.mxu0 0.0
    %1068 = vmatpush1.msra.mxu0 0.0
    %1069 = vmatprep.subr.mxu0 0.0
    %1070 = vmatpush1.msra.mxu0 0.0
    %1071 = vmatprep.subr.mxu0 0.0
    %1072 = vmatpush1.msra.mxu0 0.0
    %1073 = vmatprep.subr.mxu0 0.0
    %1074 = vmatpush1.msra.mxu0 0.0
    %1075 = vmatprep.subr.mxu0 0.0
    %1076 = vmatpush1.msra.mxu0 0.0
    %1077 = vmatprep.subr.mxu0 0.0
    %1078 = vmatpush1.msra.mxu0 0.0
    %1079 = vmatprep.subr.mxu0 0.0
    %1080 = vmatpush1.msra.mxu0 0.0
    %1081 = vmatprep.subr.mxu0 0.0
    %1082 = vmatpush1.msra.mxu0 0.0
    %1083 = vmatprep.subr.mxu0 0.0
    %1084 = vmatpush1.msra.mxu0 0.0
    %1085 = vmatprep.mubr.f32.mxu0 0.0
    %1086 = vmatmul.mubr.f32.gmra.mrb[0].mxu0 %v1019
    %v1087 = vpop.f32.mrb[0].mxu0
    %v1088 = vadd.f32 %v109, %v1087
    %v1089 = vpop.f32.mrb[0].mxu0
    %1090 = vdwg.mxu0
    %v1091 = vxor.u32 %v1088, 2147483648
    %v1092 = vmul.f32 %v1091, 1.442695
    %v1093 = vpow.pop %v1092
    %v1094 = vadd.f32 %v1093, 1.0
    %v1095 = vrcp.pop %v1094
    %v1096 = vmul.f32 1.0, %v1095
    %v1097 = vtanh.pop %v1088
    %v1098 = vmul.f32 %v1096, %v826
    %1100 = vrot.lane.b32.xlu0 %v1097, 32
    %v1101 = vpop.permute.xlu0 %1100
    %v1103 = vmul.f32 %v1096, %v1101
    %1105 = vrot.lane.b32.xlu0 %v1103, 32
    %v1106 = vpop.permute.xlu0 %1105
    %v1108 = vadd.f32 %v1098, %v1106
    %v1109 = vtanh.pop %v1108
    %1111 = vrot.lane.b32.xlu0 %v1109, 32
    %v1112 = vpop.permute.xlu0 %1111
    %v1114 = vmul.f32 %v1096, %v1112
    %v1115 = vsel %vm1013, 1, 0
    %1116 = vset.pattern.permute.xlu0 0
    %1117 = vperm.xlu0 %1116, %v1115
    %v1118 = vpop.permute.xlu0 %1117
    %vm1119 = vcmp.eq.s32.totalorder %v1118, 1
    %v1120 = vsel %vm1119, %v1114, %v825
    %v1121 = vsel %vm1119, %v1108, %v826
    %1123 = vrot.lane.b32.xlu0 %v1120, 64
    %v1124 = vpop.permute.xlu0 %1123
    %1126 = vrot.lane.b32.xlu0 %v932, 96
    %v1127 = vpop.permute.xlu0 %1126
    %v1129 = vsel %vm242, %v1124, %v1127
    %v1131 = vsel %vm244, %v1129, 0
    %1133 = vmatprep.subr.mxu0 0.0
    %1134 = vmatpush1.msra.mxu0 %v96
    %1135 = vmatprep.subr.mxu0 0.0
    %1136 = vmatpush1.msra.mxu0 %v97
    %1137 = vmatprep.subr.mxu0 0.0
    %1138 = vmatpush1.msra.mxu0 %v98
    %1139 = vmatprep.subr.mxu0 0.0
    %1140 = vmatpush1.msra.mxu0 %v99
    %1141 = vmatprep.subr.mxu0 0.0
    %1142 = vmatpush1.msra.mxu0 %v100
    %1143 = vmatprep.subr.mxu0 0.0
    %1144 = vmatpush1.msra.mxu0 %v101
    %1145 = vmatprep.subr.mxu0 0.0
    %1146 = vmatpush1.msra.mxu0 %v102
    %1147 = vmatprep.subr.mxu0 0.0
    %1148 = vmatpush1.msra.mxu0 %v103
    %1149 = vmatprep.subr.mxu0 0.0
    %1150 = vmatpush1.msra.mxu0 0.0
    %1151 = vmatprep.subr.mxu0 0.0
    %1152 = vmatpush1.msra.mxu0 0.0
    %1153 = vmatprep.subr.mxu0 0.0
    %1154 = vmatpush1.msra.mxu0 0.0
    %1155 = vmatprep.subr.mxu0 0.0
    %1156 = vmatpush1.msra.mxu0 0.0
    %1157 = vmatprep.subr.mxu0 0.0
    %1158 = vmatpush1.msra.mxu0 0.0
    %1159 = vmatprep.subr.mxu0 0.0
    %1160 = vmatpush1.msra.mxu0 0.0
    %1161 = vmatprep.subr.mxu0 0.0
    %1162 = vmatpush1.msra.mxu0 0.0
    %1163 = vmatprep.subr.mxu0 0.0
    %1164 = vmatpush1.msra.mxu0 0.0
    %1165 = vmatprep.subr.mxu0 0.0
    %1166 = vmatpush1.msra.mxu0 0.0
    %1167 = vmatprep.subr.mxu0 0.0
    %1168 = vmatpush1.msra.mxu0 0.0
    %1169 = vmatprep.subr.mxu0 0.0
    %1170 = vmatpush1.msra.mxu0 0.0
    %1171 = vmatprep.subr.mxu0 0.0
    %1172 = vmatpush1.msra.mxu0 0.0
    %1173 = vmatprep.subr.mxu0 0.0
    %1174 = vmatpush1.msra.mxu0 0.0
    %1175 = vmatprep.subr.mxu0 0.0
    %1176 = vmatpush1.msra.mxu0 0.0
    %1177 = vmatprep.subr.mxu0 0.0
    %1178 = vmatpush1.msra.mxu0 0.0
    %1179 = vmatprep.subr.mxu0 0.0
    %1180 = vmatpush1.msra.mxu0 0.0
    %1181 = vmatprep.subr.mxu0 0.0
    %1182 = vmatpush1.msra.mxu0 0.0
    %1183 = vmatprep.subr.mxu0 0.0
    %1184 = vmatpush1.msra.mxu0 0.0
    %1185 = vmatprep.subr.mxu0 0.0
    %1186 = vmatpush1.msra.mxu0 0.0
    %1187 = vmatprep.subr.mxu0 0.0
    %1188 = vmatpush1.msra.mxu0 0.0
    %1189 = vmatprep.subr.mxu0 0.0
    %1190 = vmatpush1.msra.mxu0 0.0
    %1191 = vmatprep.subr.mxu0 0.0
    %1192 = vmatpush1.msra.mxu0 0.0
    %1193 = vmatprep.subr.mxu0 0.0
    %1194 = vmatpush1.msra.mxu0 0.0
    %1195 = vmatprep.subr.mxu0 0.0
    %1196 = vmatpush1.msra.mxu0 0.0
    %1197 = vmatprep.mubr.f32.mxu0 0.0
    %1198 = vmatmul.mubr.f32.gmra.mrb[0].mxu0 %v1131
    %v1199 = vpop.f32.mrb[0].mxu0
    %v1200 = vadd.f32 %v116, %v1199
    %v1201 = vpop.f32.mrb[0].mxu0
    %1202 = vdwg.mxu0
    %v1203 = vxor.u32 %v1200, 2147483648
    %v1204 = vmul.f32 %v1203, 1.442695
    %v1205 = vpow.pop %v1204
    %v1206 = vadd.f32 %v1205, 1.0
    %v1207 = vrcp.pop %v1206
    %v1208 = vmul.f32 1.0, %v1207
    %v1209 = vtanh.pop %v1200
    %v1210 = vmul.f32 %v1208, %v933
    %1212 = vrot.lane.b32.xlu0 %v1209, 32
    %v1213 = vpop.permute.xlu0 %1212
    %v1215 = vmul.f32 %v1208, %v1213
    %1217 = vrot.lane.b32.xlu0 %v1215, 32
    %v1218 = vpop.permute.xlu0 %1217
    %v1220 = vadd.f32 %v1210, %v1218
    %v1221 = vtanh.pop %v1220
    %1223 = vrot.lane.b32.xlu0 %v1221, 32
    %v1224 = vpop.permute.xlu0 %1223
    %v1226 = vmul.f32 %v1208, %v1224
    %v1227 = vsel %vm1119, %v1226, %v932
    %v1228 = vsel %vm1119, %v1220, %v933
    %1230 = vrot.lane.b32.xlu0 %v1227, 64
    %v1231 = vpop.permute.xlu0 %1230
    %v1232 = vsel %vm242, %v1231, 0
    %1234 = vmatprep.subr.mxu0 0.0
    %1235 = vmatpush1.msra.mxu0 %v118
    %1236 = vmatprep.subr.mxu0 0.0
    %1237 = vmatpush1.msra.mxu0 %v119
    %1238 = vmatprep.subr.mxu0 0.0
    %1239 = vmatpush1.msra.mxu0 %v120
    %1240 = vmatprep.subr.mxu0 0.0
    %1241 = vmatpush1.msra.mxu0 %v121
    %1242 = vmatprep.subr.mxu0 0.0
    %1243 = vmatpush1.msra.mxu0 0.0
    %1244 = vmatprep.subr.mxu0 0.0
    %1245 = vmatpush1.msra.mxu0 0.0
    %1246 = vmatprep.subr.mxu0 0.0
    %1247 = vmatpush1.msra.mxu0 0.0
    %1248 = vmatprep.subr.mxu0 0.0
    %1249 = vmatpush1.msra.mxu0 0.0
    %1250 = vmatprep.subr.mxu0 0.0
    %1251 = vmatpush1.msra.mxu0 0.0
    %1252 = vmatprep.subr.mxu0 0.0
    %1253 = vmatpush1.msra.mxu0 0.0
    %1254 = vmatprep.subr.mxu0 0.0
    %1255 = vmatpush1.msra.mxu0 0.0
    %1256 = vmatprep.subr.mxu0 0.0
    %1257 = vmatpush1.msra.mxu0 0.0
    %1258 = vmatprep.subr.mxu0 0.0
    %1259 = vmatpush1.msra.mxu0 0.0
    %1260 = vmatprep.subr.mxu0 0.0
    %1261 = vmatpush1.msra.mxu0 0.0
    %1262 = vmatprep.subr.mxu0 0.0
    %1263 = vmatpush1.msra.mxu0 0.0
    %1264 = vmatprep.subr.mxu0 0.0
    %1265 = vmatpush1.msra.mxu0 0.0
    %1266 = vmatprep.subr.mxu0 0.0
    %1267 = vmatpush1.msra.mxu0 0.0
    %1268 = vmatprep.subr.mxu0 0.0
    %1269 = vmatpush1.msra.mxu0 0.0
    %1270 = vmatprep.subr.mxu0 0.0
    %1271 = vmatpush1.msra.mxu0 0.0
    %1272 = vmatprep.subr.mxu0 0.0
    %1273 = vmatpush1.msra.mxu0 0.0
    %1274 = vmatprep.subr.mxu0 0.0
    %1275 = vmatpush1.msra.mxu0 0.0
    %1276 = vmatprep.subr.mxu0 0.0
    %1277 = vmatpush1.msra.mxu0 0.0
    %1278 = vmatprep.subr.mxu0 0.0
    %1279 = vmatpush1.msra.mxu0 0.0
    %1280 = vmatprep.subr.mxu0 0.0
    %1281 = vmatpush1.msra.mxu0 0.0
    %1282 = vmatprep.subr.mxu0 0.0
    %1283 = vmatpush1.msra.mxu0 0.0
    %1284 = vmatprep.subr.mxu0 0.0
    %1285 = vmatpush1.msra.mxu0 0.0
    %1286 = vmatprep.subr.mxu0 0.0
    %1287 = vmatpush1.msra.mxu0 0.0
    %1288 = vmatprep.subr.mxu0 0.0
    %1289 = vmatpush1.msra.mxu0 0.0
    %1290 = vmatprep.subr.mxu0 0.0
    %1291 = vmatpush1.msra.mxu0 0.0
    %1292 = vmatprep.subr.mxu0 0.0
    %1293 = vmatpush1.msra.mxu0 0.0
    %1294 = vmatprep.subr.mxu0 0.0
    %1295 = vmatpush1.msra.mxu0 0.0
    %1296 = vmatprep.subr.mxu0 0.0
    %1297 = vmatpush1.msra.mxu0 0.0
    %1298 = vmatprep.mubr.f32.mxu0 0.0
    %1299 = vmatmul.mubr.f32.gmra.mrb[0].mxu0 %v1232
    %v1300 = vpop.f32.mrb[0].mxu0
    %v1301 = vadd.f32 %v127, %v1300
    %v1302 = vpop.f32.mrb[0].mxu0
    %1303 = vdwg.mxu0
    %s1304 = scalar_lea.vmem [#allocation10], 6
    %1305 = vst.msk [vmem:[%s1304] sm:$0x3] %vm419, %v1301
    %s1306 = scalar_lea.vmem [#allocation2], 8
    %v1307 = vld [vmem:[%s1306] sm:$0x3]
    %vm1308 = vcmp.gt.s32.totalorder %v89, 4
    %1309 = vrot.lane.b32.xlu0 %v1120, 80
    %v1310 = vpop.permute.xlu0 %1309
    %v1312 = vsel %vm131, %v1307, %v1310
    %v1314 = vsel %vm133, %v1312, 0
    %1316 = vmatprep.subr.mxu0 0.0
    %1317 = vmatpush1.msra.mxu0 %v90
    %1318 = vmatprep.subr.mxu0 0.0
    %1319 = vmatpush1.msra.mxu0 %v91
    %1320 = vmatprep.subr.mxu0 0.0
    %1321 = vmatpush1.msra.mxu0 %v92
    %1322 = vmatprep.subr.mxu0 0.0
    %1323 = vmatpush1.msra.mxu0 %v93
    %1324 = vmatprep.subr.mxu0 0.0
    %1325 = vmatpush1.msra.mxu0 %v94
    %1326 = vmatprep.subr.mxu0 0.0
    %1327 = vmatpush1.msra.mxu0 %v95
    %1328 = vmatprep.subr.mxu0 0.0
    %1329 = vmatpush1.msra.mxu0 0.0
    %1330 = vmatprep.subr.mxu0 0.0
    %1331 = vmatpush1.msra.mxu0 0.0
    %1332 = vmatprep.subr.mxu0 0.0
    %1333 = vmatpush1.msra.mxu0 0.0
    %1334 = vmatprep.subr.mxu0 0.0
    %1335 = vmatpush1.msra.mxu0 0.0
    %1336 = vmatprep.subr.mxu0 0.0
    %1337 = vmatpush1.msra.mxu0 0.0
    %1338 = vmatprep.subr.mxu0 0.0
    %1339 = vmatpush1.msra.mxu0 0.0
    %1340 = vmatprep.subr.mxu0 0.0
    %1341 = vmatpush1.msra.mxu0 0.0
    %1342 = vmatprep.subr.mxu0 0.0
    %1343 = vmatpush1.msra.mxu0 0.0
    %1344 = vmatprep.subr.mxu0 0.0
    %1345 = vmatpush1.msra.mxu0 0.0
    %1346 = vmatprep.subr.mxu0 0.0
    %1347 = vmatpush1.msra.mxu0 0.0
    %1348 = vmatprep.subr.mxu0 0.0
    %1349 = vmatpush1.msra.mxu0 0.0
    %1350 = vmatprep.subr.mxu0 0.0
    %1351 = vmatpush1.msra.mxu0 0.0
    %1352 = vmatprep.subr.mxu0 0.0
    %1353 = vmatpush1.msra.mxu0 0.0
    %1354 = vmatprep.subr.mxu0 0.0
    %1355 = vmatpush1.msra.mxu0 0.0
    %1356 = vmatprep.subr.mxu0 0.0
    %1357 = vmatpush1.msra.mxu0 0.0
    %1358 = vmatprep.subr.mxu0 0.0
    %1359 = vmatpush1.msra.mxu0 0.0
    %1360 = vmatprep.subr.mxu0 0.0
    %1361 = vmatpush1.msra.mxu0 0.0
    %1362 = vmatprep.subr.mxu0 0.0
    %1363 = vmatpush1.msra.mxu0 0.0
    %1364 = vmatprep.subr.mxu0 0.0
    %1365 = vmatpush1.msra.mxu0 0.0
    %1366 = vmatprep.subr.mxu0 0.0
    %1367 = vmatpush1.msra.mxu0 0.0
    %1368 = vmatprep.subr.mxu0 0.0
    %1369 = vmatpush1.msra.mxu0 0.0
    %1370 = vmatprep.subr.mxu0 0.0
    %1371 = vmatpush1.msra.mxu0 0.0
    %1372 = vmatprep.subr.mxu0 0.0
    %1373 = vmatpush1.msra.mxu0 0.0
    %1374 = vmatprep.subr.mxu0 0.0
    %1375 = vmatpush1.msra.mxu0 0.0
    %1376 = vmatprep.subr.mxu0 0.0
    %1377 = vmatpush1.msra.mxu0 0.0
    %1378 = vmatprep.subr.mxu0 0.0
    %1379 = vmatpush1.msra.mxu0 0.0
    %1380 = vmatprep.mubr.f32.mxu0 0.0
    %1381 = vmatmul.mubr.f32.gmra.mrb[0].mxu0 %v1314
    %v1382 = vpop.f32.mrb[0].mxu0
    %v1383 = vadd.f32 %v109, %v1382
    %v1384 = vpop.f32.mrb[0].mxu0
    %1385 = vdwg.mxu0
    %v1386 = vxor.u32 %v1383, 2147483648
    %v1387 = vmul.f32 %v1386, 1.442695
    %v1388 = vpow.pop %v1387
    %v1389 = vadd.f32 %v1388, 1.0
    %v1390 = vrcp.pop %v1389
    %v1391 = vmul.f32 1.0, %v1390
    %v1392 = vtanh.pop %v1383
    %v1393 = vmul.f32 %v1391, %v1121
    %1395 = vrot.lane.b32.xlu0 %v1392, 32
    %v1396 = vpop.permute.xlu0 %1395
    %v1398 = vmul.f32 %v1391, %v1396
    %1400 = vrot.lane.b32.xlu0 %v1398, 32
    %v1401 = vpop.permute.xlu0 %1400
    %v1403 = vadd.f32 %v1393, %v1401
    %v1404 = vtanh.pop %v1403
    %1406 = vrot.lane.b32.xlu0 %v1404, 32
    %v1407 = vpop.permute.xlu0 %1406
    %v1409 = vmul.f32 %v1391, %v1407
    %v1410 = vsel %vm1308, 1, 0
    %1411 = vset.pattern.permute.xlu0 0
    %1412 = vperm.xlu0 %1411, %v1410
    %v1413 = vpop.permute.xlu0 %1412
    %vm1414 = vcmp.eq.s32.totalorder %v1413, 1
    %v1415 = vsel %vm1414, %v1409, %v1120
    %v1416 = vsel %vm1414, %v1403, %v1121
    %1418 = vrot.lane.b32.xlu0 %v1415, 64
    %v1419 = vpop.permute.xlu0 %1418
    %1421 = vrot.lane.b32.xlu0 %v1227, 96
    %v1422 = vpop.permute.xlu0 %1421
    %v1424 = vsel %vm242, %v1419, %v1422
    %v1426 = vsel %vm244, %v1424, 0
    %1428 = vmatprep.subr.mxu0 0.0
    %1429 = vmatpush1.msra.mxu0 %v96
    %1430 = vmatprep.subr.mxu0 0.0
    %1431 = vmatpush1.msra.mxu0 %v97
    %1432 = vmatprep.subr.mxu0 0.0
    %1433 = vmatpush1.msra.mxu0 %v98
    %1434 = vmatprep.subr.mxu0 0.0
    %1435 = vmatpush1.msra.mxu0 %v99
    %1436 = vmatprep.subr.mxu0 0.0
    %1437 = vmatpush1.msra.mxu0 %v100
    %1438 = vmatprep.subr.mxu0 0.0
    %1439 = vmatpush1.msra.mxu0 %v101
    %1440 = vmatprep.subr.mxu0 0.0
    %1441 = vmatpush1.msra.mxu0 %v102
    %1442 = vmatprep.subr.mxu0 0.0
    %1443 = vmatpush1.msra.mxu0 %v103
    %1444 = vmatprep.subr.mxu0 0.0
    %1445 = vmatpush1.msra.mxu0 0.0
    %1446 = vmatprep.subr.mxu0 0.0
    %1447 = vmatpush1.msra.mxu0 0.0
    %1448 = vmatprep.subr.mxu0 0.0
    %1449 = vmatpush1.msra.mxu0 0.0
    %1450 = vmatprep.subr.mxu0 0.0
    %1451 = vmatpush1.msra.mxu0 0.0
    %1452 = vmatprep.subr.mxu0 0.0
    %1453 = vmatpush1.msra.mxu0 0.0
    %1454 = vmatprep.subr.mxu0 0.0
    %1455 = vmatpush1.msra.mxu0 0.0
    %1456 = vmatprep.subr.mxu0 0.0
    %1457 = vmatpush1.msra.mxu0 0.0
    %1458 = vmatprep.subr.mxu0 0.0
    %1459 = vmatpush1.msra.mxu0 0.0
    %1460 = vmatprep.subr.mxu0 0.0
    %1461 = vmatpush1.msra.mxu0 0.0
    %1462 = vmatprep.subr.mxu0 0.0
    %1463 = vmatpush1.msra.mxu0 0.0
    %1464 = vmatprep.subr.mxu0 0.0
    %1465 = vmatpush1.msra.mxu0 0.0
    %1466 = vmatprep.subr.mxu0 0.0
    %1467 = vmatpush1.msra.mxu0 0.0
    %1468 = vmatprep.subr.mxu0 0.0
    %1469 = vmatpush1.msra.mxu0 0.0
    %1470 = vmatprep.subr.mxu0 0.0
    %1471 = vmatpush1.msra.mxu0 0.0
    %1472 = vmatprep.subr.mxu0 0.0
    %1473 = vmatpush1.msra.mxu0 0.0
    %1474 = vmatprep.subr.mxu0 0.0
    %1475 = vmatpush1.msra.mxu0 0.0
    %1476 = vmatprep.subr.mxu0 0.0
    %1477 = vmatpush1.msra.mxu0 0.0
    %1478 = vmatprep.subr.mxu0 0.0
    %1479 = vmatpush1.msra.mxu0 0.0
    %1480 = vmatprep.subr.mxu0 0.0
    %1481 = vmatpush1.msra.mxu0 0.0
    %1482 = vmatprep.subr.mxu0 0.0
    %1483 = vmatpush1.msra.mxu0 0.0
    %1484 = vmatprep.subr.mxu0 0.0
    %1485 = vmatpush1.msra.mxu0 0.0
    %1486 = vmatprep.subr.mxu0 0.0
    %1487 = vmatpush1.msra.mxu0 0.0
    %1488 = vmatprep.subr.mxu0 0.0
    %1489 = vmatpush1.msra.mxu0 0.0
    %1490 = vmatprep.subr.mxu0 0.0
    %1491 = vmatpush1.msra.mxu0 0.0
    %1492 = vmatprep.mubr.f32.mxu0 0.0
    %1493 = vmatmul.mubr.f32.gmra.mrb[0].mxu0 %v1426
    %v1494 = vpop.f32.mrb[0].mxu0
    %v1495 = vadd.f32 %v116, %v1494
    %v1496 = vpop.f32.mrb[0].mxu0
    %1497 = vdwg.mxu0
    %v1498 = vxor.u32 %v1495, 2147483648
    %v1499 = vmul.f32 %v1498, 1.442695
    %v1500 = vpow.pop %v1499
    %v1501 = vadd.f32 %v1500, 1.0
    %v1502 = vrcp.pop %v1501
    %v1503 = vmul.f32 1.0, %v1502
    %v1504 = vtanh.pop %v1495
    %v1505 = vmul.f32 %v1503, %v1228
    %1507 = vrot.lane.b32.xlu0 %v1504, 32
    %v1508 = vpop.permute.xlu0 %1507
    %v1510 = vmul.f32 %v1503, %v1508
    %1512 = vrot.lane.b32.xlu0 %v1510, 32
    %v1513 = vpop.permute.xlu0 %1512
    %v1515 = vadd.f32 %v1505, %v1513
    %v1516 = vtanh.pop %v1515
    %1518 = vrot.lane.b32.xlu0 %v1516, 32
    %v1519 = vpop.permute.xlu0 %1518
    %v1521 = vmul.f32 %v1503, %v1519
    %v1522 = vsel %vm1414, %v1521, %v1227
    %v1523 = vsel %vm1414, %v1515, %v1228
    %1525 = vrot.lane.b32.xlu0 %v1522, 64
    %v1526 = vpop.permute.xlu0 %1525
    %v1527 = vsel %vm242, %v1526, 0
    %1529 = vmatprep.subr.mxu0 0.0
    %1530 = vmatpush1.msra.mxu0 %v118
    %1531 = vmatprep.subr.mxu0 0.0
    %1532 = vmatpush1.msra.mxu0 %v119
    %1533 = vmatprep.subr.mxu0 0.0
    %1534 = vmatpush1.msra.mxu0 %v120
    %1535 = vmatprep.subr.mxu0 0.0
    %1536 = vmatpush1.msra.mxu0 %v121
    %1537 = vmatprep.subr.mxu0 0.0
    %1538 = vmatpush1.msra.mxu0 0.0
    %1539 = vmatprep.subr.mxu0 0.0
    %1540 = vmatpush1.msra.mxu0 0.0
    %1541 = vmatprep.subr.mxu0 0.0
    %1542 = vmatpush1.msra.mxu0 0.0
    %1543 = vmatprep.subr.mxu0 0.0
    %1544 = vmatpush1.msra.mxu0 0.0
    %1545 = vmatprep.subr.mxu0 0.0
    %1546 = vmatpush1.msra.mxu0 0.0
    %1547 = vmatprep.subr.mxu0 0.0
    %1548 = vmatpush1.msra.mxu0 0.0
    %1549 = vmatprep.subr.mxu0 0.0
    %1550 = vmatpush1.msra.mxu0 0.0
    %1551 = vmatprep.subr.mxu0 0.0
    %1552 = vmatpush1.msra.mxu0 0.0
    %1553 = vmatprep.subr.mxu0 0.0
    %1554 = vmatpush1.msra.mxu0 0.0
    %1555 = vmatprep.subr.mxu0 0.0
    %1556 = vmatpush1.msra.mxu0 0.0
    %1557 = vmatprep.subr.mxu0 0.0
    %1558 = vmatpush1.msra.mxu0 0.0
    %1559 = vmatprep.subr.mxu0 0.0
    %1560 = vmatpush1.msra.mxu0 0.0
    %1561 = vmatprep.subr.mxu0 0.0
    %1562 = vmatpush1.msra.mxu0 0.0
    %1563 = vmatprep.subr.mxu0 0.0
    %1564 = vmatpush1.msra.mxu0 0.0
    %1565 = vmatprep.subr.mxu0 0.0
    %1566 = vmatpush1.msra.mxu0 0.0
    %1567 = vmatprep.subr.mxu0 0.0
    %1568 = vmatpush1.msra.mxu0 0.0
    %1569 = vmatprep.subr.mxu0 0.0
    %1570 = vmatpush1.msra.mxu0 0.0
    %1571 = vmatprep.subr.mxu0 0.0
    %1572 = vmatpush1.msra.mxu0 0.0
    %1573 = vmatprep.subr.mxu0 0.0
    %1574 = vmatpush1.msra.mxu0 0.0
    %1575 = vmatprep.subr.mxu0 0.0
    %1576 = vmatpush1.msra.mxu0 0.0
    %1577 = vmatprep.subr.mxu0 0.0
    %1578 = vmatpush1.msra.mxu0 0.0
    %1579 = vmatprep.subr.mxu0 0.0
    %1580 = vmatpush1.msra.mxu0 0.0
    %1581 = vmatprep.subr.mxu0 0.0
    %1582 = vmatpush1.msra.mxu0 0.0
    %1583 = vmatprep.subr.mxu0 0.0
    %1584 = vmatpush1.msra.mxu0 0.0
    %1585 = vmatprep.subr.mxu0 0.0
    %1586 = vmatpush1.msra.mxu0 0.0
    %1587 = vmatprep.subr.mxu0 0.0
    %1588 = vmatpush1.msra.mxu0 0.0
    %1589 = vmatprep.subr.mxu0 0.0
    %1590 = vmatpush1.msra.mxu0 0.0
    %1591 = vmatprep.subr.mxu0 0.0
    %1592 = vmatpush1.msra.mxu0 0.0
    %1593 = vmatprep.mubr.f32.mxu0 0.0
    %1594 = vmatmul.mubr.f32.gmra.mrb[0].mxu0 %v1527
    %v1595 = vpop.f32.mrb[0].mxu0
    %v1596 = vadd.f32 %v127, %v1595
    %v1597 = vpop.f32.mrb[0].mxu0
    %1598 = vdwg.mxu0
    %s1599 = scalar_lea.vmem [#allocation10], 8
    %1600 = vst.msk [vmem:[%s1599] sm:$0x3] %vm419, %v1596
    %s1601 = scalar_lea.vmem [#allocation2], 10
    %v1602 = vld [vmem:[%s1601] sm:$0x3]
    %vm1603 = vcmp.gt.s32.totalorder %v89, 5
    %1604 = vrot.lane.b32.xlu0 %v1415, 80
    %v1605 = vpop.permute.xlu0 %1604
    %v1607 = vsel %vm131, %v1602, %v1605
    %v1609 = vsel %vm133, %v1607, 0
    %1611 = vmatprep.subr.mxu0 0.0
    %1612 = vmatpush1.msra.mxu0 %v90
    %1613 = vmatprep.subr.mxu0 0.0
    %1614 = vmatpush1.msra.mxu0 %v91
    %1615 = vmatprep.subr.mxu0 0.0
    %1616 = vmatpush1.msra.mxu0 %v92
    %1617 = vmatprep.subr.mxu0 0.0
    %1618 = vmatpush1.msra.mxu0 %v93
    %1619 = vmatprep.subr.mxu0 0.0
    %1620 = vmatpush1.msra.mxu0 %v94
    %1621 = vmatprep.subr.mxu0 0.0
    %1622 = vmatpush1.msra.mxu0 %v95
    %1623 = vmatprep.subr.mxu0 0.0
    %1624 = vmatpush1.msra.mxu0 0.0
    %1625 = vmatprep.subr.mxu0 0.0
    %1626 = vmatpush1.msra.mxu0 0.0
    %1627 = vmatprep.subr.mxu0 0.0
    %1628 = vmatpush1.msra.mxu0 0.0
    %1629 = vmatprep.subr.mxu0 0.0
    %1630 = vmatpush1.msra.mxu0 0.0
    %1631 = vmatprep.subr.mxu0 0.0
    %1632 = vmatpush1.msra.mxu0 0.0
    %1633 = vmatprep.subr.mxu0 0.0
    %1634 = vmatpush1.msra.mxu0 0.0
    %1635 = vmatprep.subr.mxu0 0.0
    %1636 = vmatpush1.msra.mxu0 0.0
    %1637 = vmatprep.subr.mxu0 0.0
    %1638 = vmatpush1.msra.mxu0 0.0
    %1639 = vmatprep.subr.mxu0 0.0
    %1640 = vmatpush1.msra.mxu0 0.0
    %1641 = vmatprep.subr.mxu0 0.0
    %1642 = vmatpush1.msra.mxu0 0.0
    %1643 = vmatprep.subr.mxu0 0.0
    %1644 = vmatpush1.msra.mxu0 0.0
    %1645 = vmatprep.subr.mxu0 0.0
    %1646 = vmatpush1.msra.mxu0 0.0
    %1647 = vmatprep.subr.mxu0 0.0
    %1648 = vmatpush1.msra.mxu0 0.0
    %1649 = vmatprep.subr.mxu0 0.0
    %1650 = vmatpush1.msra.mxu0 0.0
    %1651 = vmatprep.subr.mxu0 0.0
    %1652 = vmatpush1.msra.mxu0 0.0
    %1653 = vmatprep.subr.mxu0 0.0
    %1654 = vmatpush1.msra.mxu0 0.0
    %1655 = vmatprep.subr.mxu0 0.0
    %1656 = vmatpush1.msra.mxu0 0.0
    %1657 = vmatprep.subr.mxu0 0.0
    %1658 = vmatpush1.msra.mxu0 0.0
    %1659 = vmatprep.subr.mxu0 0.0
    %1660 = vmatpush1.msra.mxu0 0.0
    %1661 = vmatprep.subr.mxu0 0.0
    %1662 = vmatpush1.msra.mxu0 0.0
    %1663 = vmatprep.subr.mxu0 0.0
    %1664 = vmatpush1.msra.mxu0 0.0
    %1665 = vmatprep.subr.mxu0 0.0
    %1666 = vmatpush1.msra.mxu0 0.0
    %1667 = vmatprep.subr.mxu0 0.0
    %1668 = vmatpush1.msra.mxu0 0.0
    %1669 = vmatprep.subr.mxu0 0.0
    %1670 = vmatpush1.msra.mxu0 0.0
    %1671 = vmatprep.subr.mxu0 0.0
    %1672 = vmatpush1.msra.mxu0 0.0
    %1673 = vmatprep.subr.mxu0 0.0
    %1674 = vmatpush1.msra.mxu0 0.0
    %1675 = vmatprep.mubr.f32.mxu0 0.0
    %1676 = vmatmul.mubr.f32.gmra.mrb[0].mxu0 %v1609
    %v1677 = vpop.f32.mrb[0].mxu0
    %v1678 = vadd.f32 %v109, %v1677
    %v1679 = vpop.f32.mrb[0].mxu0
    %1680 = vdwg.mxu0
    %v1681 = vxor.u32 %v1678, 2147483648
    %v1682 = vmul.f32 %v1681, 1.442695
    %v1683 = vpow.pop %v1682
    %v1684 = vadd.f32 %v1683, 1.0
    %v1685 = vrcp.pop %v1684
    %v1686 = vmul.f32 1.0, %v1685
    %v1687 = vtanh.pop %v1678
    %v1688 = vmul.f32 %v1686, %v1416
    %1690 = vrot.lane.b32.xlu0 %v1687, 32
    %v1691 = vpop.permute.xlu0 %1690
    %v1693 = vmul.f32 %v1686, %v1691
    %1695 = vrot.lane.b32.xlu0 %v1693, 32
    %v1696 = vpop.permute.xlu0 %1695
    %v1698 = vadd.f32 %v1688, %v1696
    %v1699 = vtanh.pop %v1698
    %1701 = vrot.lane.b32.xlu0 %v1699, 32
    %v1702 = vpop.permute.xlu0 %1701
    %v1704 = vmul.f32 %v1686, %v1702
    %v1705 = vsel %vm1603, 1, 0
    %1706 = vset.pattern.permute.xlu0 0
    %1707 = vperm.xlu0 %1706, %v1705
    %v1708 = vpop.permute.xlu0 %1707
    %vm1709 = vcmp.eq.s32.totalorder %v1708, 1
    %v1710 = vsel %vm1709, %v1704, %v1415
    %v1711 = vsel %vm1709, %v1698, %v1416
    %1713 = vrot.lane.b32.xlu0 %v1710, 64
    %v1714 = vpop.permute.xlu0 %1713
    %1716 = vrot.lane.b32.xlu0 %v1522, 96
    %v1717 = vpop.permute.xlu0 %1716
    %v1719 = vsel %vm242, %v1714, %v1717
    %v1721 = vsel %vm244, %v1719, 0
    %1723 = vmatprep.subr.mxu0 0.0
    %1724 = vmatpush1.msra.mxu0 %v96
    %1725 = vmatprep.subr.mxu0 0.0
    %1726 = vmatpush1.msra.mxu0 %v97
    %1727 = vmatprep.subr.mxu0 0.0
    %1728 = vmatpush1.msra.mxu0 %v98
    %1729 = vmatprep.subr.mxu0 0.0
    %1730 = vmatpush1.msra.mxu0 %v99
    %1731 = vmatprep.subr.mxu0 0.0
    %1732 = vmatpush1.msra.mxu0 %v100
    %1733 = vmatprep.subr.mxu0 0.0
    %1734 = vmatpush1.msra.mxu0 %v101
    %1735 = vmatprep.subr.mxu0 0.0
    %1736 = vmatpush1.msra.mxu0 %v102
    %1737 = vmatprep.subr.mxu0 0.0
    %1738 = vmatpush1.msra.mxu0 %v103
    %1739 = vmatprep.subr.mxu0 0.0
    %1740 = vmatpush1.msra.mxu0 0.0
    %1741 = vmatprep.subr.mxu0 0.0
    %1742 = vmatpush1.msra.mxu0 0.0
    %1743 = vmatprep.subr.mxu0 0.0
    %1744 = vmatpush1.msra.mxu0 0.0
    %1745 = vmatprep.subr.mxu0 0.0
    %1746 = vmatpush1.msra.mxu0 0.0
    %1747 = vmatprep.subr.mxu0 0.0
    %1748 = vmatpush1.msra.mxu0 0.0
    %1749 = vmatprep.subr.mxu0 0.0
    %1750 = vmatpush1.msra.mxu0 0.0
    %1751 = vmatprep.subr.mxu0 0.0
    %1752 = vmatpush1.msra.mxu0 0.0
    %1753 = vmatprep.subr.mxu0 0.0
    %1754 = vmatpush1.msra.mxu0 0.0
    %1755 = vmatprep.subr.mxu0 0.0
    %1756 = vmatpush1.msra.mxu0 0.0
    %1757 = vmatprep.subr.mxu0 0.0
    %1758 = vmatpush1.msra.mxu0 0.0
    %1759 = vmatprep.subr.mxu0 0.0
    %1760 = vmatpush1.msra.mxu0 0.0
    %1761 = vmatprep.subr.mxu0 0.0
    %1762 = vmatpush1.msra.mxu0 0.0
    %1763 = vmatprep.subr.mxu0 0.0
    %1764 = vmatpush1.msra.mxu0 0.0
    %1765 = vmatprep.subr.mxu0 0.0
    %1766 = vmatpush1.msra.mxu0 0.0
    %1767 = vmatprep.subr.mxu0 0.0
    %1768 = vmatpush1.msra.mxu0 0.0
    %1769 = vmatprep.subr.mxu0 0.0
    %1770 = vmatpush1.msra.mxu0 0.0
    %1771 = vmatprep.subr.mxu0 0.0
    %1772 = vmatpush1.msra.mxu0 0.0
    %1773 = vmatprep.subr.mxu0 0.0
    %1774 = vmatpush1.msra.mxu0 0.0
    %1775 = vmatprep.subr.mxu0 0.0
    %1776 = vmatpush1.msra.mxu0 0.0
    %1777 = vmatprep.subr.mxu0 0.0
    %1778 = vmatpush1.msra.mxu0 0.0
    %1779 = vmatprep.subr.mxu0 0.0
    %1780 = vmatpush1.msra.mxu0 0.0
    %1781 = vmatprep.subr.mxu0 0.0
    %1782 = vmatpush1.msra.mxu0 0.0
    %1783 = vmatprep.subr.mxu0 0.0
    %1784 = vmatpush1.msra.mxu0 0.0
    %1785 = vmatprep.subr.mxu0 0.0
    %1786 = vmatpush1.msra.mxu0 0.0
    %1787 = vmatprep.mubr.f32.mxu0 0.0
    %1788 = vmatmul.mubr.f32.gmra.mrb[0].mxu0 %v1721
    %v1789 = vpop.f32.mrb[0].mxu0
    %v1790 = vadd.f32 %v116, %v1789
    %v1791 = vpop.f32.mrb[0].mxu0
    %1792 = vdwg.mxu0
    %v1793 = vxor.u32 %v1790, 2147483648
    %v1794 = vmul.f32 %v1793, 1.442695
    %v1795 = vpow.pop %v1794
    %v1796 = vadd.f32 %v1795, 1.0
    %v1797 = vrcp.pop %v1796
    %v1798 = vmul.f32 1.0, %v1797
    %v1799 = vtanh.pop %v1790
    %v1800 = vmul.f32 %v1798, %v1523
    %1802 = vrot.lane.b32.xlu0 %v1799, 32
    %v1803 = vpop.permute.xlu0 %1802
    %v1805 = vmul.f32 %v1798, %v1803
    %1807 = vrot.lane.b32.xlu0 %v1805, 32
    %v1808 = vpop.permute.xlu0 %1807
    %v1810 = vadd.f32 %v1800, %v1808
    %v1811 = vtanh.pop %v1810
    %1813 = vrot.lane.b32.xlu0 %v1811, 32
    %v1814 = vpop.permute.xlu0 %1813
    %v1816 = vmul.f32 %v1798, %v1814
    %v1817 = vsel %vm1709, %v1816, %v1522
    %v1818 = vsel %vm1709, %v1810, %v1523
    %1820 = vrot.lane.b32.xlu0 %v1817, 64
    %v1821 = vpop.permute.xlu0 %1820
    %v1822 = vsel %vm242, %v1821, 0
    %1824 = vmatprep.subr.mxu0 0.0
    %1825 = vmatpush1.msra.mxu0 %v118
    %1826 = vmatprep.subr.mxu0 0.0
    %1827 = vmatpush1.msra.mxu0 %v119
    %1828 = vmatprep.subr.mxu0 0.0
    %1829 = vmatpush1.msra.mxu0 %v120
    %1830 = vmatprep.subr.mxu0 0.0
    %1831 = vmatpush1.msra.mxu0 %v121
    %1832 = vmatprep.subr.mxu0 0.0
    %1833 = vmatpush1.msra.mxu0 0.0
    %1834 = vmatprep.subr.mxu0 0.0
    %1835 = vmatpush1.msra.mxu0 0.0
    %1836 = vmatprep.subr.mxu0 0.0
    %1837 = vmatpush1.msra.mxu0 0.0
    %1838 = vmatprep.subr.mxu0 0.0
    %1839 = vmatpush1.msra.mxu0 0.0
    %1840 = vmatprep.subr.mxu0 0.0
    %1841 = vmatpush1.msra.mxu0 0.0
    %1842 = vmatprep.subr.mxu0 0.0
    %1843 = vmatpush1.msra.mxu0 0.0
    %1844 = vmatprep.subr.mxu0 0.0
    %1845 = vmatpush1.msra.mxu0 0.0
    %1846 = vmatprep.subr.mxu0 0.0
    %1847 = vmatpush1.msra.mxu0 0.0
    %1848 = vmatprep.subr.mxu0 0.0
    %1849 = vmatpush1.msra.mxu0 0.0
    %1850 = vmatprep.subr.mxu0 0.0
    %1851 = vmatpush1.msra.mxu0 0.0
    %1852 = vmatprep.subr.mxu0 0.0
    %1853 = vmatpush1.msra.mxu0 0.0
    %1854 = vmatprep.subr.mxu0 0.0
    %1855 = vmatpush1.msra.mxu0 0.0
    %1856 = vmatprep.subr.mxu0 0.0
    %1857 = vmatpush1.msra.mxu0 0.0
    %1858 = vmatprep.subr.mxu0 0.0
    %1859 = vmatpush1.msra.mxu0 0.0
    %1860 = vmatprep.subr.mxu0 0.0
    %1861 = vmatpush1.msra.mxu0 0.0
    %1862 = vmatprep.subr.mxu0 0.0
    %1863 = vmatpush1.msra.mxu0 0.0
    %1864 = vmatprep.subr.mxu0 0.0
    %1865 = vmatpush1.msra.mxu0 0.0
    %1866 = vmatprep.subr.mxu0 0.0
    %1867 = vmatpush1.msra.mxu0 0.0
    %1868 = vmatprep.subr.mxu0 0.0
    %1869 = vmatpush1.msra.mxu0 0.0
    %1870 = vmatprep.subr.mxu0 0.0
    %1871 = vmatpush1.msra.mxu0 0.0
    %1872 = vmatprep.subr.mxu0 0.0
    %1873 = vmatpush1.msra.mxu0 0.0
    %1874 = vmatprep.subr.mxu0 0.0
    %1875 = vmatpush1.msra.mxu0 0.0
    %1876 = vmatprep.subr.mxu0 0.0
    %1877 = vmatpush1.msra.mxu0 0.0
    %1878 = vmatprep.subr.mxu0 0.0
    %1879 = vmatpush1.msra.mxu0 0.0
    %1880 = vmatprep.subr.mxu0 0.0
    %1881 = vmatpush1.msra.mxu0 0.0
    %1882 = vmatprep.subr.mxu0 0.0
    %1883 = vmatpush1.msra.mxu0 0.0
    %1884 = vmatprep.subr.mxu0 0.0
    %1885 = vmatpush1.msra.mxu0 0.0
    %1886 = vmatprep.subr.mxu0 0.0
    %1887 = vmatpush1.msra.mxu0 0.0
    %1888 = vmatprep.mubr.f32.mxu0 0.0
    %1889 = vmatmul.mubr.f32.gmra.mrb[0].mxu0 %v1822
    %v1890 = vpop.f32.mrb[0].mxu0
    %v1891 = vadd.f32 %v127, %v1890
    %v1892 = vpop.f32.mrb[0].mxu0
    %1893 = vdwg.mxu0
    %s1894 = scalar_lea.vmem [#allocation10], 10
    %1895 = vst.msk [vmem:[%s1894] sm:$0x3] %vm419, %v1891
    %s1896 = scalar_lea.vmem [#allocation2], 12
    %v1897 = vld [vmem:[%s1896] sm:$0x3]
    %vm1898 = vcmp.gt.s32.totalorder %v89, 6
    %1899 = vrot.lane.b32.xlu0 %v1710, 80
    %v1900 = vpop.permute.xlu0 %1899
    %v1902 = vsel %vm131, %v1897, %v1900
    %v1904 = vsel %vm133, %v1902, 0
    %1906 = vmatprep.subr.mxu0 0.0
    %1907 = vmatpush1.msra.mxu0 %v90
    %1908 = vmatprep.subr.mxu0 0.0
    %1909 = vmatpush1.msra.mxu0 %v91
    %1910 = vmatprep.subr.mxu0 0.0
    %1911 = vmatpush1.msra.mxu0 %v92
    %1912 = vmatprep.subr.mxu0 0.0
    %1913 = vmatpush1.msra.mxu0 %v93
    %1914 = vmatprep.subr.mxu0 0.0
    %1915 = vmatpush1.msra.mxu0 %v94
    %1916 = vmatprep.subr.mxu0 0.0
    %1917 = vmatpush1.msra.mxu0 %v95
    %1918 = vmatprep.subr.mxu0 0.0
    %1919 = vmatpush1.msra.mxu0 0.0
    %1920 = vmatprep.subr.mxu0 0.0
    %1921 = vmatpush1.msra.mxu0 0.0
    %1922 = vmatprep.subr.mxu0 0.0
    %1923 = vmatpush1.msra.mxu0 0.0
    %1924 = vmatprep.subr.mxu0 0.0
    %1925 = vmatpush1.msra.mxu0 0.0
    %1926 = vmatprep.subr.mxu0 0.0
    %1927 = vmatpush1.msra.mxu0 0.0
    %1928 = vmatprep.subr.mxu0 0.0
    %1929 = vmatpush1.msra.mxu0 0.0
    %1930 = vmatprep.subr.mxu0 0.0
    %1931 = vmatpush1.msra.mxu0 0.0
    %1932 = vmatprep.subr.mxu0 0.0
    %1933 = vmatpush1.msra.mxu0 0.0
    %1934 = vmatprep.subr.mxu0 0.0
    %1935 = vmatpush1.msra.mxu0 0.0
    %1936 = vmatprep.subr.mxu0 0.0
    %1937 = vmatpush1.msra.mxu0 0.0
    %1938 = vmatprep.subr.mxu0 0.0
    %1939 = vmatpush1.msra.mxu0 0.0
    %1940 = vmatprep.subr.mxu0 0.0
    %1941 = vmatpush1.msra.mxu0 0.0
    %1942 = vmatprep.subr.mxu0 0.0
    %1943 = vmatpush1.msra.mxu0 0.0
    %1944 = vmatprep.subr.mxu0 0.0
    %1945 = vmatpush1.msra.mxu0 0.0
    %1946 = vmatprep.subr.mxu0 0.0
    %1947 = vmatpush1.msra.mxu0 0.0
    %1948 = vmatprep.subr.mxu0 0.0
    %1949 = vmatpush1.msra.mxu0 0.0
    %1950 = vmatprep.subr.mxu0 0.0
    %1951 = vmatpush1.msra.mxu0 0.0
    %1952 = vmatprep.subr.mxu0 0.0
    %1953 = vmatpush1.msra.mxu0 0.0
    %1954 = vmatprep.subr.mxu0 0.0
    %1955 = vmatpush1.msra.mxu0 0.0
    %1956 = vmatprep.subr.mxu0 0.0
    %1957 = vmatpush1.msra.mxu0 0.0
    %1958 = vmatprep.subr.mxu0 0.0
    %1959 = vmatpush1.msra.mxu0 0.0
    %1960 = vmatprep.subr.mxu0 0.0
    %1961 = vmatpush1.msra.mxu0 0.0
    %1962 = vmatprep.subr.mxu0 0.0
    %1963 = vmatpush1.msra.mxu0 0.0
    %1964 = vmatprep.subr.mxu0 0.0
    %1965 = vmatpush1.msra.mxu0 0.0
    %1966 = vmatprep.subr.mxu0 0.0
    %1967 = vmatpush1.msra.mxu0 0.0
    %1968 = vmatprep.subr.mxu0 0.0
    %1969 = vmatpush1.msra.mxu0 0.0
    %1970 = vmatprep.mubr.f32.mxu0 0.0
    %1971 = vmatmul.mubr.f32.gmra.mrb[0].mxu0 %v1904
    %v1972 = vpop.f32.mrb[0].mxu0
    %v1973 = vadd.f32 %v109, %v1972
    %v1974 = vpop.f32.mrb[0].mxu0
    %1975 = vdwg.mxu0
    %v1976 = vxor.u32 %v1973, 2147483648
    %v1977 = vmul.f32 %v1976, 1.442695
    %v1978 = vpow.pop %v1977
    %v1979 = vadd.f32 %v1978, 1.0
    %v1980 = vrcp.pop %v1979
    %v1981 = vmul.f32 1.0, %v1980
    %v1982 = vtanh.pop %v1973
    %v1983 = vmul.f32 %v1981, %v1711
    %1985 = vrot.lane.b32.xlu0 %v1982, 32
    %v1986 = vpop.permute.xlu0 %1985
    %v1988 = vmul.f32 %v1981, %v1986
    %1990 = vrot.lane.b32.xlu0 %v1988, 32
    %v1991 = vpop.permute.xlu0 %1990
    %v1993 = vadd.f32 %v1983, %v1991
    %v1994 = vtanh.pop %v1993
    %1996 = vrot.lane.b32.xlu0 %v1994, 32
    %v1997 = vpop.permute.xlu0 %1996
    %v1999 = vmul.f32 %v1981, %v1997
    %v2000 = vsel %vm1898, 1, 0
    %2001 = vset.pattern.permute.xlu0 0
    %2002 = vperm.xlu0 %2001, %v2000
    %v2003 = vpop.permute.xlu0 %2002
    %vm2004 = vcmp.eq.s32.totalorder %v2003, 1
    %v2005 = vsel %vm2004, %v1999, %v1710
    %v2006 = vsel %vm2004, %v1993, %v1711
    %2008 = vrot.lane.b32.xlu0 %v2005, 64
    %v2009 = vpop.permute.xlu0 %2008
    %2011 = vrot.lane.b32.xlu0 %v1817, 96
    %v2012 = vpop.permute.xlu0 %2011
    %v2014 = vsel %vm242, %v2009, %v2012
    %v2016 = vsel %vm244, %v2014, 0
    %2018 = vmatprep.subr.mxu0 0.0
    %2019 = vmatpush1.msra.mxu0 %v96
    %2020 = vmatprep.subr.mxu0 0.0
    %2021 = vmatpush1.msra.mxu0 %v97
    %2022 = vmatprep.subr.mxu0 0.0
    %2023 = vmatpush1.msra.mxu0 %v98
    %2024 = vmatprep.subr.mxu0 0.0
    %2025 = vmatpush1.msra.mxu0 %v99
    %2026 = vmatprep.subr.mxu0 0.0
    %2027 = vmatpush1.msra.mxu0 %v100
    %2028 = vmatprep.subr.mxu0 0.0
    %2029 = vmatpush1.msra.mxu0 %v101
    %2030 = vmatprep.subr.mxu0 0.0
    %2031 = vmatpush1.msra.mxu0 %v102
    %2032 = vmatprep.subr.mxu0 0.0
    %2033 = vmatpush1.msra.mxu0 %v103
    %2034 = vmatprep.subr.mxu0 0.0
    %2035 = vmatpush1.msra.mxu0 0.0
    %2036 = vmatprep.subr.mxu0 0.0
    %2037 = vmatpush1.msra.mxu0 0.0
    %2038 = vmatprep.subr.mxu0 0.0
    %2039 = vmatpush1.msra.mxu0 0.0
    %2040 = vmatprep.subr.mxu0 0.0
    %2041 = vmatpush1.msra.mxu0 0.0
    %2042 = vmatprep.subr.mxu0 0.0
    %2043 = vmatpush1.msra.mxu0 0.0
    %2044 = vmatprep.subr.mxu0 0.0
    %2045 = vmatpush1.msra.mxu0 0.0
    %2046 = vmatprep.subr.mxu0 0.0
    %2047 = vmatpush1.msra.mxu0 0.0
    %2048 = vmatprep.subr.mxu0 0.0
    %2049 = vmatpush1.msra.mxu0 0.0
    %2050 = vmatprep.subr.mxu0 0.0
    %2051 = vmatpush1.msra.mxu0 0.0
    %2052 = vmatprep.subr.mxu0 0.0
    %2053 = vmatpush1.msra.mxu0 0.0
    %2054 = vmatprep.subr.mxu0 0.0
    %2055 = vmatpush1.msra.mxu0 0.0
    %2056 = vmatprep.subr.mxu0 0.0
    %2057 = vmatpush1.msra.mxu0 0.0
    %2058 = vmatprep.subr.mxu0 0.0
    %2059 = vmatpush1.msra.mxu0 0.0
    %2060 = vmatprep.subr.mxu0 0.0
    %2061 = vmatpush1.msra.mxu0 0.0
    %2062 = vmatprep.subr.mxu0 0.0
    %2063 = vmatpush1.msra.mxu0 0.0
    %2064 = vmatprep.subr.mxu0 0.0
    %2065 = vmatpush1.msra.mxu0 0.0
    %2066 = vmatprep.subr.mxu0 0.0
    %2067 = vmatpush1.msra.mxu0 0.0
    %2068 = vmatprep.subr.mxu0 0.0
    %2069 = vmatpush1.msra.mxu0 0.0
    %2070 = vmatprep.subr.mxu0 0.0
    %2071 = vmatpush1.msra.mxu0 0.0
    %2072 = vmatprep.subr.mxu0 0.0
    %2073 = vmatpush1.msra.mxu0 0.0
    %2074 = vmatprep.subr.mxu0 0.0
    %2075 = vmatpush1.msra.mxu0 0.0
    %2076 = vmatprep.subr.mxu0 0.0
    %2077 = vmatpush1.msra.mxu0 0.0
    %2078 = vmatprep.subr.mxu0 0.0
    %2079 = vmatpush1.msra.mxu0 0.0
    %2080 = vmatprep.subr.mxu0 0.0
    %2081 = vmatpush1.msra.mxu0 0.0
    %2082 = vmatprep.mubr.f32.mxu0 0.0
    %2083 = vmatmul.mubr.f32.gmra.mrb[0].mxu0 %v2016
    %v2084 = vpop.f32.mrb[0].mxu0
    %v2085 = vadd.f32 %v116, %v2084
    %v2086 = vpop.f32.mrb[0].mxu0
    %2087 = vdwg.mxu0
    %v2088 = vxor.u32 %v2085, 2147483648
    %v2089 = vmul.f32 %v2088, 1.442695
    %v2090 = vpow.pop %v2089
    %v2091 = vadd.f32 %v2090, 1.0
    %v2092 = vrcp.pop %v2091
    %v2093 = vmul.f32 1.0, %v2092
    %v2094 = vtanh.pop %v2085
    %v2095 = vmul.f32 %v2093, %v1818
    %2097 = vrot.lane.b32.xlu0 %v2094, 32
    %v2098 = vpop.permute.xlu0 %2097
    %v2100 = vmul.f32 %v2093, %v2098
    %2102 = vrot.lane.b32.xlu0 %v2100, 32
    %v2103 = vpop.permute.xlu0 %2102
    %v2105 = vadd.f32 %v2095, %v2103
    %v2106 = vtanh.pop %v2105
    %2108 = vrot.lane.b32.xlu0 %v2106, 32
    %v2109 = vpop.permute.xlu0 %2108
    %v2111 = vmul.f32 %v2093, %v2109
    %v2112 = vsel %vm2004, %v2111, %v1817
    %v2113 = vsel %vm2004, %v2105, %v1818
    %2115 = vrot.lane.b32.xlu0 %v2112, 64
    %v2116 = vpop.permute.xlu0 %2115
    %v2117 = vsel %vm242, %v2116, 0
    %2119 = vmatprep.subr.mxu0 0.0
    %2120 = vmatpush1.msra.mxu0 %v118
    %2121 = vmatprep.subr.mxu0 0.0
    %2122 = vmatpush1.msra.mxu0 %v119
    %2123 = vmatprep.subr.mxu0 0.0
    %2124 = vmatpush1.msra.mxu0 %v120
    %2125 = vmatprep.subr.mxu0 0.0
    %2126 = vmatpush1.msra.mxu0 %v121
    %2127 = vmatprep.subr.mxu0 0.0
    %2128 = vmatpush1.msra.mxu0 0.0
    %2129 = vmatprep.subr.mxu0 0.0
    %2130 = vmatpush1.msra.mxu0 0.0
    %2131 = vmatprep.subr.mxu0 0.0
    %2132 = vmatpush1.msra.mxu0 0.0
    %2133 = vmatprep.subr.mxu0 0.0
    %2134 = vmatpush1.msra.mxu0 0.0
    %2135 = vmatprep.subr.mxu0 0.0
    %2136 = vmatpush1.msra.mxu0 0.0
    %2137 = vmatprep.subr.mxu0 0.0
    %2138 = vmatpush1.msra.mxu0 0.0
    %2139 = vmatprep.subr.mxu0 0.0
    %2140 = vmatpush1.msra.mxu0 0.0
    %2141 = vmatprep.subr.mxu0 0.0
    %2142 = vmatpush1.msra.mxu0 0.0
    %2143 = vmatprep.subr.mxu0 0.0
    %2144 = vmatpush1.msra.mxu0 0.0
    %2145 = vmatprep.subr.mxu0 0.0
    %2146 = vmatpush1.msra.mxu0 0.0
    %2147 = vmatprep.subr.mxu0 0.0
    %2148 = vmatpush1.msra.mxu0 0.0
    %2149 = vmatprep.subr.mxu0 0.0
    %2150 = vmatpush1.msra.mxu0 0.0
    %2151 = vmatprep.subr.mxu0 0.0
    %2152 = vmatpush1.msra.mxu0 0.0
    %2153 = vmatprep.subr.mxu0 0.0
    %2154 = vmatpush1.msra.mxu0 0.0
    %2155 = vmatprep.subr.mxu0 0.0
    %2156 = vmatpush1.msra.mxu0 0.0
    %2157 = vmatprep.subr.mxu0 0.0
    %2158 = vmatpush1.msra.mxu0 0.0
    %2159 = vmatprep.subr.mxu0 0.0
    %2160 = vmatpush1.msra.mxu0 0.0
    %2161 = vmatprep.subr.mxu0 0.0
    %2162 = vmatpush1.msra.mxu0 0.0
    %2163 = vmatprep.subr.mxu0 0.0
    %2164 = vmatpush1.msra.mxu0 0.0
    %2165 = vmatprep.subr.mxu0 0.0
    %2166 = vmatpush1.msra.mxu0 0.0
    %2167 = vmatprep.subr.mxu0 0.0
    %2168 = vmatpush1.msra.mxu0 0.0
    %2169 = vmatprep.subr.mxu0 0.0
    %2170 = vmatpush1.msra.mxu0 0.0
    %2171 = vmatprep.subr.mxu0 0.0
    %2172 = vmatpush1.msra.mxu0 0.0
    %2173 = vmatprep.subr.mxu0 0.0
    %2174 = vmatpush1.msra.mxu0 0.0
    %2175 = vmatprep.subr.mxu0 0.0
    %2176 = vmatpush1.msra.mxu0 0.0
    %2177 = vmatprep.subr.mxu0 0.0
    %2178 = vmatpush1.msra.mxu0 0.0
    %2179 = vmatprep.subr.mxu0 0.0
    %2180 = vmatpush1.msra.mxu0 0.0
    %2181 = vmatprep.subr.mxu0 0.0
    %2182 = vmatpush1.msra.mxu0 0.0
    %2183 = vmatprep.mubr.f32.mxu0 0.0
    %2184 = vmatmul.mubr.f32.gmra.mrb[0].mxu0 %v2117
    %v2185 = vpop.f32.mrb[0].mxu0
    %v2186 = vadd.f32 %v127, %v2185
    %v2187 = vpop.f32.mrb[0].mxu0
    %2188 = vdwg.mxu0
    %s2189 = scalar_lea.vmem [#allocation10], 12
    %2190 = vst.msk [vmem:[%s2189] sm:$0x3] %vm419, %v2186
    %s2191 = scalar_lea.vmem [#allocation2], 14
    %v2192 = vld [vmem:[%s2191] sm:$0x3]
    %vm2193 = vcmp.gt.s32.totalorder %v89, 7
    %2194 = vrot.lane.b32.xlu0 %v2005, 80
    %v2195 = vpop.permute.xlu0 %2194
    %v2197 = vsel %vm131, %v2192, %v2195
    %v2199 = vsel %vm133, %v2197, 0
    %2201 = vmatprep.subr.mxu0 0.0
    %2202 = vmatpush1.msra.mxu0 %v90
    %2203 = vmatprep.subr.mxu0 0.0
    %2204 = vmatpush1.msra.mxu0 %v91
    %2205 = vmatprep.subr.mxu0 0.0
    %2206 = vmatpush1.msra.mxu0 %v92
    %2207 = vmatprep.subr.mxu0 0.0
    %2208 = vmatpush1.msra.mxu0 %v93
    %2209 = vmatprep.subr.mxu0 0.0
    %2210 = vmatpush1.msra.mxu0 %v94
    %2211 = vmatprep.subr.mxu0 0.0
    %2212 = vmatpush1.msra.mxu0 %v95
    %2213 = vmatprep.subr.mxu0 0.0
    %2214 = vmatpush1.msra.mxu0 0.0
    %2215 = vmatprep.subr.mxu0 0.0
    %2216 = vmatpush1.msra.mxu0 0.0
    %2217 = vmatprep.subr.mxu0 0.0
    %2218 = vmatpush1.msra.mxu0 0.0
    %2219 = vmatprep.subr.mxu0 0.0
    %2220 = vmatpush1.msra.mxu0 0.0
    %2221 = vmatprep.subr.mxu0 0.0
    %2222 = vmatpush1.msra.mxu0 0.0
    %2223 = vmatprep.subr.mxu0 0.0
    %2224 = vmatpush1.msra.mxu0 0.0
    %2225 = vmatprep.subr.mxu0 0.0
    %2226 = vmatpush1.msra.mxu0 0.0
    %2227 = vmatprep.subr.mxu0 0.0
    %2228 = vmatpush1.msra.mxu0 0.0
    %2229 = vmatprep.subr.mxu0 0.0
    %2230 = vmatpush1.msra.mxu0 0.0
    %2231 = vmatprep.subr.mxu0 0.0
    %2232 = vmatpush1.msra.mxu0 0.0
    %2233 = vmatprep.subr.mxu0 0.0
    %2234 = vmatpush1.msra.mxu0 0.0
    %2235 = vmatprep.subr.mxu0 0.0
    %2236 = vmatpush1.msra.mxu0 0.0
    %2237 = vmatprep.subr.mxu0 0.0
    %2238 = vmatpush1.msra.mxu0 0.0
    %2239 = vmatprep.subr.mxu0 0.0
    %2240 = vmatpush1.msra.mxu0 0.0
    %2241 = vmatprep.subr.mxu0 0.0
    %2242 = vmatpush1.msra.mxu0 0.0
    %2243 = vmatprep.subr.mxu0 0.0
    %2244 = vmatpush1.msra.mxu0 0.0
    %2245 = vmatprep.subr.mxu0 0.0
    %2246 = vmatpush1.msra.mxu0 0.0
    %2247 = vmatprep.subr.mxu0 0.0
    %2248 = vmatpush1.msra.mxu0 0.0
    %2249 = vmatprep.subr.mxu0 0.0
    %2250 = vmatpush1.msra.mxu0 0.0
    %2251 = vmatprep.subr.mxu0 0.0
    %2252 = vmatpush1.msra.mxu0 0.0
    %2253 = vmatprep.subr.mxu0 0.0
    %2254 = vmatpush1.msra.mxu0 0.0
    %2255 = vmatprep.subr.mxu0 0.0
    %2256 = vmatpush1.msra.mxu0 0.0
    %2257 = vmatprep.subr.mxu0 0.0
    %2258 = vmatpush1.msra.mxu0 0.0
    %2259 = vmatprep.subr.mxu0 0.0
    %2260 = vmatpush1.msra.mxu0 0.0
    %2261 = vmatprep.subr.mxu0 0.0
    %2262 = vmatpush1.msra.mxu0 0.0
    %2263 = vmatprep.subr.mxu0 0.0
    %2264 = vmatpush1.msra.mxu0 0.0
    %2265 = vmatprep.mubr.f32.mxu0 0.0
    %2266 = vmatmul.mubr.f32.gmra.mrb[0].mxu0 %v2199
    %v2267 = vpop.f32.mrb[0].mxu0
    %v2268 = vadd.f32 %v109, %v2267
    %v2269 = vpop.f32.mrb[0].mxu0
    %2270 = vdwg.mxu0
    %v2271 = vxor.u32 %v2268, 2147483648
    %v2272 = vmul.f32 %v2271, 1.442695
    %v2273 = vpow.pop %v2272
    %v2274 = vadd.f32 %v2273, 1.0
    %v2275 = vrcp.pop %v2274
    %v2276 = vmul.f32 1.0, %v2275
    %v2277 = vtanh.pop %v2268
    %v2278 = vmul.f32 %v2276, %v2006
    %2280 = vrot.lane.b32.xlu0 %v2277, 32
    %v2281 = vpop.permute.xlu0 %2280
    %v2283 = vmul.f32 %v2276, %v2281
    %2285 = vrot.lane.b32.xlu0 %v2283, 32
    %v2286 = vpop.permute.xlu0 %2285
    %v2288 = vadd.f32 %v2278, %v2286
    %v2289 = vtanh.pop %v2288
    %2291 = vrot.lane.b32.xlu0 %v2289, 32
    %v2292 = vpop.permute.xlu0 %2291
    %v2294 = vmul.f32 %v2276, %v2292
    %v2295 = vsel %vm2193, 1, 0
    %2296 = vset.pattern.permute.xlu0 0
    %2297 = vperm.xlu0 %2296, %v2295
    %v2298 = vpop.permute.xlu0 %2297
    %vm2299 = vcmp.eq.s32.totalorder %v2298, 1
    %v2300 = vsel %vm2299, %v2294, %v2005
    %v2301 = vsel %vm2299, %v2288, %v2006
    %2303 = vrot.lane.b32.xlu0 %v2300, 64
    %v2304 = vpop.permute.xlu0 %2303
    %2306 = vrot.lane.b32.xlu0 %v2112, 96
    %v2307 = vpop.permute.xlu0 %2306
    %v2309 = vsel %vm242, %v2304, %v2307
    %v2311 = vsel %vm244, %v2309, 0
    %2313 = vmatprep.subr.mxu0 0.0
    %2314 = vmatpush1.msra.mxu0 %v96
    %2315 = vmatprep.subr.mxu0 0.0
    %2316 = vmatpush1.msra.mxu0 %v97
    %2317 = vmatprep.subr.mxu0 0.0
    %2318 = vmatpush1.msra.mxu0 %v98
    %2319 = vmatprep.subr.mxu0 0.0
    %2320 = vmatpush1.msra.mxu0 %v99
    %2321 = vmatprep.subr.mxu0 0.0
    %2322 = vmatpush1.msra.mxu0 %v100
    %2323 = vmatprep.subr.mxu0 0.0
    %2324 = vmatpush1.msra.mxu0 %v101
    %2325 = vmatprep.subr.mxu0 0.0
    %2326 = vmatpush1.msra.mxu0 %v102
    %2327 = vmatprep.subr.mxu0 0.0
    %2328 = vmatpush1.msra.mxu0 %v103
    %2329 = vmatprep.subr.mxu0 0.0
    %2330 = vmatpush1.msra.mxu0 0.0
    %2331 = vmatprep.subr.mxu0 0.0
    %2332 = vmatpush1.msra.mxu0 0.0
    %2333 = vmatprep.subr.mxu0 0.0
    %2334 = vmatpush1.msra.mxu0 0.0
    %2335 = vmatprep.subr.mxu0 0.0
    %2336 = vmatpush1.msra.mxu0 0.0
    %2337 = vmatprep.subr.mxu0 0.0
    %2338 = vmatpush1.msra.mxu0 0.0
    %2339 = vmatprep.subr.mxu0 0.0
    %2340 = vmatpush1.msra.mxu0 0.0
    %2341 = vmatprep.subr.mxu0 0.0
    %2342 = vmatpush1.msra.mxu0 0.0
    %2343 = vmatprep.subr.mxu0 0.0
    %2344 = vmatpush1.msra.mxu0 0.0
    %2345 = vmatprep.subr.mxu0 0.0
    %2346 = vmatpush1.msra.mxu0 0.0
    %2347 = vmatprep.subr.mxu0 0.0
    %2348 = vmatpush1.msra.mxu0 0.0
    %2349 = vmatprep.subr.mxu0 0.0
    %2350 = vmatpush1.msra.mxu0 0.0
    %2351 = vmatprep.subr.mxu0 0.0
    %2352 = vmatpush1.msra.mxu0 0.0
    %2353 = vmatprep.subr.mxu0 0.0
    %2354 = vmatpush1.msra.mxu0 0.0
    %2355 = vmatprep.subr.mxu0 0.0
    %2356 = vmatpush1.msra.mxu0 0.0
    %2357 = vmatprep.subr.mxu0 0.0
    %2358 = vmatpush1.msra.mxu0 0.0
    %2359 = vmatprep.subr.mxu0 0.0
    %2360 = vmatpush1.msra.mxu0 0.0
    %2361 = vmatprep.subr.mxu0 0.0
    %2362 = vmatpush1.msra.mxu0 0.0
    %2363 = vmatprep.subr.mxu0 0.0
    %2364 = vmatpush1.msra.mxu0 0.0
    %2365 = vmatprep.subr.mxu0 0.0
    %2366 = vmatpush1.msra.mxu0 0.0
    %2367 = vmatprep.subr.mxu0 0.0
    %2368 = vmatpush1.msra.mxu0 0.0
    %2369 = vmatprep.subr.mxu0 0.0
    %2370 = vmatpush1.msra.mxu0 0.0
    %2371 = vmatprep.subr.mxu0 0.0
    %2372 = vmatpush1.msra.mxu0 0.0
    %2373 = vmatprep.subr.mxu0 0.0
    %2374 = vmatpush1.msra.mxu0 0.0
    %2375 = vmatprep.subr.mxu0 0.0
    %2376 = vmatpush1.msra.mxu0 0.0
    %2377 = vmatprep.mubr.f32.mxu0 0.0
    %2378 = vmatmul.mubr.f32.gmra.mrb[0].mxu0 %v2311
    %v2379 = vpop.f32.mrb[0].mxu0
    %v2380 = vadd.f32 %v116, %v2379
    %v2381 = vpop.f32.mrb[0].mxu0
    %2382 = vdwg.mxu0
    %v2383 = vxor.u32 %v2380, 2147483648
    %v2384 = vmul.f32 %v2383, 1.442695
    %v2385 = vpow.pop %v2384
    %v2386 = vadd.f32 %v2385, 1.0
    %v2387 = vrcp.pop %v2386
    %v2388 = vmul.f32 1.0, %v2387
    %v2389 = vtanh.pop %v2380
    %v2390 = vmul.f32 %v2388, %v2113
    %2392 = vrot.lane.b32.xlu0 %v2389, 32
    %v2393 = vpop.permute.xlu0 %2392
    %v2395 = vmul.f32 %v2388, %v2393
    %2397 = vrot.lane.b32.xlu0 %v2395, 32
    %v2398 = vpop.permute.xlu0 %2397
    %v2400 = vadd.f32 %v2390, %v2398
    %v2401 = vtanh.pop %v2400
    %2403 = vrot.lane.b32.xlu0 %v2401, 32
    %v2404 = vpop.permute.xlu0 %2403
    %v2406 = vmul.f32 %v2388, %v2404
    %v2407 = vsel %vm2299, %v2406, %v2112
    %v2408 = vsel %vm2299, %v2400, %v2113
    %2410 = vrot.lane.b32.xlu0 %v2407, 64
    %v2411 = vpop.permute.xlu0 %2410
    %v2412 = vsel %vm242, %v2411, 0
    %2414 = vmatprep.subr.mxu0 0.0
    %2415 = vmatpush1.msra.mxu0 %v118
    %2416 = vmatprep.subr.mxu0 0.0
    %2417 = vmatpush1.msra.mxu0 %v119
    %2418 = vmatprep.subr.mxu0 0.0
    %2419 = vmatpush1.msra.mxu0 %v120
    %2420 = vmatprep.subr.mxu0 0.0
    %2421 = vmatpush1.msra.mxu0 %v121
    %2422 = vmatprep.subr.mxu0 0.0
    %2423 = vmatpush1.msra.mxu0 0.0
    %2424 = vmatprep.subr.mxu0 0.0
    %2425 = vmatpush1.msra.mxu0 0.0
    %2426 = vmatprep.subr.mxu0 0.0
    %2427 = vmatpush1.msra.mxu0 0.0
    %2428 = vmatprep.subr.mxu0 0.0
    %2429 = vmatpush1.msra.mxu0 0.0
    %2430 = vmatprep.subr.mxu0 0.0
    %2431 = vmatpush1.msra.mxu0 0.0
    %2432 = vmatprep.subr.mxu0 0.0
    %2433 = vmatpush1.msra.mxu0 0.0
    %2434 = vmatprep.subr.mxu0 0.0
    %2435 = vmatpush1.msra.mxu0 0.0
    %2436 = vmatprep.subr.mxu0 0.0
    %2437 = vmatpush1.msra.mxu0 0.0
    %2438 = vmatprep.subr.mxu0 0.0
    %2439 = vmatpush1.msra.mxu0 0.0
    %2440 = vmatprep.subr.mxu0 0.0
    %2441 = vmatpush1.msra.mxu0 0.0
    %2442 = vmatprep.subr.mxu0 0.0
    %2443 = vmatpush1.msra.mxu0 0.0
    %2444 = vmatprep.subr.mxu0 0.0
    %2445 = vmatpush1.msra.mxu0 0.0
    %2446 = vmatprep.subr.mxu0 0.0
    %2447 = vmatpush1.msra.mxu0 0.0
    %2448 = vmatprep.subr.mxu0 0.0
    %2449 = vmatpush1.msra.mxu0 0.0
    %2450 = vmatprep.subr.mxu0 0.0
    %2451 = vmatpush1.msra.mxu0 0.0
    %2452 = vmatprep.subr.mxu0 0.0
    %2453 = vmatpush1.msra.mxu0 0.0
    %2454 = vmatprep.subr.mxu0 0.0
    %2455 = vmatpush1.msra.mxu0 0.0
    %2456 = vmatprep.subr.mxu0 0.0
    %2457 = vmatpush1.msra.mxu0 0.0
    %2458 = vmatprep.subr.mxu0 0.0
    %2459 = vmatpush1.msra.mxu0 0.0
    %2460 = vmatprep.subr.mxu0 0.0
    %2461 = vmatpush1.msra.mxu0 0.0
    %2462 = vmatprep.subr.mxu0 0.0
    %2463 = vmatpush1.msra.mxu0 0.0
    %2464 = vmatprep.subr.mxu0 0.0
    %2465 = vmatpush1.msra.mxu0 0.0
    %2466 = vmatprep.subr.mxu0 0.0
    %2467 = vmatpush1.msra.mxu0 0.0
    %2468 = vmatprep.subr.mxu0 0.0
    %2469 = vmatpush1.msra.mxu0 0.0
    %2470 = vmatprep.subr.mxu0 0.0
    %2471 = vmatpush1.msra.mxu0 0.0
    %2472 = vmatprep.subr.mxu0 0.0
    %2473 = vmatpush1.msra.mxu0 0.0
    %2474 = vmatprep.subr.mxu0 0.0
    %2475 = vmatpush1.msra.mxu0 0.0
    %2476 = vmatprep.subr.mxu0 0.0
    %2477 = vmatpush1.msra.mxu0 0.0
    %2478 = vmatprep.mubr.f32.mxu0 0.0
    %2479 = vmatmul.mubr.f32.gmra.mrb[0].mxu0 %v2412
    %v2480 = vpop.f32.mrb[0].mxu0
    %v2481 = vadd.f32 %v127, %v2480
    %v2482 = vpop.f32.mrb[0].mxu0
    %2483 = vdwg.mxu0
    %s2484 = scalar_lea.vmem [#allocation10], 14
    %2485 = vst.msk [vmem:[%s2484] sm:$0x3] %vm419, %v2481
    %2486 = vst.msk [vmem:[#allocation11] sm:$0x3] %vm419, %v2304
    %2488 = vrot.lane.b32.xlu0 %v2301, 96
    %v2489 = vpop.permute.xlu0 %2488
    %2491 = vst.msk [vmem:[#allocation13] sm:$0x3] %vm419, %v2489
    %s2493 = scalar_lea.vmem [#allocation11], 2
    %2494 = vst.msk [vmem:[%s2493] sm:$0x3] %vm419, %v2411
    %2496 = vrot.lane.b32.xlu0 %v2408, 96
    %v2497 = vpop.permute.xlu0 %2496
    %s2499 = scalar_lea.vmem [#allocation13], 2
    %2500 = vst.msk [vmem:[%s2499] sm:$0x3] %vm419, %v2497
    // Predicated region
    $region50: #{tpu_custom_call.1} parent=1 // pred_check
      _
    $region51: #{tpu_custom_call.1} parent=1 // pred_check_branch
      %2502 = sbr.rel (0) target = $region53
    $region52: #{tpu_custom_call.1} parent=1 // pred_region
      %s2504 = ssub.s32 256, 256
      %2505 = vsyncadd [#allocation4], %s2504
      %s2506 = sshll.u32 [#allocation10], 4
      %s2507 = int_to_ptr.vmem [resolvable:$true] %s2506
      %2512 = dma.vmem_to_hbm [thread:$0]  %s2507, 256, %s8, [#allocation4], 32, 32, 2
    $region53: #{tpu_custom_call.1} parent=1 // pred_fallthru
      _
    // Predicated region
    $region54: #{tpu_custom_call.1} parent=1 // pred_check
      _
    $region55: #{tpu_custom_call.1} parent=1 // pred_check_branch
      %2514 = sbr.rel (0) target = $region57
    $region56: #{tpu_custom_call.1} parent=1 // pred_region
      %s2516 = ssub.s32 64, 64
      %2517 = vsyncadd [#allocation12], %s2516
      %s2518 = sshll.u32 [#allocation11], 4
      %s2519 = int_to_ptr.vmem [resolvable:$true] %s2518
      %2524 = dma.vmem_to_hbm [thread:$0]  %s2519, 64, %s9, [#allocation12], 32, 32, 2
    $region57: #{tpu_custom_call.1} parent=1 // pred_fallthru
      _
    // Predicated region
    $region58: #{tpu_custom_call.1} parent=1 // pred_check
      _
    $region59: #{tpu_custom_call.1} parent=1 // pred_check_branch
      %2526 = sbr.rel (0) target = $region61
    $region60: #{tpu_custom_call.1} parent=1 // pred_region
      %s2528 = ssub.s32 64, 64
      %2529 = vsyncadd [#allocation12], %s2528
      %s2530 = sshll.u32 [#allocation13], 4
      %s2531 = int_to_ptr.vmem [resolvable:$true] %s2530
      %2536 = dma.vmem_to_hbm [thread:$0]  %s2531, 64, %s10, [#allocation12], 32, 32, 2
    $region61: #{tpu_custom_call.1} parent=1 // pred_fallthru
      _
    // Predicated region
    $region62: #{tpu_custom_call.1} parent=1 // pred_check
      _
    $region63: #{tpu_custom_call.1} parent=1 // pred_check_branch
      %2538 = sbr.rel (0) target = $region65
    $region64: #{tpu_custom_call.1} parent=1 // pred_region
      %2539 = dma.done [#allocation4], 256
    $region65: #{tpu_custom_call.1} parent=1 // pred_fallthru
      _
    // Predicated region
    $region66: #{tpu_custom_call.1} parent=1 // pred_check
      _
    $region67: #{tpu_custom_call.1} parent=1 // pred_check_branch
      %2541 = sbr.rel (0) target = $region69
    $region68: #{tpu_custom_call.1} parent=1 // pred_region
      %2542 = dma.done [#allocation12], 64
    $region69: #{tpu_custom_call.1} parent=1 // pred_fallthru
      _
    // Predicated region
    $region70: #{tpu_custom_call.1} parent=1 // pred_check
      _
    $region71: #{tpu_custom_call.1} parent=1 // pred_check_branch
      %2544 = sbr.rel (0) target = $region73
    $region72: #{tpu_custom_call.1} parent=1 // pred_region
      %2545 = dma.done [#allocation12], 64
    $region73: #{tpu_custom_call.1} parent=1 // pred_fallthru
      _
    %2546 = vsyncpa [#allocation3], 1
    %2547 = vsyncpa [#allocation6], 1
    %2548 = vsyncpa [#allocation9], 1
    %2549 = vsyncpa [#allocation4], 1
    %2550 = vsyncpa [#allocation12], 1

</llo_original>
